<compile_context>
chip_gen: v6e
topology: v6e:2x2x1
jax: 0.10.0
libtpu: 0.0.40
codegen_flags: <defaults>
</compile_context>

<pallas_src>
import functools
import numpy as np

import jax
import jax.numpy as jnp
from jax import lax
from jax.experimental import pallas as pl
from jax.experimental.pallas import tpu as pltpu


# ------------------------------- helpers ------------------------------------

def _round_up(x, m):
    return ((x + m - 1) // m) * m


def _mxdot(a, w_bf16):
    """MXU matmul: activation cast to bf16, weight already bf16, f32 accum."""
    return jnp.dot(a.astype(jnp.bfloat16), w_bf16,
                   preferred_element_type=jnp.float32)


def _layer_norm(x, g, b, eps=1e-5):
    mu = jnp.mean(x, axis=-1, keepdims=True)
    var = jnp.mean(jnp.square(x - mu), axis=-1, keepdims=True)
    return (x - mu) * lax.rsqrt(var + eps) * g + b


def _pick_batch_tile(B, cap=256):
    """Large batch tile to fill the MXU / amortize per-step overhead; keep >=2
    parallel grid steps when the batch allows (v7x megacore)."""
    Bp = _round_up(B, 8)
    TB = min(Bp, cap)
    if TB == Bp and Bp >= 16:
        TB = _round_up(Bp // 2, 8)
    Bp = _round_up(Bp, TB)
    return TB, Bp


# ------------------------ tiled linear (conv matmuls) ------------------------

def _matmul_kernel(x_ref, w_ref, b_ref, o_ref, *, relu):
    y = _mxdot(x_ref[...], w_ref[...]) + b_ref[...]
    if relu:
        y = jnp.maximum(y, 0.0)
    o_ref[...] = y.astype(o_ref.dtype)


def linear_pallas(x, w_pad, b_pad, n_out, *, relu=False, tm=512,
                  out_dtype=jnp.float32):
    """act(x @ w + b). Weights/bias are pre-padded (128-lane N) and pre-cast at
    pack time; only the activation M dim is padded here."""
    M, K = x.shape
    Np = w_pad.shape[1]
    Mp = _round_up(M, 8)
    tm = min(tm, Mp)
    Mp = _round_up(Mp, tm)
    xp = jnp.pad(x, ((0, Mp - M), (0, 0)))
    out = pl.pallas_call(
        functools.partial(_matmul_kernel, relu=relu),
        out_shape=jax.ShapeDtypeStruct((Mp, Np), out_dtype),
        grid=(Mp // tm,),
        in_specs=[
            pl.BlockSpec((tm, K), lambda i: (i, 0)),
            pl.BlockSpec((K, Np), lambda i: (0, 0)),
            pl.BlockSpec((1, Np), lambda i: (0, 0)),
        ],
        out_specs=pl.BlockSpec((tm, Np), lambda i: (i, 0)),
        compiler_params=pltpu.CompilerParams(
            dimension_semantics=("parallel",)),
    )(xp, w_pad, b_pad)
    return out[:M, :n_out]


# -------------------------------- conv glue ----------------------------------

def im2col_nhwc(x, kh, kw, stride):
    """x: (B, H, W, C) -> patches (B*OH*OW, kh*kw*C), patch order (kh, kw, C)."""
    B, H, W, C = x.shape
    OH = (H - kh) // stride + 1
    OW = (W - kw) // stride + 1
    cols = []
    for ki in range(kh):
        for kj in range(kw):
            cols.append(x[:, ki:ki + stride * OH:stride,
                          kj:kj + stride * OW:stride, :])
    cols = jnp.stack(cols, axis=3)                  # (B, OH, OW, kh*kw, C)
    return cols.reshape(B * OH * OW, kh * kw * C), OH, OW


def conv2d_relu(x_nhwc, wf_pad, b_pad, n_out, kh, kw, stride):
    """PyTorch-style valid Conv2d + ReLU via im2col + Pallas matmul (bf16 out)."""
    cols, OH, OW = im2col_nhwc(x_nhwc, kh, kw, stride)
    y = linear_pallas(cols, wf_pad, b_pad, n_out, relu=True,
                      out_dtype=jnp.bfloat16)
    return y.reshape(x_nhwc.shape[0], OH, OW, n_out)


# --------------------- fused post-conv transformer kernel --------------------

def _fused_kernel(h0_ref, mem_ref, pos_ref, mask_ref, headmat_ref,
                  lh_w_ref, lh_b_ref, emb_w_ref, emb_b_ref,
                  wq_ref, wkv_ref, wo_ref, bo_ref, fc_w_ref, fc_b_ref,
                  ln1_g_ref, ln1_b_ref, ln2_g_ref, ln2_b_ref,
                  pv_w_ref, pv_b_ref, hd_w_ref, hd_b_ref,
                  out_ref, *, num_blocks, num_heads):
    mask = mask_ref[...]                          # (TB, M, 1) f32
    pos = pos_ref[...]                            # (TB, M, D) f32
    headmat = headmat_ref[...]                    # (D, D) f32 block-diag ones

    h = jnp.maximum(_mxdot(h0_ref[...], lh_w_ref[...]) + lh_b_ref[...], 0.0)
    h = jnp.maximum(_mxdot(h, emb_w_ref[...]) + emb_b_ref[...], 0.0)

    TB, M, D = pos.shape
    dh = D // num_heads
    scale = 1.0 / float(np.sqrt(dh))

    mems = []
    for i in range(num_blocks):                   # static unroll over blocks
        mems.append(h)
        mem_i = mem_ref[i] + pos                  # fused pos-embedding add (VMEM)
        # ---- MHA(query=h, kv=mem_i), all heads at once -----------------------
        q = _mxdot(h, wq_ref[i])                                  # (TB, D)
        kv = _mxdot(mem_i.reshape(TB * M, D), wkv_ref[i])         # (TB*M, 2D)
        kv = kv.reshape(TB, M, 2 * D)
        k = kv[:, :, :D]
        v = kv[:, :, D:]
        qk = k * q[:, None, :]                                    # (TB, M, D)
        # per-head score sums, broadcast back to all D lanes, in one small dot
        sc = jnp.dot(qk.reshape(TB * M, D), headmat,
                     preferred_element_type=jnp.float32)
        sc = sc.reshape(TB, M, D) * scale
        sc = jnp.where(mask > 0.0, sc, -1e20)
        sc = sc - jnp.max(sc, axis=1, keepdims=True)
        p = jnp.exp(sc)
        p = p * pl.reciprocal(jnp.sum(p, axis=1, keepdims=True), approx=True)
        ctx = jnp.sum(p * v, axis=1)                              # (TB, D)
        attn = _mxdot(ctx, wo_ref[i]) + bo_ref[i]
        # ---- residual + LN + MLP + LN ----------------------------------------
        x = _layer_norm(attn + h, ln1_g_ref[i], ln1_b_ref[i])
        f = jnp.maximum(_mxdot(x, fc_w_ref[i]) + fc_b_ref[i], 0.0)
        h = _layer_norm(f + x, ln2_g_ref[i], ln2_b_ref[i])

    # fused lin_policy|lin_value, then fused block-diagonal policy/value heads
    hpv = jnp.maximum(_mxdot(h, pv_w_ref[...]) + pv_b_ref[...], 0.0)
    head = _mxdot(hpv, hd_w_ref[...]) + hd_b_ref[...]             # (TB, HW)
    # single lane-dense slab: [policy|value|pad, h_block0, ..., h_block{n-1}]
    out_ref[...] = jnp.concatenate([head] + mems, axis=-1).astype(out_ref.dtype)


def fused_post_conv(h0, memory, pos, mask, packed, *, num_blocks, num_heads):
    B, F = h0.shape
    M, D = pos.shape[1], pos.shape[2]
    H2 = packed['pv_w'].shape[1]
    HW = packed['hd_w'].shape[1]
    OUTW = HW + num_blocks * D                    # multiple of 128 by packing

    TB, Bp = _pick_batch_tile(B)
    pad_b = Bp - B
    h0p = jnp.pad(h0, ((0, pad_b), (0, 0)))
    # (B, M, nb, D) -> (nb, B, M, D): per-block slice is a leading-dim index
    # inside the kernel (no tiled-dim relayout); pos add happens in VMEM.
    memp = jnp.pad(memory.transpose(2, 0, 1, 3),
                   ((0, 0), (0, pad_b), (0, 0), (0, 0)))
    posp = jnp.pad(pos, ((0, pad_b), (0, 0), (0, 0)))
    maskp = jnp.pad(mask, ((0, pad_b), (0, 0)), constant_values=1.0)[:, :, None]

    def rep(shape):
        nd = len(shape)
        return pl.BlockSpec(shape, lambda *_, _nd=nd: (0,) * _nd)

    out = pl.pallas_call(
        functools.partial(_fused_kernel, num_blocks=num_blocks,
                          num_heads=num_heads),
        out_shape=jax.ShapeDtypeStruct((Bp, OUTW), jnp.float32),
        grid=(Bp // TB,),
        in_specs=[
            pl.BlockSpec((TB, F), lambda b: (b, 0)),
            pl.BlockSpec((num_blocks, TB, M, D), lambda b: (0, b, 0, 0)),
            pl.BlockSpec((TB, M, D), lambda b: (b, 0, 0)),
            pl.BlockSpec((TB, M, 1), lambda b: (b, 0, 0)),
            rep((D, D)),
            rep((F, D)), rep((1, D)),
            rep((D, D)), rep((1, D)),
            rep((num_blocks, D, D)), rep((num_blocks, D, 2 * D)),
            rep((num_blocks, D, D)), rep((num_blocks, 1, D)),
            rep((num_blocks, D, D)), rep((num_blocks, 1, D)),
            rep((num_blocks, 1, D)), rep((num_blocks, 1, D)),
            rep((num_blocks, 1, D)), rep((num_blocks, 1, D)),
            rep((D, H2)), rep((1, H2)),
            rep((H2, HW)), rep((1, HW)),
        ],
        out_specs=pl.BlockSpec((TB, OUTW), lambda b: (b, 0)),
        compiler_params=pltpu.CompilerParams(
            dimension_semantics=("parallel",)),
    )(h0p, memp, posp, maskp, packed['headmat'],
      packed['lh_w'], packed['lh_b'], packed['emb_w'], packed['emb_b'],
      packed['wq'], packed['wkv'], packed['wo'], packed['bo'],
      packed['fc_w'], packed['fc_b'],
      packed['ln1_g'], packed['ln1_b'], packed['ln2_g'], packed['ln2_b'],
      packed['pv_w'], packed['pv_b'], packed['hd_w'], packed['hd_b'])

    head = out[:B, :HW]
    memory_out = out[:B, HW:].reshape(B, num_blocks, D)
    return head, memory_out


# ------------------------------ parameters -----------------------------------

def _dense_init(key, fan_in, fan_out, gain):
    # deterministic synthetic init (stands in for nn.init.orthogonal_)
    return jax.random.normal(key, (fan_in, fan_out), jnp.float32) * (
        gain / np.sqrt(fan_in))


def init_params(key, obs_shape, embed_dim, hidden, num_blocks, num_heads,
                action_space_shape, max_episode_length):
    C, H, W = obs_shape
    h1 = (H - 8) // 4 + 1
    h2 = (h1 - 4) // 2 + 1
    h3 = (h2 - 3) // 1 + 1
    conv_out = 64 * h3 * h3

    keys = iter(jax.random.split(key, 64))
    g2 = float(np.sqrt(2.0))
    p = {}
    p['conv1_w'] = jax.random.normal(next(keys), (32, C, 8, 8), jnp.float32) * (
        g2 / np.sqrt(C * 8 * 8))
    p['conv1_b'] = jnp.zeros((32,), jnp.float32)
    p['conv2_w'] = jax.random.normal(next(keys), (64, 32, 4, 4), jnp.float32) * (
        g2 / np.sqrt(32 * 4 * 4))
    p['conv2_b'] = jnp.zeros((64,), jnp.float32)
    p['conv3_w'] = jax.random.normal(next(keys), (64, 64, 3, 3), jnp.float32) * (
        g2 / np.sqrt(64 * 3 * 3))
    p['conv3_b'] = jnp.zeros((64,), jnp.float32)

    p['lin_hidden_w'] = _dense_init(next(keys), conv_out, embed_dim, g2)
    p['lin_hidden_b'] = jnp.zeros((embed_dim,), jnp.float32)

    p['emb_w'] = _dense_init(next(keys), embed_dim, embed_dim, g2)
    p['emb_b'] = jnp.zeros((embed_dim,), jnp.float32)
    p['pos_embedding'] = jax.random.normal(
        next(keys), (max_episode_length, embed_dim), jnp.float32) * 0.02

    blocks = []
    for _ in range(num_blocks):
        blocks.append({
            'wq': _dense_init(next(keys), embed_dim, embed_dim, 1.0),
            'wk': _dense_init(next(keys), embed_dim, embed_dim, 1.0),
            'wv': _dense_init(next(keys), embed_dim, embed_dim, 1.0),
            'wo': _dense_init(next(keys), embed_dim, embed_dim, 1.0),
            'bo': jnp.zeros((embed_dim,), jnp.float32),
            'fc_w': _dense_init(next(keys), embed_dim, embed_dim, g2),
            'fc_b': jnp.zeros((embed_dim,), jnp.float32),
            'ln1_g': jnp.ones((embed_dim,), jnp.float32),
            'ln1_b': jnp.zeros((embed_dim,), jnp.float32),
            'ln2_g': jnp.ones((embed_dim,), jnp.float32),
            'ln2_b': jnp.zeros((embed_dim,), jnp.float32),
        })
    p['blocks'] = blocks

    p['lin_policy_w'] = _dense_init(next(keys), embed_dim, hidden, g2)
    p['lin_policy_b'] = jnp.zeros((hidden,), jnp.float32)
    p['lin_value_w'] = _dense_init(next(keys), embed_dim, hidden, g2)
    p['lin_value_b'] = jnp.zeros((hidden,), jnp.float32)

    branches = []
    for num_actions in action_space_shape:
        branches.append((
            _dense_init(next(keys), hidden, num_actions, float(np.sqrt(0.01))),
            jnp.zeros((num_actions,), jnp.float32)))
    p['policy_branches'] = branches

    p['value_w'] = _dense_init(next(keys), hidden, 1, 1.0)
    p['value_b'] = jnp.zeros((1,), jnp.float32)
    return p


def _prep_conv(w, b):
    """OIHW conv weight -> pre-padded, bf16 im2col weight (K, Np) + f32 bias."""
    OutC, C, kh, kw = w.shape
    K = kh * kw * C
    Np = _round_up(OutC, 128)
    wf = w.transpose(2, 3, 1, 0).reshape(K, OutC)     # rows ordered (kh, kw, C)
    wf = jnp.pad(wf, ((0, 0), (0, Np - OutC))).astype(jnp.bfloat16)
    bf = jnp.pad(b.astype(jnp.float32), (0, Np - OutC)).reshape(1, Np)
    return wf, bf


def pack_params(p, num_heads, obs_shape):
    """All per-forward weight preprocessing hoisted here: im2col transpose,
    lane padding, bf16 casts, per-block stacking, head fusion, flatten perm."""
    C, H, W = obs_shape
    D = p['emb_w'].shape[0]
    hidden = p['lin_policy_w'].shape[1]
    dh = D // num_heads
    blocks = p['blocks']
    num_blocks = len(blocks)

    bf = lambda x: x.astype(jnp.bfloat16)
    f32row = lambda x: x.astype(jnp.float32).reshape(1, -1)

    packed = {}
    for name in ('conv1', 'conv2', 'conv3'):
        wf, bb = _prep_conv(p[name + '_w'], p[name + '_b'])
        packed[name + '_w'] = wf
        packed[name + '_b'] = bb

    # permute lin_hidden rows so NHWC-flattened conv output (y, x, c) matches
    # PyTorch's NCHW flatten (c, y, x) — removes a per-forward transpose.
    h1 = (H - 8) // 4 + 1
    h2 = (h1 - 4) // 2 + 1
    h3 = (h2 - 3) // 1 + 1
    conv_out = 64 * h3 * h3
    perm = np.arange(conv_out).reshape(64, h3, h3).transpose(1, 2, 0).reshape(-1)
    packed['lh_w'] = bf(p['lin_hidden_w'][perm])
    packed['lh_b'] = f32row(p['lin_hidden_b'])

    packed['emb_w'] = bf(p['emb_w'])
    packed['emb_b'] = f32row(p['emb_b'])

    packed['wq'] = bf(jnp.stack([b['wq'] for b in blocks]))
    packed['wkv'] = bf(jnp.stack(
        [jnp.concatenate([b['wk'], b['wv']], axis=1) for b in blocks]))
    packed['wo'] = bf(jnp.stack([b['wo'] for b in blocks]))
    packed['bo'] = jnp.stack([f32row(b['bo']) for b in blocks])
    packed['fc_w'] = bf(jnp.stack([b['fc_w'] for b in blocks]))
    packed['fc_b'] = jnp.stack([f32row(b['fc_b']) for b in blocks])
    for nm in ('ln1_g', 'ln1_b', 'ln2_g', 'ln2_b'):
        packed[nm] = jnp.stack([f32row(b[nm]) for b in blocks])

    packed['pv_w'] = bf(jnp.concatenate([p['lin_policy_w'],
                                         p['lin_value_w']], axis=1))
    packed['pv_b'] = f32row(jnp.concatenate([p['lin_policy_b'],
                                             p['lin_value_b']]))
    packed['pos_embedding'] = p['pos_embedding']

    # block-diagonal "head-sum broadcast" matrix (D -> per-head sum on all lanes)
    packed['headmat'] = jnp.asarray(
        np.kron(np.eye(num_heads, dtype=np.float32),
                np.ones((dh, dh), np.float32)))

    # fused output heads: [policy branches | value], width chosen so that
    # (head | memout blocks) concatenation is an exact 128-lane multiple slab.
    act_widths = [w.shape[1] for (w, _) in p['policy_branches']]
    A = int(sum(act_widths))
    OUTW = _round_up(A + 1 + num_blocks * D, 128)
    HW = OUTW - num_blocks * D
    hd_w = jnp.zeros((2 * hidden, HW), jnp.float32)
    hd_b = jnp.zeros((HW,), jnp.float32)
    col = 0
    for (w, b) in p['policy_branches']:
        n = w.shape[1]
        hd_w = hd_w.at[:hidden, col:col + n].set(w)
        hd_b = hd_b.at[col:col + n].set(b)
        col += n
    hd_w = hd_w.at[hidden:, col:col + 1].set(p['value_w'])
    hd_b = hd_b.at[col].set(p['value_b'][0])
    packed['hd_w'] = bf(hd_w)
    packed['hd_b'] = hd_b.reshape(1, -1)
    return packed


# --------------------------------- forward -----------------------------------

def actor_critic_forward(packed, obs, memory, memory_mask, memory_indices, *,
                         num_blocks, num_heads, action_space_shape):
    B = obs.shape[0]
    # CNN encoder (channels-last, bf16 activations; same conv schedule as PyTorch)
    x = obs.transpose(0, 2, 3, 1).astype(jnp.bfloat16)           # NCHW -> NHWC
    x = conv2d_relu(x, packed['conv1_w'], packed['conv1_b'], 32, 8, 8, 4)
    x = conv2d_relu(x, packed['conv2_w'], packed['conv2_b'], 64, 4, 4, 2)
    x = conv2d_relu(x, packed['conv3_w'], packed['conv3_b'], 64, 3, 3, 1)
    h0 = x.reshape(B, -1)           # NHWC flatten (lin_hidden rows pre-permuted)

    # positional embedding gather (glue); the add onto memory is fused in-kernel
    pos = packed['pos_embedding'][memory_indices]                 # (B, M, D)

    head, memory_out = fused_post_conv(
        h0, memory, pos, memory_mask, packed,
        num_blocks=num_blocks, num_heads=num_heads)

    pi_logits = []
    col = 0
    for n in action_space_shape:
        pi_logits.append(head[:, col:col + n])
        col += n
    value = head[:, col]
    return pi_logits, value, memory_out


# ----------------------------------- main ------------------------------------

if __name__ == "__main__":
    B = 2
    C, H, W = 3, 36, 36        # smallest square the 8/4, 4/2, 3/1 conv stack accepts
    embed_dim = 32             # config['transformer']['embed_dim']
    hidden = 32                # config['hidden_layer_size']
    num_heads = 4
    num_blocks = 2
    mem_len = 8
    max_episode_length = 16
    action_space_shape = (5,)

    key = jax.random.PRNGKey(0)
    k_params, k_obs, k_mem, k_idx = jax.random.split(key, 4)

    params = init_params(k_params, (C, H, W), embed_dim, hidden, num_blocks,
                         num_heads, action_space_shape, max_episode_length)
    packed = pack_params(params, num_heads, (C, H, W))

    obs = jax.random.normal(k_obs, (B, C, H, W), jnp.float32)
    memory = jax.random.normal(
        k_mem, (B, mem_len, num_blocks, embed_dim), jnp.float32) * 0.1
    memory_mask = jnp.concatenate(
        [jnp.ones((B, mem_len // 2), jnp.float32),
         jnp.zeros((B, mem_len - mem_len // 2), jnp.float32)], axis=1)
    memory_indices = jax.random.randint(
        k_idx, (B, mem_len), 0, max_episode_length, dtype=jnp.int32)

    @jax.jit
    def run(packed, obs, memory, memory_mask, memory_indices):
        return actor_critic_forward(
            packed, obs, memory, memory_mask, memory_indices,
            num_blocks=num_blocks, num_heads=num_heads,
            action_space_shape=action_space_shape)

    pi_logits, value, memory_out = run(packed, obs, memory, memory_mask,
                                       memory_indices)
    jax.block_until_ready((pi_logits, value, memory_out))

    assert pi_logits[0].shape == (B, action_space_shape[0])
    assert value.shape == (B,)
    assert memory_out.shape == (B, num_blocks, embed_dim)
    assert bool(jnp.all(jnp.isfinite(pi_logits[0])))
    assert bool(jnp.all(jnp.isfinite(value)))
    assert bool(jnp.all(jnp.isfinite(memory_out)))
    print("KERNEL_OK")
</pallas_src>

<mosaic_0001>
module attributes {stable_mosaic.version = 11 : i64} {
  func.func @_matmul_kernel(%arg0: i32, %arg1: memref<128x192xbf16, #tpu.memory_space<vmem>>, %arg2: memref<192x128xbf16, #tpu.memory_space<vmem>>, %arg3: memref<1x128xf32, #tpu.memory_space<vmem>>, %arg4: memref<128x128xbf16, #tpu.memory_space<vmem>>) attributes {dimension_semantics = [#tpu.dimension_semantics<parallel>], iteration_bounds = array<i64: 1>, scalar_prefetch = 0 : i64, scratch_operands = 0 : i64, tpu.core_type = #tpu.core_type<tc>, window_params = [{transform_indices = @transform_0, window_bounds = array<i64: 128, 192>}, {pipeline_mode = #tpu.pipeline_mode<synchronous>, transform_indices = @transform_1, window_bounds = array<i64: 192, 128>}, {pipeline_mode = #tpu.pipeline_mode<synchronous>, transform_indices = @transform_2, window_bounds = array<i64: 1, 128>}, {transform_indices = @transform_3, window_bounds = array<i64: 128, 128>}]} {
    %c0 = arith.constant 0 : index
    %c0_0 = arith.constant 0 : index
    %0 = vector.load %arg1[%c0, %c0_0] : memref<128x192xbf16, #tpu.memory_space<vmem>>, vector<128x192xbf16>
    %c0_1 = arith.constant 0 : index
    %c0_2 = arith.constant 0 : index
    %1 = vector.load %arg2[%c0_1, %c0_2] : memref<192x128xbf16, #tpu.memory_space<vmem>>, vector<192x128xbf16>
    %cst = arith.constant dense<0.000000e+00> : vector<128x128xf32>
    %2 = tpu.matmul %0, %1, %cst {dimension_numbers = #tpu.dot_dimension_numbers<[1], [0], [0], [1], [0, 0, 1, 1], [], []>} : vector<128x192xbf16>, vector<192x128xbf16>, vector<128x128xf32> -> vector<128x128xf32>
    %c0_3 = arith.constant 0 : index
    %c0_4 = arith.constant 0 : index
    %3 = vector.load %arg3[%c0_3, %c0_4] : memref<1x128xf32, #tpu.memory_space<vmem>>, vector<1x128xf32>
    %4 = vector.broadcast %3 : vector<1x128xf32> to vector<128x128xf32>
    %5 = arith.addf %2, %4 : vector<128x128xf32>
    %cst_5 = arith.constant 0.000000e+00 : f32
    %6 = vector.broadcast %cst_5 : f32 to vector<128x128xf32>
    %7 = arith.maximumf %5, %6 : vector<128x128xf32>
    %8 = arith.truncf %7 : vector<128x128xf32> to vector<128x128xbf16>
    %c0_6 = arith.constant 0 : index
    %c0_7 = arith.constant 0 : index
    %9 = vector.load %arg4[%c0_6, %c0_7] : memref<128x128xbf16, #tpu.memory_space<vmem>>, vector<128x128xbf16>
    tpu.vector_store %arg4[%c0_6, %c0_7], %8 {strides = array<i32>} : memref<128x128xbf16, #tpu.memory_space<vmem>>, vector<128x128xbf16>,
    return
  }
  func.func @transform_0(%arg0: i32) -> (i32, i32) {
    %c0_i32 = arith.constant 0 : i32
    %c0_i32_0 = arith.constant 0 : i32
    return %arg0, %c0_i32 : i32, i32
  }
  func.func @transform_1(%arg0: i32) -> (i32, i32) {
    %c0_i32 = arith.constant 0 : i32
    %c0_i32_0 = arith.constant 0 : i32
    %c0_i32_1 = arith.constant 0 : i32
    return %c0_i32, %c0_i32_0 : i32, i32
  }
  func.func @transform_2(%arg0: i32) -> (i32, i32) {
    %c0_i32 = arith.constant 0 : i32
    %c0_i32_0 = arith.constant 0 : i32
    %c0_i32_1 = arith.constant 0 : i32
    return %c0_i32, %c0_i32_0 : i32, i32
  }
  func.func @transform_3(%arg0: i32) -> (i32, i32) {
    %c0_i32 = arith.constant 0 : i32
    %c0_i32_0 = arith.constant 0 : i32
    return %arg0, %c0_i32 : i32, i32
  }
}

module attributes {stable_mosaic.version = 11 : i64} {
  func.func @_matmul_kernel(%arg0: i32, %arg1: memref<24x512xbf16, #tpu.memory_space<vmem>>, %arg2: memref<512x128xbf16, #tpu.memory_space<vmem>>, %arg3: memref<1x128xf32, #tpu.memory_space<vmem>>, %arg4: memref<24x128xbf16, #tpu.memory_space<vmem>>) attributes {dimension_semantics = [#tpu.dimension_semantics<parallel>], iteration_bounds = array<i64: 1>, scalar_prefetch = 0 : i64, scratch_operands = 0 : i64, tpu.core_type = #tpu.core_type<tc>, window_params = [{transform_indices = @transform_0, window_bounds = array<i64: 24, 512>}, {pipeline_mode = #tpu.pipeline_mode<synchronous>, transform_indices = @transform_1, window_bounds = array<i64: 512, 128>}, {pipeline_mode = #tpu.pipeline_mode<synchronous>, transform_indices = @transform_2, window_bounds = array<i64: 1, 128>}, {transform_indices = @transform_3, window_bounds = array<i64: 24, 128>}]} {
    %c0 = arith.constant 0 : index
    %c0_0 = arith.constant 0 : index
    %0 = vector.load %arg1[%c0, %c0_0] : memref<24x512xbf16, #tpu.memory_space<vmem>>, vector<24x512xbf16>
    %c0_1 = arith.constant 0 : index
    %c0_2 = arith.constant 0 : index
    %1 = vector.load %arg2[%c0_1, %c0_2] : memref<512x128xbf16, #tpu.memory_space<vmem>>, vector<512x128xbf16>
    %cst = arith.constant dense<0.000000e+00> : vector<24x128xf32>
    %2 = tpu.matmul %0, %1, %cst {dimension_numbers = #tpu.dot_dimension_numbers<[1], [0], [0], [1], [0, 0, 1, 1], [], []>} : vector<24x512xbf16>, vector<512x128xbf16>, vector<24x128xf32> -> vector<24x128xf32>
    %c0_3 = arith.constant 0 : index
    %c0_4 = arith.constant 0 : index
    %3 = vector.load %arg3[%c0_3, %c0_4] : memref<1x128xf32, #tpu.memory_space<vmem>>, vector<1x128xf32>
    %4 = vector.broadcast %3 : vector<1x128xf32> to vector<24x128xf32>
    %5 = arith.addf %2, %4 : vector<24x128xf32>
    %cst_5 = arith.constant 0.000000e+00 : f32
    %6 = vector.broadcast %cst_5 : f32 to vector<24x128xf32>
    %7 = arith.maximumf %5, %6 : vector<24x128xf32>
    %8 = arith.truncf %7 : vector<24x128xf32> to vector<24x128xbf16>
    %c0_6 = arith.constant 0 : index
    %c0_7 = arith.constant 0 : index
    %9 = vector.load %arg4[%c0_6, %c0_7] : memref<24x128xbf16, #tpu.memory_space<vmem>>, vector<24x128xbf16>
    tpu.vector_store %arg4[%c0_6, %c0_7], %8 {strides = array<i32>} : memref<24x128xbf16, #tpu.memory_space<vmem>>, vector<24x128xbf16>,
    return
  }
  func.func @transform_0(%arg0: i32) -> (i32, i32) {
    %c0_i32 = arith.constant 0 : i32
    %c0_i32_0 = arith.constant 0 : i32
    return %arg0, %c0_i32 : i32, i32
  }
  func.func @transform_1(%arg0: i32) -> (i32, i32) {
    %c0_i32 = arith.constant 0 : i32
    %c0_i32_0 = arith.constant 0 : i32
    %c0_i32_1 = arith.constant 0 : i32
    return %c0_i32, %c0_i32_0 : i32, i32
  }
  func.func @transform_2(%arg0: i32) -> (i32, i32) {
    %c0_i32 = arith.constant 0 : i32
    %c0_i32_0 = arith.constant 0 : i32
    %c0_i32_1 = arith.constant 0 : i32
    return %c0_i32, %c0_i32_0 : i32, i32
  }
  func.func @transform_3(%arg0: i32) -> (i32, i32) {
    %c0_i32 = arith.constant 0 : i32
    %c0_i32_0 = arith.constant 0 : i32
    return %arg0, %c0_i32 : i32, i32
  }
}

module attributes {stable_mosaic.version = 11 : i64} {
  func.func @_matmul_kernel(%arg0: i32, %arg1: memref<8x576xbf16, #tpu.memory_space<vmem>>, %arg2: memref<576x128xbf16, #tpu.memory_space<vmem>>, %arg3: memref<1x128xf32, #tpu.memory_space<vmem>>, %arg4: memref<8x128xbf16, #tpu.memory_space<vmem>>) attributes {dimension_semantics = [#tpu.dimension_semantics<parallel>], iteration_bounds = array<i64: 1>, scalar_prefetch = 0 : i64, scratch_operands = 0 : i64, tpu.core_type = #tpu.core_type<tc>, window_params = [{transform_indices = @transform_0, window_bounds = array<i64: 8, 576>}, {pipeline_mode = #tpu.pipeline_mode<synchronous>, transform_indices = @transform_1, window_bounds = array<i64: 576, 128>}, {pipeline_mode = #tpu.pipeline_mode<synchronous>, transform_indices = @transform_2, window_bounds = array<i64: 1, 128>}, {transform_indices = @transform_3, window_bounds = array<i64: 8, 128>}]} {
    %c0 = arith.constant 0 : index
    %c0_0 = arith.constant 0 : index
    %0 = vector.load %arg1[%c0, %c0_0] : memref<8x576xbf16, #tpu.memory_space<vmem>>, vector<8x576xbf16>
    %c0_1 = arith.constant 0 : index
    %c0_2 = arith.constant 0 : index
    %1 = vector.load %arg2[%c0_1, %c0_2] : memref<576x128xbf16, #tpu.memory_space<vmem>>, vector<576x128xbf16>
    %cst = arith.constant dense<0.000000e+00> : vector<8x128xf32>
    %2 = tpu.matmul %0, %1, %cst {dimension_numbers = #tpu.dot_dimension_numbers<[1], [0], [0], [1], [0, 0, 1, 1], [], []>} : vector<8x576xbf16>, vector<576x128xbf16>, vector<8x128xf32> -> vector<8x128xf32>
    %c0_3 = arith.constant 0 : index
    %c0_4 = arith.constant 0 : index
    %3 = vector.load %arg3[%c0_3, %c0_4] : memref<1x128xf32, #tpu.memory_space<vmem>>, vector<1x128xf32>
    %4 = vector.broadcast %3 : vector<1x128xf32> to vector<8x128xf32>
    %5 = arith.addf %2, %4 : vector<8x128xf32>
    %cst_5 = arith.constant 0.000000e+00 : f32
    %6 = vector.broadcast %cst_5 : f32 to vector<8x128xf32>
    %7 = arith.maximumf %5, %6 : vector<8x128xf32>
    %8 = arith.truncf %7 : vector<8x128xf32> to vector<8x128xbf16>
    %c0_6 = arith.constant 0 : index
    %c0_7 = arith.constant 0 : index
    %9 = vector.load %arg4[%c0_6, %c0_7] : memref<8x128xbf16, #tpu.memory_space<vmem>>, vector<8x128xbf16>
    tpu.vector_store %arg4[%c0_6, %c0_7], %8 {strides = array<i32>} : memref<8x128xbf16, #tpu.memory_space<vmem>>, vector<8x128xbf16>,
    return
  }
  func.func @transform_0(%arg0: i32) -> (i32, i32) {
    %c0_i32 = arith.constant 0 : i32
    %c0_i32_0 = arith.constant 0 : i32
    return %arg0, %c0_i32 : i32, i32
  }
  func.func @transform_1(%arg0: i32) -> (i32, i32) {
    %c0_i32 = arith.constant 0 : i32
    %c0_i32_0 = arith.constant 0 : i32
    %c0_i32_1 = arith.constant 0 : i32
    return %c0_i32, %c0_i32_0 : i32, i32
  }
  func.func @transform_2(%arg0: i32) -> (i32, i32) {
    %c0_i32 = arith.constant 0 : i32
    %c0_i32_0 = arith.constant 0 : i32
    %c0_i32_1 = arith.constant 0 : i32
    return %c0_i32, %c0_i32_0 : i32, i32
  }
  func.func @transform_3(%arg0: i32) -> (i32, i32) {
    %c0_i32 = arith.constant 0 : i32
    %c0_i32_0 = arith.constant 0 : i32
    return %arg0, %c0_i32 : i32, i32
  }
}

module attributes {stable_mosaic.version = 11 : i64} {
  func.func @_fused_kernel(%arg0: i32, %arg1: memref<8x64xbf16, #tpu.memory_space<vmem>>, %arg2: memref<2x8x8x32xf32, #tpu.memory_space<vmem>>, %arg3: memref<8x8x32xf32, #tpu.memory_space<vmem>>, %arg4: memref<8x8x1xf32, #tpu.memory_space<vmem>>, %arg5: memref<32x32xf32, #tpu.memory_space<vmem>>, %arg6: memref<64x32xbf16, #tpu.memory_space<vmem>>, %arg7: memref<1x32xf32, #tpu.memory_space<vmem>>, %arg8: memref<32x32xbf16, #tpu.memory_space<vmem>>, %arg9: memref<1x32xf32, #tpu.memory_space<vmem>>, %arg10: memref<2x32x32xbf16, #tpu.memory_space<vmem>>, %arg11: memref<2x32x64xbf16, #tpu.memory_space<vmem>>, %arg12: memref<2x32x32xbf16, #tpu.memory_space<vmem>>, %arg13: memref<2x1x32xf32, #tpu.memory_space<vmem>>, %arg14: memref<2x32x32xbf16, #tpu.memory_space<vmem>>, %arg15: memref<2x1x32xf32, #tpu.memory_space<vmem>>, %arg16: memref<2x1x32xf32, #tpu.memory_space<vmem>>, %arg17: memref<2x1x32xf32, #tpu.memory_space<vmem>>, %arg18: memref<2x1x32xf32, #tpu.memory_space<vmem>>, %arg19: memref<2x1x32xf32, #tpu.memory_space<vmem>>, %arg20: memref<32x64xbf16, #tpu.memory_space<vmem>>, %arg21: memref<1x64xf32, #tpu.memory_space<vmem>>, %arg22: memref<64x64xbf16, #tpu.memory_space<vmem>>, %arg23: memref<1x64xf32, #tpu.memory_space<vmem>>, %arg24: memref<8x128xf32, #tpu.memory_space<vmem>>) attributes {dimension_semantics = [#tpu.dimension_semantics<parallel>], iteration_bounds = array<i64: 1>, scalar_prefetch = 0 : i64, scratch_operands = 0 : i64, tpu.core_type = #tpu.core_type<tc>, window_params = [{transform_indices = @transform_0, window_bounds = array<i64: 8, 64>}, {transform_indices = @transform_1, window_bounds = array<i64: 2, 8, 8, 32>}, {transform_indices = @transform_2, window_bounds = array<i64: 8, 8, 32>}, {transform_indices = @transform_3, window_bounds = array<i64: 8, 8, 1>}, {pipeline_mode = #tpu.pipeline_mode<synchronous>, transform_indices = @transform_4, window_bounds = array<i64: 32, 32>}, {pipeline_mode = #tpu.pipeline_mode<synchronous>, transform_indices = @transform_5, window_bounds = array<i64: 64, 32>}, {pipeline_mode = #tpu.pipeline_mode<synchronous>, transform_indices = @transform_6, window_bounds = array<i64: 1, 32>}, {pipeline_mode = #tpu.pipeline_mode<synchronous>, transform_indices = @transform_7, window_bounds = array<i64: 32, 32>}, {pipeline_mode = #tpu.pipeline_mode<synchronous>, transform_indices = @transform_8, window_bounds = array<i64: 1, 32>}, {pipeline_mode = #tpu.pipeline_mode<synchronous>, transform_indices = @transform_9, window_bounds = array<i64: 2, 32, 32>}, {pipeline_mode = #tpu.pipeline_mode<synchronous>, transform_indices = @transform_10, window_bounds = array<i64: 2, 32, 64>}, {pipeline_mode = #tpu.pipeline_mode<synchronous>, transform_indices = @transform_11, window_bounds = array<i64: 2, 32, 32>}, {pipeline_mode = #tpu.pipeline_mode<synchronous>, transform_indices = @transform_12, window_bounds = array<i64: 2, 1, 32>}, {pipeline_mode = #tpu.pipeline_mode<synchronous>, transform_indices = @transform_13, window_bounds = array<i64: 2, 32, 32>}, {pipeline_mode = #tpu.pipeline_mode<synchronous>, transform_indices = @transform_14, window_bounds = array<i64: 2, 1, 32>}, {pipeline_mode = #tpu.pipeline_mode<synchronous>, transform_indices = @transform_15, window_bounds = array<i64: 2, 1, 32>}, {pipeline_mode = #tpu.pipeline_mode<synchronous>, transform_indices = @transform_16, window_bounds = array<i64: 2, 1, 32>}, {pipeline_mode = #tpu.pipeline_mode<synchronous>, transform_indices = @transform_17, window_bounds = array<i64: 2, 1, 32>}, {pipeline_mode = #tpu.pipeline_mode<synchronous>, transform_indices = @transform_18, window_bounds = array<i64: 2, 1, 32>}, {pipeline_mode = #tpu.pipeline_mode<synchronous>, transform_indices = @transform_19, window_bounds = array<i64: 32, 64>}, {pipeline_mode = #tpu.pipeline_mode<synchronous>, transform_indices = @transform_20, window_bounds = array<i64: 1, 64>}, {pipeline_mode = #tpu.pipeline_mode<synchronous>, transform_indices = @transform_21, window_bounds = array<i64: 64, 64>}, {pipeline_mode = #tpu.pipeline_mode<synchronous>, transform_indices = @transform_22, window_bounds = array<i64: 1, 64>}, {transform_indices = @transform_23, window_bounds = array<i64: 8, 128>}]} {
    %c0 = arith.constant 0 : index
    %c0_0 = arith.constant 0 : index
    %c0_1 = arith.constant 0 : index
    %0 = vector.load %arg4[%c0, %c0_0, %c0_1] : memref<8x8x1xf32, #tpu.memory_space<vmem>>, vector<8x8x1xf32>
    %c0_2 = arith.constant 0 : index
    %c0_3 = arith.constant 0 : index
    %c0_4 = arith.constant 0 : index
    %1 = vector.load %arg3[%c0_2, %c0_3, %c0_4] : memref<8x8x32xf32, #tpu.memory_space<vmem>>, vector<8x8x32xf32>
    %c0_5 = arith.constant 0 : index
    %c0_6 = arith.constant 0 : index
    %2 = vector.load %arg5[%c0_5, %c0_6] : memref<32x32xf32, #tpu.memory_space<vmem>>, vector<32x32xf32>
    %c0_7 = arith.constant 0 : index
    %c0_8 = arith.constant 0 : index
    %3 = vector.load %arg1[%c0_7, %c0_8] : memref<8x64xbf16, #tpu.memory_space<vmem>>, vector<8x64xbf16>
    %c0_9 = arith.constant 0 : index
    %c0_10 = arith.constant 0 : index
    %4 = vector.load %arg6[%c0_9, %c0_10] : memref<64x32xbf16, #tpu.memory_space<vmem>>, vector<64x32xbf16>
    %cst = arith.constant dense<0.000000e+00> : vector<8x32xf32>
    %5 = tpu.matmul %3, %4, %cst {dimension_numbers = #tpu.dot_dimension_numbers<[1], [0], [0], [1], [0, 0, 1, 1], [], []>} : vector<8x64xbf16>, vector<64x32xbf16>, vector<8x32xf32> -> vector<8x32xf32>
    %c0_11 = arith.constant 0 : index
    %c0_12 = arith.constant 0 : index
    %6 = vector.load %arg7[%c0_11, %c0_12] : memref<1x32xf32, #tpu.memory_space<vmem>>, vector<1x32xf32>
    %7 = vector.broadcast %6 : vector<1x32xf32> to vector<8x32xf32>
    %8 = arith.addf %5, %7 : vector<8x32xf32>
    %cst_13 = arith.constant 0.000000e+00 : f32
    %9 = vector.broadcast %cst_13 : f32 to vector<8x32xf32>
    %10 = arith.maximumf %8, %9 : vector<8x32xf32>
    %c0_14 = arith.constant 0 : index
    %c0_15 = arith.constant 0 : index
    %11 = vector.load %arg8[%c0_14, %c0_15] : memref<32x32xbf16, #tpu.memory_space<vmem>>, vector<32x32xbf16>
    %12 = arith.truncf %10 : vector<8x32xf32> to vector<8x32xbf16>
    %cst_16 = arith.constant dense<0.000000e+00> : vector<8x32xf32>
    %13 = tpu.matmul %12, %11, %cst_16 {dimension_numbers = #tpu.dot_dimension_numbers<[1], [0], [0], [1], [0, 0, 1, 1], [], []>} : vector<8x32xbf16>, vector<32x32xbf16>, vector<8x32xf32> -> vector<8x32xf32>
    %c0_17 = arith.constant 0 : index
    %c0_18 = arith.constant 0 : index
    %14 = vector.load %arg9[%c0_17, %c0_18] : memref<1x32xf32, #tpu.memory_space<vmem>>, vector<1x32xf32>
    %15 = vector.broadcast %14 : vector<1x32xf32> to vector<8x32xf32>
    %16 = arith.addf %13, %15 : vector<8x32xf32>
    %cst_19 = arith.constant 0.000000e+00 : f32
    %17 = vector.broadcast %cst_19 : f32 to vector<8x32xf32>
    %18 = arith.maximumf %16, %17 : vector<8x32xf32>
    %c0_20 = arith.constant 0 : index
    %c0_21 = arith.constant 0 : index
    %c0_22 = arith.constant 0 : index
    %c0_23 = arith.constant 0 : index
    %19 = vector.load %arg2[%c0_20, %c0_21, %c0_22, %c0_23] : memref<2x8x8x32xf32, #tpu.memory_space<vmem>>, vector<1x8x8x32xf32>
    %20 = vector.shape_cast %19 : vector<1x8x8x32xf32> to vector<8x8x32xf32>
    %21 = arith.addf %20, %1 : vector<8x8x32xf32>
    %c0_24 = arith.constant 0 : index
    %c0_25 = arith.constant 0 : index
    %c0_26 = arith.constant 0 : index
    %22 = vector.load %arg10[%c0_24, %c0_25, %c0_26] : memref<2x32x32xbf16, #tpu.memory_space<vmem>>, vector<1x32x32xbf16>
    %23 = vector.shape_cast %22 : vector<1x32x32xbf16> to vector<32x32xbf16>
    %24 = arith.truncf %18 : vector<8x32xf32> to vector<8x32xbf16>
    %cst_27 = arith.constant dense<0.000000e+00> : vector<8x32xf32>
    %25 = tpu.matmul %24, %23, %cst_27 {dimension_numbers = #tpu.dot_dimension_numbers<[1], [0], [0], [1], [0, 0, 1, 1], [], []>} : vector<8x32xbf16>, vector<32x32xbf16>, vector<8x32xf32> -> vector<8x32xf32>
    %26 = vector.shape_cast %21 : vector<8x8x32xf32> to vector<64x32xf32>
    %c0_28 = arith.constant 0 : index
    %c0_29 = arith.constant 0 : index
    %c0_30 = arith.constant 0 : index
    %27 = vector.load %arg11[%c0_28, %c0_29, %c0_30] : memref<2x32x64xbf16, #tpu.memory_space<vmem>>, vector<1x32x64xbf16>
    %28 = vector.shape_cast %27 : vector<1x32x64xbf16> to vector<32x64xbf16>
    %29 = arith.truncf %26 : vector<64x32xf32> to vector<64x32xbf16>
    %cst_31 = arith.constant dense<0.000000e+00> : vector<64x64xf32>
    %30 = tpu.matmul %29, %28, %cst_31 {dimension_numbers = #tpu.dot_dimension_numbers<[1], [0], [0], [1], [0, 0, 1, 1], [], []>} : vector<64x32xbf16>, vector<32x64xbf16>, vector<64x64xf32> -> vector<64x64xf32>
    %31 = vector.shape_cast %30 : vector<64x64xf32> to vector<8x8x64xf32>
    %32 = vector.extract_strided_slice %31 {offsets = [0, 0, 0], sizes = [8, 8, 32], strides = [1, 1, 1]} : vector<8x8x64xf32> to vector<8x8x32xf32>
    %33 = vector.extract_strided_slice %31 {offsets = [0, 0, 32], sizes = [8, 8, 32], strides = [1, 1, 1]} : vector<8x8x64xf32> to vector<8x8x32xf32>
    %34 = vector.shape_cast %25 : vector<8x32xf32> to vector<8x1x32xf32>
    %35 = vector.broadcast %34 : vector<8x1x32xf32> to vector<8x8x32xf32>
    %36 = arith.mulf %32, %35 : vector<8x8x32xf32>
    %37 = vector.shape_cast %36 : vector<8x8x32xf32> to vector<64x32xf32>
    %cst_32 = arith.constant dense<0.000000e+00> : vector<64x32xf32>
    %38 = tpu.matmul %37, %2, %cst_32 {dimension_numbers = #tpu.dot_dimension_numbers<[1], [0], [0], [1], [0, 0, 1, 1], [], []>} : vector<64x32xf32>, vector<32x32xf32>, vector<64x32xf32> -> vector<64x32xf32>
    %39 = vector.shape_cast %38 : vector<64x32xf32> to vector<8x8x32xf32>
    %cst_33 = arith.constant 0.353553385 : f32
    %40 = vector.broadcast %cst_33 : f32 to vector<8x8x32xf32>
    %41 = arith.mulf %39, %40 : vector<8x8x32xf32>
    %cst_34 = arith.constant 0.000000e+00 : f32
    %42 = vector.broadcast %cst_34 : f32 to vector<8x8x1xf32>
    %43 = arith.cmpf ogt, %0, %42 : vector<8x8x1xf32>
    %cst_35 = arith.constant -1.000000e+20 : f32
    %44 = vector.shape_cast %43 : vector<8x8x1xi1> to vector<8x8x1xi1>
    %45 = vector.broadcast %44 : vector<8x8x1xi1> to vector<8x8x32xi1>
    %46 = vector.broadcast %cst_35 : f32 to vector<8x8x32xf32>
    %47 = arith.select %45, %41, %46 : vector<8x8x32xi1>, vector<8x8x32xf32>
    %cst_36 = arith.constant dense<0xFF800000> : vector<8x32xf32>
    %48 = vector.multi_reduction <maximumf>, %47, %cst_36 [1] : vector<8x8x32xf32> to vector<8x32xf32>
    %49 = vector.shape_cast %48 : vector<8x32xf32> to vector<8x1x32xf32>
    %50 = vector.broadcast %49 : vector<8x1x32xf32> to vector<8x8x32xf32>
    %51 = arith.subf %47, %50 : vector<8x8x32xf32>
    %52 = math.exp %51 : vector<8x8x32xf32>
    %cst_37 = arith.constant dense<0.000000e+00> : vector<8x32xf32>
    %53 = vector.multi_reduction <add>, %52, %cst_37 [1] : vector<8x8x32xf32> to vector<8x32xf32>
    %54 = vector.shape_cast %53 : vector<8x32xf32> to vector<8x1x32xf32>
    %55 = tpu.reciprocal %54 {approx = true} : vector<8x1x32xf32> -> vector<8x1x32xf32>
    %56 = vector.broadcast %55 : vector<8x1x32xf32> to vector<8x8x32xf32>
    %57 = arith.mulf %52, %56 : vector<8x8x32xf32>
    %58 = arith.mulf %57, %33 : vector<8x8x32xf32>
    %cst_38 = arith.constant dense<0.000000e+00> : vector<8x32xf32>
    %59 = vector.multi_reduction <add>, %58, %cst_38 [1] : vector<8x8x32xf32> to vector<8x32xf32>
    %c0_39 = arith.constant 0 : index
    %c0_40 = arith.constant 0 : index
    %c0_41 = arith.constant 0 : index
    %60 = vector.load %arg12[%c0_39, %c0_40, %c0_41] : memref<2x32x32xbf16, #tpu.memory_space<vmem>>, vector<1x32x32xbf16>
    %61 = vector.shape_cast %60 : vector<1x32x32xbf16> to vector<32x32xbf16>
    %62 = arith.truncf %59 : vector<8x32xf32> to vector<8x32xbf16>
    %cst_42 = arith.constant dense<0.000000e+00> : vector<8x32xf32>
    %63 = tpu.matmul %62, %61, %cst_42 {dimension_numbers = #tpu.dot_dimension_numbers<[1], [0], [0], [1], [0, 0, 1, 1], [], []>} : vector<8x32xbf16>, vector<32x32xbf16>, vector<8x32xf32> -> vector<8x32xf32>
    %c0_43 = arith.constant 0 : index
    %c0_44 = arith.constant 0 : index
    %c0_45 = arith.constant 0 : index
    %64 = vector.load %arg13[%c0_43, %c0_44, %c0_45] : memref<2x1x32xf32, #tpu.memory_space<vmem>>, vector<1x1x32xf32>
    %65 = vector.shape_cast %64 : vector<1x1x32xf32> to vector<1x32xf32>
    %66 = vector.broadcast %65 : vector<1x32xf32> to vector<8x32xf32>
    %67 = arith.addf %63, %66 : vector<8x32xf32>
    %68 = arith.addf %67, %18 : vector<8x32xf32>
    %c0_46 = arith.constant 0 : index
    %c0_47 = arith.constant 0 : index
    %c0_48 = arith.constant 0 : index
    %69 = vector.load %arg16[%c0_46, %c0_47, %c0_48] : memref<2x1x32xf32, #tpu.memory_space<vmem>>, vector<1x1x32xf32>
    %70 = vector.shape_cast %69 : vector<1x1x32xf32> to vector<1x32xf32>
    %c0_49 = arith.constant 0 : index
    %c0_50 = arith.constant 0 : index
    %c0_51 = arith.constant 0 : index
    %71 = vector.load %arg17[%c0_49, %c0_50, %c0_51] : memref<2x1x32xf32, #tpu.memory_space<vmem>>, vector<1x1x32xf32>
    %72 = vector.shape_cast %71 : vector<1x1x32xf32> to vector<1x32xf32>
    %cst_52 = arith.constant dense<0.000000e+00> : vector<8xf32>
    %73 = vector.multi_reduction <add>, %68, %cst_52 [1] : vector<8x32xf32> to vector<8xf32>
    %74 = vector.shape_cast %73 : vector<8xf32> to vector<8x1xf32>
    %cst_53 = arith.constant 3.200000e+01 : f32
    %75 = vector.broadcast %cst_53 : f32 to vector<8x1xf32>
    %76 = arith.divf %74, %75 : vector<8x1xf32>
    %77 = vector.broadcast %76 : vector<8x1xf32> to vector<8x32xf32>
    %78 = arith.subf %68, %77 : vector<8x32xf32>
    %79 = arith.mulf %78, %78 : vector<8x32xf32>
    %cst_54 = arith.constant dense<0.000000e+00> : vector<8xf32>
    %80 = vector.multi_reduction <add>, %79, %cst_54 [1] : vector<8x32xf32> to vector<8xf32>
    %81 = vector.shape_cast %80 : vector<8xf32> to vector<8x1xf32>
    %cst_55 = arith.constant 3.200000e+01 : f32
    %82 = vector.broadcast %cst_55 : f32 to vector<8x1xf32>
    %83 = arith.divf %81, %82 : vector<8x1xf32>
    %84 = vector.broadcast %76 : vector<8x1xf32> to vector<8x32xf32>
    %85 = arith.subf %68, %84 : vector<8x32xf32>
    %cst_56 = arith.constant 9.99999974E-6 : f32
    %86 = vector.broadcast %cst_56 : f32 to vector<8x1xf32>
    %87 = arith.addf %83, %86 : vector<8x1xf32>
    %88 = math.rsqrt %87 : vector<8x1xf32>
    %89 = vector.broadcast %88 : vector<8x1xf32> to vector<8x32xf32>
    %90 = arith.mulf %85, %89 : vector<8x32xf32>
    %91 = vector.broadcast %70 : vector<1x32xf32> to vector<8x32xf32>
    %92 = arith.mulf %90, %91 : vector<8x32xf32>
    %93 = vector.broadcast %72 : vector<1x32xf32> to vector<8x32xf32>
    %94 = arith.addf %92, %93 : vector<8x32xf32>
    %c0_57 = arith.constant 0 : index
    %c0_58 = arith.constant 0 : index
    %c0_59 = arith.constant 0 : index
    %95 = vector.load %arg14[%c0_57, %c0_58, %c0_59] : memref<2x32x32xbf16, #tpu.memory_space<vmem>>, vector<1x32x32xbf16>
    %96 = vector.shape_cast %95 : vector<1x32x32xbf16> to vector<32x32xbf16>
    %97 = arith.truncf %94 : vector<8x32xf32> to vector<8x32xbf16>
    %cst_60 = arith.constant dense<0.000000e+00> : vector<8x32xf32>
    %98 = tpu.matmul %97, %96, %cst_60 {dimension_numbers = #tpu.dot_dimension_numbers<[1], [0], [0], [1], [0, 0, 1, 1], [], []>} : vector<8x32xbf16>, vector<32x32xbf16>, vector<8x32xf32> -> vector<8x32xf32>
    %c0_61 = arith.constant 0 : index
    %c0_62 = arith.constant 0 : index
    %c0_63 = arith.constant 0 : index
    %99 = vector.load %arg15[%c0_61, %c0_62, %c0_63] : memref<2x1x32xf32, #tpu.memory_space<vmem>>, vector<1x1x32xf32>
    %100 = vector.shape_cast %99 : vector<1x1x32xf32> to vector<1x32xf32>
    %101 = vector.broadcast %100 : vector<1x32xf32> to vector<8x32xf32>
    %102 = arith.addf %98, %101 : vector<8x32xf32>
    %cst_64 = arith.constant 0.000000e+00 : f32
    %103 = vector.broadcast %cst_64 : f32 to vector<8x32xf32>
    %104 = arith.maximumf %102, %103 : vector<8x32xf32>
    %105 = arith.addf %104, %94 : vector<8x32xf32>
    %c0_65 = arith.constant 0 : index
    %c0_66 = arith.constant 0 : index
    %c0_67 = arith.constant 0 : index
    %106 = vector.load %arg18[%c0_65, %c0_66, %c0_67] : memref<2x1x32xf32, #tpu.memory_space<vmem>>, vector<1x1x32xf32>
    %107 = vector.shape_cast %106 : vector<1x1x32xf32> to vector<1x32xf32>
    %c0_68 = arith.constant 0 : index
    %c0_69 = arith.constant 0 : index
    %c0_70 = arith.constant 0 : index
    %108 = vector.load %arg19[%c0_68, %c0_69, %c0_70] : memref<2x1x32xf32, #tpu.memory_space<vmem>>, vector<1x1x32xf32>
    %109 = vector.shape_cast %108 : vector<1x1x32xf32> to vector<1x32xf32>
    %cst_71 = arith.constant dense<0.000000e+00> : vector<8xf32>
    %110 = vector.multi_reduction <add>, %105, %cst_71 [1] : vector<8x32xf32> to vector<8xf32>
    %111 = vector.shape_cast %110 : vector<8xf32> to vector<8x1xf32>
    %cst_72 = arith.constant 3.200000e+01 : f32
    %112 = vector.broadcast %cst_72 : f32 to vector<8x1xf32>
    %113 = arith.divf %111, %112 : vector<8x1xf32>
    %114 = vector.broadcast %113 : vector<8x1xf32> to vector<8x32xf32>
    %115 = arith.subf %105, %114 : vector<8x32xf32>
    %116 = arith.mulf %115, %115 : vector<8x32xf32>
    %cst_73 = arith.constant dense<0.000000e+00> : vector<8xf32>
    %117 = vector.multi_reduction <add>, %116, %cst_73 [1] : vector<8x32xf32> to vector<8xf32>
    %118 = vector.shape_cast %117 : vector<8xf32> to vector<8x1xf32>
    %cst_74 = arith.constant 3.200000e+01 : f32
    %119 = vector.broadcast %cst_74 : f32 to vector<8x1xf32>
    %120 = arith.divf %118, %119 : vector<8x1xf32>
    %121 = vector.broadcast %113 : vector<8x1xf32> to vector<8x32xf32>
    %122 = arith.subf %105, %121 : vector<8x32xf32>
    %cst_75 = arith.constant 9.99999974E-6 : f32
    %123 = vector.broadcast %cst_75 : f32 to vector<8x1xf32>
    %124 = arith.addf %120, %123 : vector<8x1xf32>
    %125 = math.rsqrt %124 : vector<8x1xf32>
    %126 = vector.broadcast %125 : vector<8x1xf32> to vector<8x32xf32>
    %127 = arith.mulf %122, %126 : vector<8x32xf32>
    %128 = vector.broadcast %107 : vector<1x32xf32> to vector<8x32xf32>
    %129 = arith.mulf %127, %128 : vector<8x32xf32>
    %130 = vector.broadcast %109 : vector<1x32xf32> to vector<8x32xf32>
    %131 = arith.addf %129, %130 : vector<8x32xf32>
    %c1 = arith.constant 1 : index
    %c0_76 = arith.constant 0 : index
    %c0_77 = arith.constant 0 : index
    %c0_78 = arith.constant 0 : index
    %132 = vector.load %arg2[%c1, %c0_76, %c0_77, %c0_78] : memref<2x8x8x32xf32, #tpu.memory_space<vmem>>, vector<1x8x8x32xf32>
    %133 = vector.shape_cast %132 : vector<1x8x8x32xf32> to vector<8x8x32xf32>
    %134 = arith.addf %133, %1 : vector<8x8x32xf32>
    %c1_79 = arith.constant 1 : index
    %c0_80 = arith.constant 0 : index
    %c0_81 = arith.constant 0 : index
    %135 = vector.load %arg10[%c1_79, %c0_80, %c0_81] : memref<2x32x32xbf16, #tpu.memory_space<vmem>>, vector<1x32x32xbf16>
    %136 = vector.shape_cast %135 : vector<1x32x32xbf16> to vector<32x32xbf16>
    %137 = arith.truncf %131 : vector<8x32xf32> to vector<8x32xbf16>
    %cst_82 = arith.constant dense<0.000000e+00> : vector<8x32xf32>
    %138 = tpu.matmul %137, %136, %cst_82 {dimension_numbers = #tpu.dot_dimension_numbers<[1], [0], [0], [1], [0, 0, 1, 1], [], []>} : vector<8x32xbf16>, vector<32x32xbf16>, vector<8x32xf32> -> vector<8x32xf32>
    %139 = vector.shape_cast %134 : vector<8x8x32xf32> to vector<64x32xf32>
    %c1_83 = arith.constant 1 : index
    %c0_84 = arith.constant 0 : index
    %c0_85 = arith.constant 0 : index
    %140 = vector.load %arg11[%c1_83, %c0_84, %c0_85] : memref<2x32x64xbf16, #tpu.memory_space<vmem>>, vector<1x32x64xbf16>
    %141 = vector.shape_cast %140 : vector<1x32x64xbf16> to vector<32x64xbf16>
    %142 = arith.truncf %139 : vector<64x32xf32> to vector<64x32xbf16>
    %cst_86 = arith.constant dense<0.000000e+00> : vector<64x64xf32>
    %143 = tpu.matmul %142, %141, %cst_86 {dimension_numbers = #tpu.dot_dimension_numbers<[1], [0], [0], [1], [0, 0, 1, 1], [], []>} : vector<64x32xbf16>, vector<32x64xbf16>, vector<64x64xf32> -> vector<64x64xf32>
    %144 = vector.shape_cast %143 : vector<64x64xf32> to vector<8x8x64xf32>
    %145 = vector.extract_strided_slice %144 {offsets = [0, 0, 0], sizes = [8, 8, 32], strides = [1, 1, 1]} : vector<8x8x64xf32> to vector<8x8x32xf32>
    %146 = vector.extract_strided_slice %144 {offsets = [0, 0, 32], sizes = [8, 8, 32], strides = [1, 1, 1]} : vector<8x8x64xf32> to vector<8x8x32xf32>
    %147 = vector.shape_cast %138 : vector<8x32xf32> to vector<8x1x32xf32>
    %148 = vector.broadcast %147 : vector<8x1x32xf32> to vector<8x8x32xf32>
    %149 = arith.mulf %145, %148 : vector<8x8x32xf32>
    %150 = vector.shape_cast %149 : vector<8x8x32xf32> to vector<64x32xf32>
    %cst_87 = arith.constant dense<0.000000e+00> : vector<64x32xf32>
    %151 = tpu.matmul %150, %2, %cst_87 {dimension_numbers = #tpu.dot_dimension_numbers<[1], [0], [0], [1], [0, 0, 1, 1], [], []>} : vector<64x32xf32>, vector<32x32xf32>, vector<64x32xf32> -> vector<64x32xf32>
    %152 = vector.shape_cast %151 : vector<64x32xf32> to vector<8x8x32xf32>
    %cst_88 = arith.constant 0.353553385 : f32
    %153 = vector.broadcast %cst_88 : f32 to vector<8x8x32xf32>
    %154 = arith.mulf %152, %153 : vector<8x8x32xf32>
    %cst_89 = arith.constant 0.000000e+00 : f32
    %155 = vector.broadcast %cst_89 : f32 to vector<8x8x1xf32>
    %156 = arith.cmpf ogt, %0, %155 : vector<8x8x1xf32>
    %cst_90 = arith.constant -1.000000e+20 : f32
    %157 = vector.shape_cast %156 : vector<8x8x1xi1> to vector<8x8x1xi1>
    %158 = vector.broadcast %157 : vector<8x8x1xi1> to vector<8x8x32xi1>
    %159 = vector.broadcast %cst_90 : f32 to vector<8x8x32xf32>
    %160 = arith.select %158, %154, %159 : vector<8x8x32xi1>, vector<8x8x32xf32>
    %cst_91 = arith.constant dense<0xFF800000> : vector<8x32xf32>
    %161 = vector.multi_reduction <maximumf>, %160, %cst_91 [1] : vector<8x8x32xf32> to vector<8x32xf32>
    %162 = vector.shape_cast %161 : vector<8x32xf32> to vector<8x1x32xf32>
    %163 = vector.broadcast %162 : vector<8x1x32xf32> to vector<8x8x32xf32>
    %164 = arith.subf %160, %163 : vector<8x8x32xf32>
    %165 = math.exp %164 : vector<8x8x32xf32>
    %cst_92 = arith.constant dense<0.000000e+00> : vector<8x32xf32>
    %166 = vector.multi_reduction <add>, %165, %cst_92 [1] : vector<8x8x32xf32> to vector<8x32xf32>
    %167 = vector.shape_cast %166 : vector<8x32xf32> to vector<8x1x32xf32>
    %168 = tpu.reciprocal %167 {approx = true} : vector<8x1x32xf32> -> vector<8x1x32xf32>
    %169 = vector.broadcast %168 : vector<8x1x32xf32> to vector<8x8x32xf32>
    %170 = arith.mulf %165, %169 : vector<8x8x32xf32>
    %171 = arith.mulf %170, %146 : vector<8x8x32xf32>
    %cst_93 = arith.constant dense<0.000000e+00> : vector<8x32xf32>
    %172 = vector.multi_reduction <add>, %171, %cst_93 [1] : vector<8x8x32xf32> to vector<8x32xf32>
    %c1_94 = arith.constant 1 : index
    %c0_95 = arith.constant 0 : index
    %c0_96 = arith.constant 0 : index
    %173 = vector.load %arg12[%c1_94, %c0_95, %c0_96] : memref<2x32x32xbf16, #tpu.memory_space<vmem>>, vector<1x32x32xbf16>
    %174 = vector.shape_cast %173 : vector<1x32x32xbf16> to vector<32x32xbf16>
    %175 = arith.truncf %172 : vector<8x32xf32> to vector<8x32xbf16>
    %cst_97 = arith.constant dense<0.000000e+00> : vector<8x32xf32>
    %176 = tpu.matmul %175, %174, %cst_97 {dimension_numbers = #tpu.dot_dimension_numbers<[1], [0], [0], [1], [0, 0, 1, 1], [], []>} : vector<8x32xbf16>, vector<32x32xbf16>, vector<8x32xf32> -> vector<8x32xf32>
    %c1_98 = arith.constant 1 : index
    %c0_99 = arith.constant 0 : index
    %c0_100 = arith.constant 0 : index
    %177 = vector.load %arg13[%c1_98, %c0_99, %c0_100] : memref<2x1x32xf32, #tpu.memory_space<vmem>>, vector<1x1x32xf32>
    %178 = vector.shape_cast %177 : vector<1x1x32xf32> to vector<1x32xf32>
    %179 = vector.broadcast %178 : vector<1x32xf32> to vector<8x32xf32>
    %180 = arith.addf %176, %179 : vector<8x32xf32>
    %181 = arith.addf %180, %131 : vector<8x32xf32>
    %c1_101 = arith.constant 1 : index
    %c0_102 = arith.constant 0 : index
    %c0_103 = arith.constant 0 : index
    %182 = vector.load %arg16[%c1_101, %c0_102, %c0_103] : memref<2x1x32xf32, #tpu.memory_space<vmem>>, vector<1x1x32xf32>
    %183 = vector.shape_cast %182 : vector<1x1x32xf32> to vector<1x32xf32>
    %c1_104 = arith.constant 1 : index
    %c0_105 = arith.constant 0 : index
    %c0_106 = arith.constant 0 : index
    %184 = vector.load %arg17[%c1_104, %c0_105, %c0_106] : memref<2x1x32xf32, #tpu.memory_space<vmem>>, vector<1x1x32xf32>
    %185 = vector.shape_cast %184 : vector<1x1x32xf32> to vector<1x32xf32>
    %cst_107 = arith.constant dense<0.000000e+00> : vector<8xf32>
    %186 = vector.multi_reduction <add>, %181, %cst_107 [1] : vector<8x32xf32> to vector<8xf32>
    %187 = vector.shape_cast %186 : vector<8xf32> to vector<8x1xf32>
    %cst_108 = arith.constant 3.200000e+01 : f32
    %188 = vector.broadcast %cst_108 : f32 to vector<8x1xf32>
    %189 = arith.divf %187, %188 : vector<8x1xf32>
    %190 = vector.broadcast %189 : vector<8x1xf32> to vector<8x32xf32>
    %191 = arith.subf %181, %190 : vector<8x32xf32>
    %192 = arith.mulf %191, %191 : vector<8x32xf32>
    %cst_109 = arith.constant dense<0.000000e+00> : vector<8xf32>
    %193 = vector.multi_reduction <add>, %192, %cst_109 [1] : vector<8x32xf32> to vector<8xf32>
    %194 = vector.shape_cast %193 : vector<8xf32> to vector<8x1xf32>
    %cst_110 = arith.constant 3.200000e+01 : f32
    %195 = vector.broadcast %cst_110 : f32 to vector<8x1xf32>
    %196 = arith.divf %194, %195 : vector<8x1xf32>
    %197 = vector.broadcast %189 : vector<8x1xf32> to vector<8x32xf32>
    %198 = arith.subf %181, %197 : vector<8x32xf32>
    %cst_111 = arith.constant 9.99999974E-6 : f32
    %199 = vector.broadcast %cst_111 : f32 to vector<8x1xf32>
    %200 = arith.addf %196, %199 : vector<8x1xf32>
    %201 = math.rsqrt %200 : vector<8x1xf32>
    %202 = vector.broadcast %201 : vector<8x1xf32> to vector<8x32xf32>
    %203 = arith.mulf %198, %202 : vector<8x32xf32>
    %204 = vector.broadcast %183 : vector<1x32xf32> to vector<8x32xf32>
    %205 = arith.mulf %203, %204 : vector<8x32xf32>
    %206 = vector.broadcast %185 : vector<1x32xf32> to vector<8x32xf32>
    %207 = arith.addf %205, %206 : vector<8x32xf32>
    %c1_112 = arith.constant 1 : index
    %c0_113 = arith.constant 0 : index
    %c0_114 = arith.constant 0 : index
    %208 = vector.load %arg14[%c1_112, %c0_113, %c0_114] : memref<2x32x32xbf16, #tpu.memory_space<vmem>>, vector<1x32x32xbf16>
    %209 = vector.shape_cast %208 : vector<1x32x32xbf16> to vector<32x32xbf16>
    %210 = arith.truncf %207 : vector<8x32xf32> to vector<8x32xbf16>
    %cst_115 = arith.constant dense<0.000000e+00> : vector<8x32xf32>
    %211 = tpu.matmul %210, %209, %cst_115 {dimension_numbers = #tpu.dot_dimension_numbers<[1], [0], [0], [1], [0, 0, 1, 1], [], []>} : vector<8x32xbf16>, vector<32x32xbf16>, vector<8x32xf32> -> vector<8x32xf32>
    %c1_116 = arith.constant 1 : index
    %c0_117 = arith.constant 0 : index
    %c0_118 = arith.constant 0 : index
    %212 = vector.load %arg15[%c1_116, %c0_117, %c0_118] : memref<2x1x32xf32, #tpu.memory_space<vmem>>, vector<1x1x32xf32>
    %213 = vector.shape_cast %212 : vector<1x1x32xf32> to vector<1x32xf32>
    %214 = vector.broadcast %213 : vector<1x32xf32> to vector<8x32xf32>
    %215 = arith.addf %211, %214 : vector<8x32xf32>
    %cst_119 = arith.constant 0.000000e+00 : f32
    %216 = vector.broadcast %cst_119 : f32 to vector<8x32xf32>
    %217 = arith.maximumf %215, %216 : vector<8x32xf32>
    %218 = arith.addf %217, %207 : vector<8x32xf32>
    %c1_120 = arith.constant 1 : index
    %c0_121 = arith.constant 0 : index
    %c0_122 = arith.constant 0 : index
    %219 = vector.load %arg18[%c1_120, %c0_121, %c0_122] : memref<2x1x32xf32, #tpu.memory_space<vmem>>, vector<1x1x32xf32>
    %220 = vector.shape_cast %219 : vector<1x1x32xf32> to vector<1x32xf32>
    %c1_123 = arith.constant 1 : index
    %c0_124 = arith.constant 0 : index
    %c0_125 = arith.constant 0 : index
    %221 = vector.load %arg19[%c1_123, %c0_124, %c0_125] : memref<2x1x32xf32, #tpu.memory_space<vmem>>, vector<1x1x32xf32>
    %222 = vector.shape_cast %221 : vector<1x1x32xf32> to vector<1x32xf32>
    %cst_126 = arith.constant dense<0.000000e+00> : vector<8xf32>
    %223 = vector.multi_reduction <add>, %218, %cst_126 [1] : vector<8x32xf32> to vector<8xf32>
    %224 = vector.shape_cast %223 : vector<8xf32> to vector<8x1xf32>
    %cst_127 = arith.constant 3.200000e+01 : f32
    %225 = vector.broadcast %cst_127 : f32 to vector<8x1xf32>
    %226 = arith.divf %224, %225 : vector<8x1xf32>
    %227 = vector.broadcast %226 : vector<8x1xf32> to vector<8x32xf32>
    %228 = arith.subf %218, %227 : vector<8x32xf32>
    %229 = arith.mulf %228, %228 : vector<8x32xf32>
    %cst_128 = arith.constant dense<0.000000e+00> : vector<8xf32>
    %230 = vector.multi_reduction <add>, %229, %cst_128 [1] : vector<8x32xf32> to vector<8xf32>
    %231 = vector.shape_cast %230 : vector<8xf32> to vector<8x1xf32>
    %cst_129 = arith.constant 3.200000e+01 : f32
    %232 = vector.broadcast %cst_129 : f32 to vector<8x1xf32>
    %233 = arith.divf %231, %232 : vector<8x1xf32>
    %234 = vector.broadcast %226 : vector<8x1xf32> to vector<8x32xf32>
    %235 = arith.subf %218, %234 : vector<8x32xf32>
    %cst_130 = arith.constant 9.99999974E-6 : f32
    %236 = vector.broadcast %cst_130 : f32 to vector<8x1xf32>
    %237 = arith.addf %233, %236 : vector<8x1xf32>
    %238 = math.rsqrt %237 : vector<8x1xf32>
    %239 = vector.broadcast %238 : vector<8x1xf32> to vector<8x32xf32>
    %240 = arith.mulf %235, %239 : vector<8x32xf32>
    %241 = vector.broadcast %220 : vector<1x32xf32> to vector<8x32xf32>
    %242 = arith.mulf %240, %241 : vector<8x32xf32>
    %243 = vector.broadcast %222 : vector<1x32xf32> to vector<8x32xf32>
    %244 = arith.addf %242, %243 : vector<8x32xf32>
    %c0_131 = arith.constant 0 : index
    %c0_132 = arith.constant 0 : index
    %245 = vector.load %arg20[%c0_131, %c0_132] : memref<32x64xbf16, #tpu.memory_space<vmem>>, vector<32x64xbf16>
    %246 = arith.truncf %244 : vector<8x32xf32> to vector<8x32xbf16>
    %cst_133 = arith.constant dense<0.000000e+00> : vector<8x64xf32>
    %247 = tpu.matmul %246, %245, %cst_133 {dimension_numbers = #tpu.dot_dimension_numbers<[1], [0], [0], [1], [0, 0, 1, 1], [], []>} : vector<8x32xbf16>, vector<32x64xbf16>, vector<8x64xf32> -> vector<8x64xf32>
    %c0_134 = arith.constant 0 : index
    %c0_135 = arith.constant 0 : index
    %248 = vector.load %arg21[%c0_134, %c0_135] : memref<1x64xf32, #tpu.memory_space<vmem>>, vector<1x64xf32>
    %249 = vector.broadcast %248 : vector<1x64xf32> to vector<8x64xf32>
    %250 = arith.addf %247, %249 : vector<8x64xf32>
    %cst_136 = arith.constant 0.000000e+00 : f32
    %251 = vector.broadcast %cst_136 : f32 to vector<8x64xf32>
    %252 = arith.maximumf %250, %251 : vector<8x64xf32>
    %c0_137 = arith.constant 0 : index
    %c0_138 = arith.constant 0 : index
    %253 = vector.load %arg22[%c0_137, %c0_138] : memref<64x64xbf16, #tpu.memory_space<vmem>>, vector<64x64xbf16>
    %254 = arith.truncf %252 : vector<8x64xf32> to vector<8x64xbf16>
    %cst_139 = arith.constant dense<0.000000e+00> : vector<8x64xf32>
    %255 = tpu.matmul %254, %253, %cst_139 {dimension_numbers = #tpu.dot_dimension_numbers<[1], [0], [0], [1], [0, 0, 1, 1], [], []>} : vector<8x64xbf16>, vector<64x64xbf16>, vector<8x64xf32> -> vector<8x64xf32>
    %c0_140 = arith.constant 0 : index
    %c0_141 = arith.constant 0 : index
    %256 = vector.load %arg23[%c0_140, %c0_141] : memref<1x64xf32, #tpu.memory_space<vmem>>, vector<1x64xf32>
    %257 = vector.broadcast %256 : vector<1x64xf32> to vector<8x64xf32>
    %258 = arith.addf %255, %257 : vector<8x64xf32>
    %259 = tpu.concatenate %258, %18, %131 in 1 : vector<8x64xf32>, vector<8x32xf32>, vector<8x32xf32> -> vector<8x128xf32>
    %c0_142 = arith.constant 0 : index
    %c0_143 = arith.constant 0 : index
    %260 = vector.load %arg24[%c0_142, %c0_143] : memref<8x128xf32, #tpu.memory_space<vmem>>, vector<8x128xf32>
    tpu.vector_store %arg24[%c0_142, %c0_143], %259 {strides = array<i32>} : memref<8x128xf32, #tpu.memory_space<vmem>>, vector<8x128xf32>,
    return
  }
  func.func @transform_0(%arg0: i32) -> (i32, i32) {
    %c0_i32 = arith.constant 0 : i32
    %c0_i32_0 = arith.constant 0 : i32
    return %arg0, %c0_i32 : i32, i32
  }
  func.func @transform_1(%arg0: i32) -> (i32, i32, i32, i32) {
    %c0_i32 = arith.constant 0 : i32
    %c0_i32_0 = arith.constant 0 : i32
    %c0_i32_1 = arith.constant 0 : i32
    %c0_i32_2 = arith.constant 0 : i32
    return %c0_i32, %arg0, %c0_i32_0, %c0_i32_1 : i32, i32, i32, i32
  }
  func.func @transform_2(%arg0: i32) -> (i32, i32, i32) {
    %c0_i32 = arith.constant 0 : i32
    %c0_i32_0 = arith.constant 0 : i32
    %c0_i32_1 = arith.constant 0 : i32
    return %arg0, %c0_i32, %c0_i32_0 : i32, i32, i32
  }
  func.func @transform_3(%arg0: i32) -> (i32, i32, i32) {
    %c0_i32 = arith.constant 0 : i32
    %c0_i32_0 = arith.constant 0 : i32
    %c0_i32_1 = arith.constant 0 : i32
    return %arg0, %c0_i32, %c0_i32_0 : i32, i32, i32
  }
  func.func @transform_4(%arg0: i32) -> (i32, i32) {
    %c0_i32 = arith.constant 0 : i32
    %c0_i32_0 = arith.constant 0 : i32
    %c0_i32_1 = arith.constant 0 : i32
    return %c0_i32, %c0_i32_0 : i32, i32
  }
  func.func @transform_5(%arg0: i32) -> (i32, i32) {
    %c0_i32 = arith.constant 0 : i32
    %c0_i32_0 = arith.constant 0 : i32
    %c0_i32_1 = arith.constant 0 : i32
    return %c0_i32, %c0_i32_0 : i32, i32
  }
  func.func @transform_6(%arg0: i32) -> (i32, i32) {
    %c0_i32 = arith.constant 0 : i32
    %c0_i32_0 = arith.constant 0 : i32
    %c0_i32_1 = arith.constant 0 : i32
    return %c0_i32, %c0_i32_0 : i32, i32
  }
  func.func @transform_7(%arg0: i32) -> (i32, i32) {
    %c0_i32 = arith.constant 0 : i32
    %c0_i32_0 = arith.constant 0 : i32
    %c0_i32_1 = arith.constant 0 : i32
    return %c0_i32, %c0_i32_0 : i32, i32
  }
  func.func @transform_8(%arg0: i32) -> (i32, i32) {
    %c0_i32 = arith.constant 0 : i32
    %c0_i32_0 = arith.constant 0 : i32
    %c0_i32_1 = arith.constant 0 : i32
    return %c0_i32, %c0_i32_0 : i32, i32
  }
  func.func @transform_9(%arg0: i32) -> (i32, i32, i32) {
    %c0_i32 = arith.constant 0 : i32
    %c0_i32_0 = arith.constant 0 : i32
    %c0_i32_1 = arith.constant 0 : i32
    %c0_i32_2 = arith.constant 0 : i32
    return %c0_i32, %c0_i32_0, %c0_i32_1 : i32, i32, i32
  }
  func.func @transform_10(%arg0: i32) -> (i32, i32, i32) {
    %c0_i32 = arith.constant 0 : i32
    %c0_i32_0 = arith.constant 0 : i32
    %c0_i32_1 = arith.constant 0 : i32
    %c0_i32_2 = arith.constant 0 : i32
    return %c0_i32, %c0_i32_0, %c0_i32_1 : i32, i32, i32
  }
  func.func @transform_11(%arg0: i32) -> (i32, i32, i32) {
    %c0_i32 = arith.constant 0 : i32
    %c0_i32_0 = arith.constant 0 : i32
    %c0_i32_1 = arith.constant 0 : i32
    %c0_i32_2 = arith.constant 0 : i32
    return %c0_i32, %c0_i32_0, %c0_i32_1 : i32, i32, i32
  }
  func.func @transform_12(%arg0: i32) -> (i32, i32, i32) {
    %c0_i32 = arith.constant 0 : i32
    %c0_i32_0 = arith.constant 0 : i32
    %c0_i32_1 = arith.constant 0 : i32
    %c0_i32_2 = arith.constant 0 : i32
    return %c0_i32, %c0_i32_0, %c0_i32_1 : i32, i32, i32
  }
  func.func @transform_13(%arg0: i32) -> (i32, i32, i32) {
    %c0_i32 = arith.constant 0 : i32
    %c0_i32_0 = arith.constant 0 : i32
    %c0_i32_1 = arith.constant 0 : i32
    %c0_i32_2 = arith.constant 0 : i32
    return %c0_i32, %c0_i32_0, %c0_i32_1 : i32, i32, i32
  }
  func.func @transform_14(%arg0: i32) -> (i32, i32, i32) {
    %c0_i32 = arith.constant 0 : i32
    %c0_i32_0 = arith.constant 0 : i32
    %c0_i32_1 = arith.constant 0 : i32
    %c0_i32_2 = arith.constant 0 : i32
    return %c0_i32, %c0_i32_0, %c0_i32_1 : i32, i32, i32
  }
  func.func @transform_15(%arg0: i32) -> (i32, i32, i32) {
    %c0_i32 = arith.constant 0 : i32
    %c0_i32_0 = arith.constant 0 : i32
    %c0_i32_1 = arith.constant 0 : i32
    %c0_i32_2 = arith.constant 0 : i32
    return %c0_i32, %c0_i32_0, %c0_i32_1 : i32, i32, i32
  }
  func.func @transform_16(%arg0: i32) -> (i32, i32, i32) {
    %c0_i32 = arith.constant 0 : i32
    %c0_i32_0 = arith.constant 0 : i32
    %c0_i32_1 = arith.constant 0 : i32
    %c0_i32_2 = arith.constant 0 : i32
    return %c0_i32, %c0_i32_0, %c0_i32_1 : i32, i32, i32
  }
  func.func @transform_17(%arg0: i32) -> (i32, i32, i32) {
    %c0_i32 = arith.constant 0 : i32
    %c0_i32_0 = arith.constant 0 : i32
    %c0_i32_1 = arith.constant 0 : i32
    %c0_i32_2 = arith.constant 0 : i32
    return %c0_i32, %c0_i32_0, %c0_i32_1 : i32, i32, i32
  }
  func.func @transform_18(%arg0: i32) -> (i32, i32, i32) {
    %c0_i32 = arith.constant 0 : i32
    %c0_i32_0 = arith.constant 0 : i32
    %c0_i32_1 = arith.constant 0 : i32
    %c0_i32_2 = arith.constant 0 : i32
    return %c0_i32, %c0_i32_0, %c0_i32_1 : i32, i32, i32
  }
  func.func @transform_19(%arg0: i32) -> (i32, i32) {
    %c0_i32 = arith.constant 0 : i32
    %c0_i32_0 = arith.constant 0 : i32
    %c0_i32_1 = arith.constant 0 : i32
    return %c0_i32, %c0_i32_0 : i32, i32
  }
  func.func @transform_20(%arg0: i32) -> (i32, i32) {
    %c0_i32 = arith.constant 0 : i32
    %c0_i32_0 = arith.constant 0 : i32
    %c0_i32_1 = arith.constant 0 : i32
    return %c0_i32, %c0_i32_0 : i32, i32
  }
  func.func @transform_21(%arg0: i32) -> (i32, i32) {
    %c0_i32 = arith.constant 0 : i32
    %c0_i32_0 = arith.constant 0 : i32
    %c0_i32_1 = arith.constant 0 : i32
    return %c0_i32, %c0_i32_0 : i32, i32
  }
  func.func @transform_22(%arg0: i32) -> (i32, i32) {
    %c0_i32 = arith.constant 0 : i32
    %c0_i32_0 = arith.constant 0 : i32
    %c0_i32_1 = arith.constant 0 : i32
    return %c0_i32, %c0_i32_0 : i32, i32
  }
  func.func @transform_23(%arg0: i32) -> (i32, i32) {
    %c0_i32 = arith.constant 0 : i32
    %c0_i32_0 = arith.constant 0 : i32
    return %arg0, %c0_i32 : i32, i32
  }
}

</mosaic_0001>

<llo_original>
// kernel: run.4
$region0: #{run.4}
  #allocation0 [shape = 'u32[]', space=smem, size = 0x4, offset = 0x4, fixed_abs, tag = 'smem constant byte address 0x4 - core index']
  #allocation1 [shape = 'u32[144,128]{1,0:T(1,128)}', space=vmem, size = 0x12000, scoped, tag = 'internal scratch']
  %s0 = inlined_call_operand.vmem [shape: bf16[128,192], index: 0, kind: input, shape index: {}]
  %s1 = inlined_call_operand.vmem [shape: bf16[192,128], index: 1, kind: input, shape index: {}]
  %s2 = inlined_call_operand.vmem [shape: f32[1,128], index: 2, kind: input, shape index: {}]
  %s3 = inlined_call_operand.vmem [shape: bf16[128,128], index: 3, kind: output, shape index: {}]
  %s4 = sld [smem:[#allocation0]]
  $region22: #{run.4} parent=0
    _
  %s6 = ssub.s32 1, %s4
  %s7 = scalar_select 0, %s6, %s4
  // Predicated region
  $region2: #{run.4} parent=0 // pred_check
    _
  $region3: #{run.4} parent=0 // pred_check_branch
    %9 = sbr.rel (0) target = $region5
  $region4: #{run.4} parent=0 // pred_region
    _
  $region5: #{run.4} parent=0 // pred_fallthru
    _
  // Predicated region
  $region6: #{run.4} parent=0 // pred_check
    _
  $region7: #{run.4} parent=0 // pred_check_branch
    %11 = sbr.rel (0) target = $region9
  $region8: #{run.4} parent=0 // pred_region
    _
  $region9: #{run.4} parent=0 // pred_fallthru
    _
  // Predicated region
  $region10: #{run.4} parent=0 // pred_check
    _
  $region11: #{run.4} parent=0 // pred_check_branch
    %13 = sbr.rel (0) target = $region13
  $region12: #{run.4} parent=0 // pred_region
    _
  $region13: #{run.4} parent=0 // pred_fallthru
    _
  %v15 = vld [vmem:[%s0] sm:$0xff]
  %v16 = vld [vmem:[%s0 + $0x8] sm:$0xff]
  %v17 = vld [vmem:[%s0 + $0x10] sm:$0xff]
  %v18 = vld [vmem:[%s0 + $0x18] sm:$0xff]
  %v19 = vld [vmem:[%s0 + $0x20] sm:$0xff]
  %v20 = vld [vmem:[%s0 + $0x28] sm:$0xff]
  %v21 = vld [vmem:[%s0 + $0x30] sm:$0xff]
  %v22 = vld [vmem:[%s0 + $0x38] sm:$0xff]
  %v23 = vld [vmem:[%s0 + $0x40] sm:$0xff]
  %v24 = vld [vmem:[%s0 + $0x48] sm:$0xff]
  %v25 = vld [vmem:[%s0 + $0x50] sm:$0xff]
  %v26 = vld [vmem:[%s0 + $0x58] sm:$0xff]
  %v27 = vld [vmem:[%s0 + $0x60] sm:$0xff]
  %v28 = vld [vmem:[%s0 + $0x68] sm:$0xff]
  %v29 = vld [vmem:[%s0 + $0x70] sm:$0xff]
  %v30 = vld [vmem:[%s0 + $0x78] sm:$0xff]
  %v31 = vld [vmem:[%s1] sm:$0xf]
  %v32 = vld [vmem:[%s1 + $0x4] sm:$0xf]
  %v33 = vld [vmem:[%s1 + $0x8] sm:$0xf]
  %v34 = vld [vmem:[%s1 + $0xc] sm:$0xf]
  %v35 = vld [vmem:[%s1 + $0x10] sm:$0xf]
  %v36 = vld [vmem:[%s1 + $0x14] sm:$0xf]
  %v37 = vld [vmem:[%s1 + $0x18] sm:$0xf]
  %v38 = vld [vmem:[%s1 + $0x1c] sm:$0xf]
  %v39 = vld [vmem:[%s1 + $0x20] sm:$0xf]
  %v40 = vld [vmem:[%s1 + $0x24] sm:$0xf]
  %v41 = vld [vmem:[%s1 + $0x28] sm:$0xf]
  %v42 = vld [vmem:[%s1 + $0x2c] sm:$0xf]
  %v43 = vld [vmem:[%s1 + $0x30] sm:$0xf]
  %v44 = vld [vmem:[%s1 + $0x34] sm:$0xf]
  %v45 = vld [vmem:[%s1 + $0x38] sm:$0xf]
  %v46 = vld [vmem:[%s1 + $0x3c] sm:$0xf]
  %v47 = vld [vmem:[%s1 + $0x40] sm:$0xf]
  %v48 = vld [vmem:[%s1 + $0x44] sm:$0xf]
  %v49 = vld [vmem:[%s1 + $0x48] sm:$0xf]
  %v50 = vld [vmem:[%s1 + $0x4c] sm:$0xf]
  %v51 = vld [vmem:[%s1 + $0x50] sm:$0xf]
  %v52 = vld [vmem:[%s1 + $0x54] sm:$0xf]
  %v53 = vld [vmem:[%s1 + $0x58] sm:$0xf]
  %v54 = vld [vmem:[%s1 + $0x5c] sm:$0xf]
  %v55 = vld [vmem:[%s2] sm:$0x1]
  %v57 = vlaneseq
  %v58 = vshrl.u32 %v57, 7
  %v59 = vsub.s32 0, %v58
  %v60 = vrot.slane %v55, %v59
  %v78 = vunpack.c.l.b16 %v15
  %v79 = vunpack.c.h.b16 %v15
  %v80 = vunpack.c.l.b16 %v16
  %v81 = vunpack.c.h.b16 %v16
  %v82 = vunpack.c.l.b16 %v17
  %v83 = vunpack.c.h.b16 %v17
  %v84 = vunpack.c.l.b16 %v18
  %v85 = vunpack.c.h.b16 %v18
  %v86 = vunpack.c.l.b16 %v19
  %v87 = vunpack.c.h.b16 %v19
  %v88 = vunpack.c.l.b16 %v20
  %v89 = vunpack.c.h.b16 %v20
  %v90 = vunpack.c.l.b16 %v21
  %v91 = vunpack.c.h.b16 %v21
  %v92 = vunpack.c.l.b16 %v22
  %v93 = vunpack.c.h.b16 %v22
  %v94 = vunpack.c.l.b16 %v23
  %v95 = vunpack.c.h.b16 %v23
  %v96 = vunpack.c.l.b16 %v24
  %v97 = vunpack.c.h.b16 %v24
  %v98 = vunpack.c.l.b16 %v25
  %v99 = vunpack.c.h.b16 %v25
  %v100 = vunpack.c.l.b16 %v26
  %v101 = vunpack.c.h.b16 %v26
  %v102 = vunpack.c.l.b16 %v27
  %v103 = vunpack.c.h.b16 %v27
  %v104 = vunpack.c.l.b16 %v28
  %v105 = vunpack.c.h.b16 %v28
  %v106 = vunpack.c.l.b16 %v29
  %v107 = vunpack.c.h.b16 %v29
  %v108 = vunpack.c.l.b16 %v30
  %v109 = vunpack.c.h.b16 %v30
  %v110 = vpack.c.b16 %v80, %v78
  %v111 = vpack.c.b16 %v81, %v79
  %v112 = vpack.c.b16 %v84, %v82
  %v113 = vpack.c.b16 %v85, %v83
  %v114 = vpack.c.b16 %v88, %v86
  %v115 = vpack.c.b16 %v89, %v87
  %v116 = vpack.c.b16 %v92, %v90
  %v117 = vpack.c.b16 %v93, %v91
  %v118 = vpack.c.b16 %v96, %v94
  %v119 = vpack.c.b16 %v97, %v95
  %v120 = vpack.c.b16 %v100, %v98
  %v121 = vpack.c.b16 %v101, %v99
  %v122 = vpack.c.b16 %v104, %v102
  %v123 = vpack.c.b16 %v105, %v103
  %v124 = vpack.c.b16 %v108, %v106
  %v125 = vpack.c.b16 %v109, %v107
  %v158 = vunpack.c.l.b16 %v31
  %v159 = vunpack.c.l.b16 %v32
  %v160 = vunpack.c.l.b16 %v33
  %v161 = vunpack.c.l.b16 %v34
  %v162 = vunpack.c.l.b16 %v35
  %v163 = vunpack.c.l.b16 %v36
  %v164 = vunpack.c.l.b16 %v37
  %v165 = vunpack.c.l.b16 %v38
  %v166 = vunpack.c.l.b16 %v39
  %v167 = vunpack.c.l.b16 %v40
  %v168 = vunpack.c.l.b16 %v41
  %v169 = vunpack.c.l.b16 %v42
  %v170 = vunpack.c.l.b16 %v43
  %v171 = vunpack.c.l.b16 %v44
  %v172 = vunpack.c.l.b16 %v45
  %v173 = vunpack.c.l.b16 %v46
  %v174 = vunpack.c.l.b16 %v47
  %v175 = vunpack.c.l.b16 %v48
  %v176 = vunpack.c.l.b16 %v49
  %v177 = vunpack.c.l.b16 %v50
  %v178 = vunpack.c.l.b16 %v51
  %v179 = vunpack.c.l.b16 %v52
  %v180 = vunpack.c.l.b16 %v53
  %v181 = vunpack.c.l.b16 %v54
  %v182 = vpack.c.b16 %v159, %v158
  %v183 = vpack.c.b16 %v161, %v160
  %v184 = vpack.c.b16 %v163, %v162
  %v185 = vpack.c.b16 %v165, %v164
  %v186 = vpack.c.b16 %v167, %v166
  %v187 = vpack.c.b16 %v169, %v168
  %v188 = vpack.c.b16 %v171, %v170
  %v189 = vpack.c.b16 %v173, %v172
  %v190 = vpack.c.b16 %v175, %v174
  %v191 = vpack.c.b16 %v177, %v176
  %v192 = vpack.c.b16 %v179, %v178
  %v193 = vpack.c.b16 %v181, %v180
  %vm206 = vcmask 523264
  %v208 = vsel %vm206, %v111, 0
  %v211 = vsel %vm206, %v113, 0
  %v214 = vsel %vm206, %v115, 0
  %v217 = vsel %vm206, %v117, 0
  %v220 = vsel %vm206, %v119, 0
  %v223 = vsel %vm206, %v121, 0
  %v226 = vsel %vm206, %v123, 0
  %v229 = vsel %vm206, %v125, 0
  %231 = vmatprep.subr.bf16.mxu0 0
  %232 = vmatpush1.bf16.msra.mxu0 %v189
  %233 = vmatprep.subr.bf16.mxu0 0
  %234 = vmatpush1.bf16.msra.mxu0 %v188
  %235 = vmatprep.subr.bf16.mxu0 0
  %236 = vmatpush1.bf16.msra.mxu0 %v187
  %237 = vmatprep.subr.bf16.mxu0 0
  %238 = vmatpush1.bf16.msra.mxu0 %v186
  %239 = vmatprep.subr.bf16.mxu0 0
  %240 = vmatpush1.bf16.msra.mxu0 %v185
  %241 = vmatprep.subr.bf16.mxu0 0
  %242 = vmatpush1.bf16.msra.mxu0 %v184
  %243 = vmatprep.subr.bf16.mxu0 0
  %244 = vmatpush1.bf16.msra.mxu0 %v183
  %245 = vmatprep.subr.bf16.mxu0 0
  %246 = vmatpush1.bf16.msra.mxu0 %v182
  %247 = vmatprep.subr.bf16.mxu0 0
  %248 = vmatpush2.bf16.msra.mxu0 0
  %249 = vmatprep.subr.bf16.mxu0 0
  %250 = vmatpush2.bf16.msra.mxu0 0
  %251 = vmatprep.subr.bf16.mxu0 0
  %252 = vmatpush2.bf16.msra.mxu0 0
  %253 = vmatprep.subr.bf16.mxu0 0
  %254 = vmatpush2.bf16.msra.mxu0 0
  %255 = vmatprep.subr.bf16.mxu0 0
  %256 = vmatpush2.bf16.msra.mxu0 %v193
  %257 = vmatprep.subr.bf16.mxu0 0
  %258 = vmatpush2.bf16.msra.mxu0 %v192
  %259 = vmatprep.subr.bf16.mxu0 0
  %260 = vmatpush2.bf16.msra.mxu0 %v191
  %261 = vmatprep.subr.bf16.mxu0 0
  %262 = vmatpush2.bf16.msra.mxu0 %v190
  %263 = vmatprep.mubr.bf16.mxu0 %v208
  %264 = vmatmul.mubr.bf16.gmra.mxu0 %v110
  %v265 = vpop.f32.mrf.mxu0
  %v266 = vadd.f32 %v60, %v265
  %v267 = vpop.f32.mrf.mxu0
  %v268 = vpop.f32.mrf.mxu0
  %v269 = vadd.f32 %v60, %v268
  %v270 = vpop.f32.mrf.mxu0
  %271 = vmatprep.mubr.bf16.mxu0 %v211
  %272 = vmatmul.mubr.bf16.gmra.mxu0 %v112
  %v273 = vpop.f32.mrf.mxu0
  %v274 = vadd.f32 %v60, %v273
  %v275 = vpop.f32.mrf.mxu0
  %v276 = vpop.f32.mrf.mxu0
  %v277 = vadd.f32 %v60, %v276
  %v278 = vpop.f32.mrf.mxu0
  %279 = vmatprep.mubr.bf16.mxu0 %v214
  %280 = vmatmul.mubr.bf16.gmra.mxu0 %v114
  %v281 = vpop.f32.mrf.mxu0
  %v282 = vadd.f32 %v60, %v281
  %v283 = vpop.f32.mrf.mxu0
  %v284 = vpop.f32.mrf.mxu0
  %v285 = vadd.f32 %v60, %v284
  %v286 = vpop.f32.mrf.mxu0
  %287 = vmatprep.mubr.bf16.mxu0 %v217
  %288 = vmatmul.mubr.bf16.gmra.mxu0 %v116
  %v289 = vpop.f32.mrf.mxu0
  %v290 = vadd.f32 %v60, %v289
  %v291 = vpop.f32.mrf.mxu0
  %v292 = vpop.f32.mrf.mxu0
  %v293 = vadd.f32 %v60, %v292
  %v294 = vpop.f32.mrf.mxu0
  %295 = vmatprep.mubr.bf16.mxu0 %v220
  %296 = vmatmul.mubr.bf16.gmra.mxu0 %v118
  %v297 = vpop.f32.mrf.mxu0
  %v298 = vadd.f32 %v60, %v297
  %v299 = vpop.f32.mrf.mxu0
  %v300 = vpop.f32.mrf.mxu0
  %v301 = vadd.f32 %v60, %v300
  %v302 = vpop.f32.mrf.mxu0
  %303 = vmatprep.mubr.bf16.mxu0 %v223
  %304 = vmatmul.mubr.bf16.gmra.mxu0 %v120
  %v305 = vpop.f32.mrf.mxu0
  %v306 = vadd.f32 %v60, %v305
  %v307 = vpop.f32.mrf.mxu0
  %v308 = vpop.f32.mrf.mxu0
  %v309 = vadd.f32 %v60, %v308
  %v310 = vpop.f32.mrf.mxu0
  %311 = vmatprep.mubr.bf16.mxu0 %v226
  %312 = vmatmul.mubr.bf16.gmra.mxu0 %v122
  %v313 = vpop.f32.mrf.mxu0
  %v314 = vadd.f32 %v60, %v313
  %v315 = vpop.f32.mrf.mxu0
  %v316 = vpop.f32.mrf.mxu0
  %v317 = vadd.f32 %v60, %v316
  %v318 = vpop.f32.mrf.mxu0
  %319 = vmatprep.mubr.bf16.mxu0 %v229
  %320 = vmatmul.mubr.bf16.gmra.mxu0 %v124
  %v321 = vpop.f32.mrf.mxu0
  %v322 = vadd.f32 %v60, %v321
  %v323 = vpop.f32.mrf.mxu0
  %v324 = vpop.f32.mrf.mxu0
  %v325 = vadd.f32 %v60, %v324
  %v326 = vpop.f32.mrf.mxu0
  %327 = vdwg.mxu0
  %v328 = vmax.f32 %v266, 0.0
  %v329 = vmax.f32 %v269, 0.0
  %v330 = vmax.f32 %v274, 0.0
  %v331 = vmax.f32 %v277, 0.0
  %v332 = vmax.f32 %v282, 0.0
  %v333 = vmax.f32 %v285, 0.0
  %v334 = vmax.f32 %v290, 0.0
  %v335 = vmax.f32 %v293, 0.0
  %v336 = vmax.f32 %v298, 0.0
  %v337 = vmax.f32 %v301, 0.0
  %v338 = vmax.f32 %v306, 0.0
  %v339 = vmax.f32 %v309, 0.0
  %v340 = vmax.f32 %v314, 0.0
  %v341 = vmax.f32 %v317, 0.0
  %v342 = vmax.f32 %v322, 0.0
  %v343 = vmax.f32 %v325, 0.0
  %v344 = vpack.c.bf16 %v329, %v328
  %v345 = vpack.c.bf16 %v331, %v330
  %v346 = vpack.c.bf16 %v333, %v332
  %v347 = vpack.c.bf16 %v335, %v334
  %v348 = vpack.c.bf16 %v337, %v336
  %v349 = vpack.c.bf16 %v339, %v338
  %v350 = vpack.c.bf16 %v341, %v340
  %v351 = vpack.c.bf16 %v343, %v342
  %v360 = vunpack.c.l.b16 %v344
  %v361 = vunpack.c.h.b16 %v344
  %v362 = vunpack.c.l.b16 %v345
  %v363 = vunpack.c.h.b16 %v345
  %v364 = vunpack.c.l.b16 %v346
  %v365 = vunpack.c.h.b16 %v346
  %v366 = vunpack.c.l.b16 %v347
  %v367 = vunpack.c.h.b16 %v347
  %v368 = vunpack.c.l.b16 %v348
  %v369 = vunpack.c.h.b16 %v348
  %v370 = vunpack.c.l.b16 %v349
  %v371 = vunpack.c.h.b16 %v349
  %v372 = vunpack.c.l.b16 %v350
  %v373 = vunpack.c.h.b16 %v350
  %v374 = vunpack.c.l.b16 %v351
  %v375 = vunpack.c.h.b16 %v351
  %v376 = vpack.c.b16 %v360, %v360
  %v377 = vpack.c.b16 %v361, %v361
  %v378 = vpack.c.b16 %v362, %v362
  %v379 = vpack.c.b16 %v363, %v363
  %v380 = vpack.c.b16 %v364, %v364
  %v381 = vpack.c.b16 %v365, %v365
  %v382 = vpack.c.b16 %v366, %v366
  %v383 = vpack.c.b16 %v367, %v367
  %v384 = vpack.c.b16 %v368, %v368
  %v385 = vpack.c.b16 %v369, %v369
  %v386 = vpack.c.b16 %v370, %v370
  %v387 = vpack.c.b16 %v371, %v371
  %v388 = vpack.c.b16 %v372, %v372
  %v389 = vpack.c.b16 %v373, %v373
  %v390 = vpack.c.b16 %v374, %v374
  %v391 = vpack.c.b16 %v375, %v375
  %408 = vst [vmem:[%s3] sm:$0xf] %v376
  %409 = vst [vmem:[%s3 + $0x4] sm:$0xf] %v377
  %410 = vst [vmem:[%s3 + $0x8] sm:$0xf] %v378
  %411 = vst [vmem:[%s3 + $0xc] sm:$0xf] %v379
  %412 = vst [vmem:[%s3 + $0x10] sm:$0xf] %v380
  %413 = vst [vmem:[%s3 + $0x14] sm:$0xf] %v381
  %414 = vst [vmem:[%s3 + $0x18] sm:$0xf] %v382
  %415 = vst [vmem:[%s3 + $0x1c] sm:$0xf] %v383
  %416 = vst [vmem:[%s3 + $0x20] sm:$0xf] %v384
  %417 = vst [vmem:[%s3 + $0x24] sm:$0xf] %v385
  %418 = vst [vmem:[%s3 + $0x28] sm:$0xf] %v386
  %419 = vst [vmem:[%s3 + $0x2c] sm:$0xf] %v387
  %420 = vst [vmem:[%s3 + $0x30] sm:$0xf] %v388
  %421 = vst [vmem:[%s3 + $0x34] sm:$0xf] %v389
  %422 = vst [vmem:[%s3 + $0x38] sm:$0xf] %v390
  %423 = vst [vmem:[%s3 + $0x3c] sm:$0xf] %v391
  // Predicated region
  $region14: #{run.4} parent=0 // pred_check
    _
  $region15: #{run.4} parent=0 // pred_check_branch
    %425 = sbr.rel (0) target = $region17
  $region16: #{run.4} parent=0 // pred_region
    _
  $region17: #{run.4} parent=0 // pred_fallthru
    _
  // Predicated region
  $region18: #{run.4} parent=0 // pred_check
    _
  $region19: #{run.4} parent=0 // pred_check_branch
    %427 = sbr.rel (0) target = $region21
  $region20: #{run.4} parent=0 // pred_region
    _
  $region21: #{run.4} parent=0 // pred_fallthru
    _

// kernel: run.5
$region0: #{run.5}
  #allocation0 [shape = 'u32[]', space=smem, size = 0x4, offset = 0x4, fixed_abs, tag = 'smem constant byte address 0x4 - core index']
  #allocation1 [shape = 'u32[144,128]{1,0:T(1,128)}', space=vmem, size = 0x12000, scoped, tag = 'internal scratch']
  %s0 = inlined_call_operand.vmem [shape: bf16[24,512], index: 0, kind: input, shape index: {}]
  %s1 = inlined_call_operand.vmem [shape: bf16[512,128], index: 1, kind: input, shape index: {}]
  %s2 = inlined_call_operand.vmem [shape: f32[1,128], index: 2, kind: input, shape index: {}]
  %s3 = inlined_call_operand.vmem [shape: bf16[24,128], index: 3, kind: output, shape index: {}]
  %s4 = sld [smem:[#allocation0]]
  $region22: #{run.5} parent=0
    _
  %s6 = ssub.s32 1, %s4
  %s7 = scalar_select 0, %s6, %s4
  // Predicated region
  $region2: #{run.5} parent=0 // pred_check
    _
  $region3: #{run.5} parent=0 // pred_check_branch
    %9 = sbr.rel (0) target = $region5
  $region4: #{run.5} parent=0 // pred_region
    _
  $region5: #{run.5} parent=0 // pred_fallthru
    _
  // Predicated region
  $region6: #{run.5} parent=0 // pred_check
    _
  $region7: #{run.5} parent=0 // pred_check_branch
    %11 = sbr.rel (0) target = $region9
  $region8: #{run.5} parent=0 // pred_region
    _
  $region9: #{run.5} parent=0 // pred_fallthru
    _
  // Predicated region
  $region10: #{run.5} parent=0 // pred_check
    _
  $region11: #{run.5} parent=0 // pred_check_branch
    %13 = sbr.rel (0) target = $region13
  $region12: #{run.5} parent=0 // pred_region
    _
  $region13: #{run.5} parent=0 // pred_fallthru
    _
  %v15 = vld [vmem:[%s0] sm:$0xff]
  %v16 = vld [vmem:[%s0 + $0x8] sm:$0xff]
  %v17 = vld [vmem:[%s0 + $0x10] sm:$0xff]
  %v18 = vld [vmem:[%s0 + $0x18] sm:$0xff]
  %v19 = vld [vmem:[%s0 + $0x20] sm:$0xff]
  %v20 = vld [vmem:[%s0 + $0x28] sm:$0xff]
  %v21 = vld [vmem:[%s1] sm:$0xf]
  %v22 = vld [vmem:[%s1 + $0x4] sm:$0xf]
  %v23 = vld [vmem:[%s1 + $0x8] sm:$0xf]
  %v24 = vld [vmem:[%s1 + $0xc] sm:$0xf]
  %v25 = vld [vmem:[%s1 + $0x10] sm:$0xf]
  %v26 = vld [vmem:[%s1 + $0x14] sm:$0xf]
  %v27 = vld [vmem:[%s1 + $0x18] sm:$0xf]
  %v28 = vld [vmem:[%s1 + $0x1c] sm:$0xf]
  %v29 = vld [vmem:[%s1 + $0x20] sm:$0xf]
  %v30 = vld [vmem:[%s1 + $0x24] sm:$0xf]
  %v31 = vld [vmem:[%s1 + $0x28] sm:$0xf]
  %v32 = vld [vmem:[%s1 + $0x2c] sm:$0xf]
  %v33 = vld [vmem:[%s1 + $0x30] sm:$0xf]
  %v34 = vld [vmem:[%s1 + $0x34] sm:$0xf]
  %v35 = vld [vmem:[%s1 + $0x38] sm:$0xf]
  %v36 = vld [vmem:[%s1 + $0x3c] sm:$0xf]
  %v37 = vld [vmem:[%s1 + $0x40] sm:$0xf]
  %v38 = vld [vmem:[%s1 + $0x44] sm:$0xf]
  %v39 = vld [vmem:[%s1 + $0x48] sm:$0xf]
  %v40 = vld [vmem:[%s1 + $0x4c] sm:$0xf]
  %v41 = vld [vmem:[%s1 + $0x50] sm:$0xf]
  %v42 = vld [vmem:[%s1 + $0x54] sm:$0xf]
  %v43 = vld [vmem:[%s1 + $0x58] sm:$0xf]
  %v44 = vld [vmem:[%s1 + $0x5c] sm:$0xf]
  %v45 = vld [vmem:[%s1 + $0x60] sm:$0xf]
  %v46 = vld [vmem:[%s1 + $0x64] sm:$0xf]
  %v47 = vld [vmem:[%s1 + $0x68] sm:$0xf]
  %v48 = vld [vmem:[%s1 + $0x6c] sm:$0xf]
  %v49 = vld [vmem:[%s1 + $0x70] sm:$0xf]
  %v50 = vld [vmem:[%s1 + $0x74] sm:$0xf]
  %v51 = vld [vmem:[%s1 + $0x78] sm:$0xf]
  %v52 = vld [vmem:[%s1 + $0x7c] sm:$0xf]
  %v53 = vld [vmem:[%s1 + $0x80] sm:$0xf]
  %v54 = vld [vmem:[%s1 + $0x84] sm:$0xf]
  %v55 = vld [vmem:[%s1 + $0x88] sm:$0xf]
  %v56 = vld [vmem:[%s1 + $0x8c] sm:$0xf]
  %v57 = vld [vmem:[%s1 + $0x90] sm:$0xf]
  %v58 = vld [vmem:[%s1 + $0x94] sm:$0xf]
  %v59 = vld [vmem:[%s1 + $0x98] sm:$0xf]
  %v60 = vld [vmem:[%s1 + $0x9c] sm:$0xf]
  %v61 = vld [vmem:[%s1 + $0xa0] sm:$0xf]
  %v62 = vld [vmem:[%s1 + $0xa4] sm:$0xf]
  %v63 = vld [vmem:[%s1 + $0xa8] sm:$0xf]
  %v64 = vld [vmem:[%s1 + $0xac] sm:$0xf]
  %v65 = vld [vmem:[%s1 + $0xb0] sm:$0xf]
  %v66 = vld [vmem:[%s1 + $0xb4] sm:$0xf]
  %v67 = vld [vmem:[%s1 + $0xb8] sm:$0xf]
  %v68 = vld [vmem:[%s1 + $0xbc] sm:$0xf]
  %v69 = vld [vmem:[%s1 + $0xc0] sm:$0xf]
  %v70 = vld [vmem:[%s1 + $0xc4] sm:$0xf]
  %v71 = vld [vmem:[%s1 + $0xc8] sm:$0xf]
  %v72 = vld [vmem:[%s1 + $0xcc] sm:$0xf]
  %v73 = vld [vmem:[%s1 + $0xd0] sm:$0xf]
  %v74 = vld [vmem:[%s1 + $0xd4] sm:$0xf]
  %v75 = vld [vmem:[%s1 + $0xd8] sm:$0xf]
  %v76 = vld [vmem:[%s1 + $0xdc] sm:$0xf]
  %v77 = vld [vmem:[%s1 + $0xe0] sm:$0xf]
  %v78 = vld [vmem:[%s1 + $0xe4] sm:$0xf]
  %v79 = vld [vmem:[%s1 + $0xe8] sm:$0xf]
  %v80 = vld [vmem:[%s1 + $0xec] sm:$0xf]
  %v81 = vld [vmem:[%s1 + $0xf0] sm:$0xf]
  %v82 = vld [vmem:[%s1 + $0xf4] sm:$0xf]
  %v83 = vld [vmem:[%s1 + $0xf8] sm:$0xf]
  %v84 = vld [vmem:[%s1 + $0xfc] sm:$0xf]
  %v85 = vld [vmem:[%s2] sm:$0x1]
  %v87 = vlaneseq
  %v88 = vshrl.u32 %v87, 7
  %v89 = vsub.s32 0, %v88
  %v90 = vrot.slane %v85, %v89
  %v98 = vunpack.c.l.b16 %v15
  %v99 = vunpack.c.h.b16 %v15
  %v100 = vunpack.c.l.b16 %v16
  %v101 = vunpack.c.h.b16 %v16
  %v102 = vunpack.c.l.b16 %v17
  %v103 = vunpack.c.h.b16 %v17
  %v104 = vunpack.c.l.b16 %v18
  %v105 = vunpack.c.h.b16 %v18
  %v106 = vunpack.c.l.b16 %v19
  %v107 = vunpack.c.h.b16 %v19
  %v108 = vunpack.c.l.b16 %v20
  %v109 = vunpack.c.h.b16 %v20
  %v110 = vpack.c.b16 %v102, %v98
  %v111 = vpack.c.b16 %v103, %v99
  %v112 = vpack.c.b16 %v104, %v100
  %v113 = vpack.c.b16 %v105, %v101
  %v114 = vpack.c.b16 %v106, %v106
  %v115 = vpack.c.b16 %v107, %v107
  %v116 = vpack.c.b16 %v108, %v108
  %v117 = vpack.c.b16 %v109, %v109
  %v190 = vunpack.c.l.b16 %v21
  %v191 = vunpack.c.l.b16 %v22
  %v192 = vunpack.c.l.b16 %v23
  %v193 = vunpack.c.l.b16 %v24
  %v194 = vunpack.c.l.b16 %v25
  %v195 = vunpack.c.l.b16 %v26
  %v196 = vunpack.c.l.b16 %v27
  %v197 = vunpack.c.l.b16 %v28
  %v198 = vunpack.c.l.b16 %v29
  %v199 = vunpack.c.l.b16 %v30
  %v200 = vunpack.c.l.b16 %v31
  %v201 = vunpack.c.l.b16 %v32
  %v202 = vunpack.c.l.b16 %v33
  %v203 = vunpack.c.l.b16 %v34
  %v204 = vunpack.c.l.b16 %v35
  %v205 = vunpack.c.l.b16 %v36
  %v206 = vunpack.c.l.b16 %v37
  %v207 = vunpack.c.l.b16 %v38
  %v208 = vunpack.c.l.b16 %v39
  %v209 = vunpack.c.l.b16 %v40
  %v210 = vunpack.c.l.b16 %v41
  %v211 = vunpack.c.l.b16 %v42
  %v212 = vunpack.c.l.b16 %v43
  %v213 = vunpack.c.l.b16 %v44
  %v214 = vunpack.c.l.b16 %v45
  %v215 = vunpack.c.l.b16 %v46
  %v216 = vunpack.c.l.b16 %v47
  %v217 = vunpack.c.l.b16 %v48
  %v218 = vunpack.c.l.b16 %v49
  %v219 = vunpack.c.l.b16 %v50
  %v220 = vunpack.c.l.b16 %v51
  %v221 = vunpack.c.l.b16 %v52
  %v222 = vunpack.c.l.b16 %v53
  %v223 = vunpack.c.l.b16 %v54
  %v224 = vunpack.c.l.b16 %v55
  %v225 = vunpack.c.l.b16 %v56
  %v226 = vunpack.c.l.b16 %v57
  %v227 = vunpack.c.l.b16 %v58
  %v228 = vunpack.c.l.b16 %v59
  %v229 = vunpack.c.l.b16 %v60
  %v230 = vunpack.c.l.b16 %v61
  %v231 = vunpack.c.l.b16 %v62
  %v232 = vunpack.c.l.b16 %v63
  %v233 = vunpack.c.l.b16 %v64
  %v234 = vunpack.c.l.b16 %v65
  %v235 = vunpack.c.l.b16 %v66
  %v236 = vunpack.c.l.b16 %v67
  %v237 = vunpack.c.l.b16 %v68
  %v238 = vunpack.c.l.b16 %v69
  %v239 = vunpack.c.l.b16 %v70
  %v240 = vunpack.c.l.b16 %v71
  %v241 = vunpack.c.l.b16 %v72
  %v242 = vunpack.c.l.b16 %v73
  %v243 = vunpack.c.l.b16 %v74
  %v244 = vunpack.c.l.b16 %v75
  %v245 = vunpack.c.l.b16 %v76
  %v246 = vunpack.c.l.b16 %v77
  %v247 = vunpack.c.l.b16 %v78
  %v248 = vunpack.c.l.b16 %v79
  %v249 = vunpack.c.l.b16 %v80
  %v250 = vunpack.c.l.b16 %v81
  %v251 = vunpack.c.l.b16 %v82
  %v252 = vunpack.c.l.b16 %v83
  %v253 = vunpack.c.l.b16 %v84
  %v254 = vpack.c.b16 %v191, %v190
  %v255 = vpack.c.b16 %v193, %v192
  %v256 = vpack.c.b16 %v195, %v194
  %v257 = vpack.c.b16 %v197, %v196
  %v258 = vpack.c.b16 %v199, %v198
  %v259 = vpack.c.b16 %v201, %v200
  %v260 = vpack.c.b16 %v203, %v202
  %v261 = vpack.c.b16 %v205, %v204
  %v262 = vpack.c.b16 %v207, %v206
  %v263 = vpack.c.b16 %v209, %v208
  %v264 = vpack.c.b16 %v211, %v210
  %v265 = vpack.c.b16 %v213, %v212
  %v266 = vpack.c.b16 %v215, %v214
  %v267 = vpack.c.b16 %v217, %v216
  %v268 = vpack.c.b16 %v219, %v218
  %v269 = vpack.c.b16 %v221, %v220
  %v270 = vpack.c.b16 %v223, %v222
  %v271 = vpack.c.b16 %v225, %v224
  %v272 = vpack.c.b16 %v227, %v226
  %v273 = vpack.c.b16 %v229, %v228
  %v274 = vpack.c.b16 %v231, %v230
  %v275 = vpack.c.b16 %v233, %v232
  %v276 = vpack.c.b16 %v235, %v234
  %v277 = vpack.c.b16 %v237, %v236
  %v278 = vpack.c.b16 %v239, %v238
  %v279 = vpack.c.b16 %v241, %v240
  %v280 = vpack.c.b16 %v243, %v242
  %v281 = vpack.c.b16 %v245, %v244
  %v282 = vpack.c.b16 %v247, %v246
  %v283 = vpack.c.b16 %v249, %v248
  %v284 = vpack.c.b16 %v251, %v250
  %v285 = vpack.c.b16 %v253, %v252
  %318 = vmatprep.subr.bf16.mxu0 0
  %319 = vmatpush1.bf16.msra.mxu0 %v261
  %320 = vmatprep.subr.bf16.mxu0 0
  %321 = vmatpush1.bf16.msra.mxu0 %v260
  %322 = vmatprep.subr.bf16.mxu0 0
  %323 = vmatpush1.bf16.msra.mxu0 %v259
  %324 = vmatprep.subr.bf16.mxu0 0
  %325 = vmatpush1.bf16.msra.mxu0 %v258
  %326 = vmatprep.subr.bf16.mxu0 0
  %327 = vmatpush1.bf16.msra.mxu0 %v257
  %328 = vmatprep.subr.bf16.mxu0 0
  %329 = vmatpush1.bf16.msra.mxu0 %v256
  %330 = vmatprep.subr.bf16.mxu0 0
  %331 = vmatpush1.bf16.msra.mxu0 %v255
  %332 = vmatprep.subr.bf16.mxu0 0
  %333 = vmatpush1.bf16.msra.mxu0 %v254
  %334 = vmatprep.subr.bf16.mxu0 0
  %335 = vmatpush2.bf16.msra.mxu0 %v269
  %336 = vmatprep.subr.bf16.mxu0 0
  %337 = vmatpush2.bf16.msra.mxu0 %v268
  %338 = vmatprep.subr.bf16.mxu0 0
  %339 = vmatpush2.bf16.msra.mxu0 %v267
  %340 = vmatprep.subr.bf16.mxu0 0
  %341 = vmatpush2.bf16.msra.mxu0 %v266
  %342 = vmatprep.subr.bf16.mxu0 0
  %343 = vmatpush2.bf16.msra.mxu0 %v265
  %344 = vmatprep.subr.bf16.mxu0 0
  %345 = vmatpush2.bf16.msra.mxu0 %v264
  %346 = vmatprep.subr.bf16.mxu0 0
  %347 = vmatpush2.bf16.msra.mxu0 %v263
  %348 = vmatprep.subr.bf16.mxu0 0
  %349 = vmatpush2.bf16.msra.mxu0 %v262
  %350 = vmatprep.mubr.bf16.mxu0 %v111
  %351 = vmatmul.mubr.bf16.gmra.mxu0 %v110
  %v352 = vpop.f32.mrf.mxu0
  %v353 = vadd.f32 %v90, %v352
  %v354 = vpop.f32.mrf.mxu0
  %v355 = vpop.f32.mrf.mxu0
  %v356 = vadd.f32 %v90, %v355
  %v357 = vpop.f32.mrf.mxu0
  %358 = vmatprep.mubr.bf16.mxu0 %v115
  %359 = vmatmul.mubr.bf16.gmra.mxu0 %v114
  %v360 = vpop.f32.mrf.mxu0
  %v361 = vadd.f32 %v90, %v360
  %v362 = vpop.f32.mrf.mxu0
  %v363 = vpop.f32.mrf.mxu0
  %v364 = vpop.f32.mrf.mxu0
  %365 = vdwg.mxu0
  %366 = vmatprep.subr.bf16.mxu0 0
  %367 = vmatpush1.bf16.msra.mxu0 %v277
  %368 = vmatprep.subr.bf16.mxu0 0
  %369 = vmatpush1.bf16.msra.mxu0 %v276
  %370 = vmatprep.subr.bf16.mxu0 0
  %371 = vmatpush1.bf16.msra.mxu0 %v275
  %372 = vmatprep.subr.bf16.mxu0 0
  %373 = vmatpush1.bf16.msra.mxu0 %v274
  %374 = vmatprep.subr.bf16.mxu0 0
  %375 = vmatpush1.bf16.msra.mxu0 %v273
  %376 = vmatprep.subr.bf16.mxu0 0
  %377 = vmatpush1.bf16.msra.mxu0 %v272
  %378 = vmatprep.subr.bf16.mxu0 0
  %379 = vmatpush1.bf16.msra.mxu0 %v271
  %380 = vmatprep.subr.bf16.mxu0 0
  %381 = vmatpush1.bf16.msra.mxu0 %v270
  %382 = vmatprep.subr.bf16.mxu0 0
  %383 = vmatpush2.bf16.msra.mxu0 %v285
  %384 = vmatprep.subr.bf16.mxu0 0
  %385 = vmatpush2.bf16.msra.mxu0 %v284
  %386 = vmatprep.subr.bf16.mxu0 0
  %387 = vmatpush2.bf16.msra.mxu0 %v283
  %388 = vmatprep.subr.bf16.mxu0 0
  %389 = vmatpush2.bf16.msra.mxu0 %v282
  %390 = vmatprep.subr.bf16.mxu0 0
  %391 = vmatpush2.bf16.msra.mxu0 %v281
  %392 = vmatprep.subr.bf16.mxu0 0
  %393 = vmatpush2.bf16.msra.mxu0 %v280
  %394 = vmatprep.subr.bf16.mxu0 0
  %395 = vmatpush2.bf16.msra.mxu0 %v279
  %396 = vmatprep.subr.bf16.mxu0 0
  %397 = vmatpush2.bf16.msra.mxu0 %v278
  %398 = vmatprep.mubr.bf16.mxu0 %v113
  %399 = vmatmul.mubr.bf16.gmra.mxu0 %v112
  %v400 = vpop.f32.mrf.mxu0
  %v401 = vadd.f32 %v353, %v400
  %v402 = vpop.f32.mrf.mxu0
  %v403 = vpop.f32.mrf.mxu0
  %v404 = vadd.f32 %v356, %v403
  %v405 = vpop.f32.mrf.mxu0
  %406 = vmatprep.mubr.bf16.mxu0 %v117
  %407 = vmatmul.mubr.bf16.gmra.mxu0 %v116
  %v408 = vpop.f32.mrf.mxu0
  %v409 = vadd.f32 %v361, %v408
  %v410 = vpop.f32.mrf.mxu0
  %v411 = vpop.f32.mrf.mxu0
  %v412 = vpop.f32.mrf.mxu0
  %413 = vdwg.mxu0
  %v414 = vmax.f32 %v401, 0.0
  %v415 = vmax.f32 %v404, 0.0
  %v416 = vmax.f32 %v409, 0.0
  %v417 = vpack.c.bf16 %v415, %v414
  %v418 = vpack.c.bf16 %v416, %v416
  %v421 = vunpack.c.l.b16 %v417
  %v422 = vunpack.c.h.b16 %v417
  %v423 = vunpack.c.l.b16 %v418
  %v424 = vpack.c.b16 %v421, %v421
  %v425 = vpack.c.b16 %v422, %v422
  %v426 = vpack.c.b16 %v423, %v423
  %430 = vst [vmem:[%s3] sm:$0xf] %v424
  %431 = vst [vmem:[%s3 + $0x4] sm:$0xf] %v425
  %432 = vst [vmem:[%s3 + $0x8] sm:$0xf] %v426
  // Predicated region
  $region14: #{run.5} parent=0 // pred_check
    _
  $region15: #{run.5} parent=0 // pred_check_branch
    %434 = sbr.rel (0) target = $region17
  $region16: #{run.5} parent=0 // pred_region
    _
  $region17: #{run.5} parent=0 // pred_fallthru
    _
  // Predicated region
  $region18: #{run.5} parent=0 // pred_check
    _
  $region19: #{run.5} parent=0 // pred_check_branch
    %436 = sbr.rel (0) target = $region21
  $region20: #{run.5} parent=0 // pred_region
    _
  $region21: #{run.5} parent=0 // pred_fallthru
    _

// kernel: run.6
$region0: #{run.6}
  #allocation0 [shape = 'u32[]', space=smem, size = 0x4, offset = 0x4, fixed_abs, tag = 'smem constant byte address 0x4 - core index']
  #allocation1 [shape = 'u32[144,128]{1,0:T(1,128)}', space=vmem, size = 0x12000, scoped, tag = 'internal scratch']
  %s0 = inlined_call_operand.vmem [shape: bf16[8,576], index: 0, kind: input, shape index: {}]
  %s1 = inlined_call_operand.vmem [shape: bf16[576,128], index: 1, kind: input, shape index: {}]
  %s2 = inlined_call_operand.vmem [shape: f32[1,128], index: 2, kind: input, shape index: {}]
  %s3 = inlined_call_operand.vmem [shape: bf16[8,128], index: 3, kind: output, shape index: {}]
  %s4 = sld [smem:[#allocation0]]
  $region22: #{run.6} parent=0
    _
  %s6 = ssub.s32 1, %s4
  %s7 = scalar_select 0, %s6, %s4
  // Predicated region
  $region2: #{run.6} parent=0 // pred_check
    _
  $region3: #{run.6} parent=0 // pred_check_branch
    %9 = sbr.rel (0) target = $region5
  $region4: #{run.6} parent=0 // pred_region
    _
  $region5: #{run.6} parent=0 // pred_fallthru
    _
  // Predicated region
  $region6: #{run.6} parent=0 // pred_check
    _
  $region7: #{run.6} parent=0 // pred_check_branch
    %11 = sbr.rel (0) target = $region9
  $region8: #{run.6} parent=0 // pred_region
    _
  $region9: #{run.6} parent=0 // pred_fallthru
    _
  // Predicated region
  $region10: #{run.6} parent=0 // pred_check
    _
  $region11: #{run.6} parent=0 // pred_check_branch
    %13 = sbr.rel (0) target = $region13
  $region12: #{run.6} parent=0 // pred_region
    _
  $region13: #{run.6} parent=0 // pred_fallthru
    _
  %v15 = vld [vmem:[%s0] sm:$0xff]
  %v16 = vld [vmem:[%s0 + $0x8] sm:$0xff]
  %v17 = vld [vmem:[%s0 + $0x10] sm:$0xf]
  %v18 = vld [vmem:[%s1] sm:$0xf]
  %v19 = vld [vmem:[%s1 + $0x4] sm:$0xf]
  %v20 = vld [vmem:[%s1 + $0x8] sm:$0xf]
  %v21 = vld [vmem:[%s1 + $0xc] sm:$0xf]
  %v22 = vld [vmem:[%s1 + $0x10] sm:$0xf]
  %v23 = vld [vmem:[%s1 + $0x14] sm:$0xf]
  %v24 = vld [vmem:[%s1 + $0x18] sm:$0xf]
  %v25 = vld [vmem:[%s1 + $0x1c] sm:$0xf]
  %v26 = vld [vmem:[%s1 + $0x20] sm:$0xf]
  %v27 = vld [vmem:[%s1 + $0x24] sm:$0xf]
  %v28 = vld [vmem:[%s1 + $0x28] sm:$0xf]
  %v29 = vld [vmem:[%s1 + $0x2c] sm:$0xf]
  %v30 = vld [vmem:[%s1 + $0x30] sm:$0xf]
  %v31 = vld [vmem:[%s1 + $0x34] sm:$0xf]
  %v32 = vld [vmem:[%s1 + $0x38] sm:$0xf]
  %v33 = vld [vmem:[%s1 + $0x3c] sm:$0xf]
  %v34 = vld [vmem:[%s1 + $0x40] sm:$0xf]
  %v35 = vld [vmem:[%s1 + $0x44] sm:$0xf]
  %v36 = vld [vmem:[%s1 + $0x48] sm:$0xf]
  %v37 = vld [vmem:[%s1 + $0x4c] sm:$0xf]
  %v38 = vld [vmem:[%s1 + $0x50] sm:$0xf]
  %v39 = vld [vmem:[%s1 + $0x54] sm:$0xf]
  %v40 = vld [vmem:[%s1 + $0x58] sm:$0xf]
  %v41 = vld [vmem:[%s1 + $0x5c] sm:$0xf]
  %v42 = vld [vmem:[%s1 + $0x60] sm:$0xf]
  %v43 = vld [vmem:[%s1 + $0x64] sm:$0xf]
  %v44 = vld [vmem:[%s1 + $0x68] sm:$0xf]
  %v45 = vld [vmem:[%s1 + $0x6c] sm:$0xf]
  %v46 = vld [vmem:[%s1 + $0x70] sm:$0xf]
  %v47 = vld [vmem:[%s1 + $0x74] sm:$0xf]
  %v48 = vld [vmem:[%s1 + $0x78] sm:$0xf]
  %v49 = vld [vmem:[%s1 + $0x7c] sm:$0xf]
  %v50 = vld [vmem:[%s1 + $0x80] sm:$0xf]
  %v51 = vld [vmem:[%s1 + $0x84] sm:$0xf]
  %v52 = vld [vmem:[%s1 + $0x88] sm:$0xf]
  %v53 = vld [vmem:[%s1 + $0x8c] sm:$0xf]
  %v54 = vld [vmem:[%s1 + $0x90] sm:$0xf]
  %v55 = vld [vmem:[%s1 + $0x94] sm:$0xf]
  %v56 = vld [vmem:[%s1 + $0x98] sm:$0xf]
  %v57 = vld [vmem:[%s1 + $0x9c] sm:$0xf]
  %v58 = vld [vmem:[%s1 + $0xa0] sm:$0xf]
  %v59 = vld [vmem:[%s1 + $0xa4] sm:$0xf]
  %v60 = vld [vmem:[%s1 + $0xa8] sm:$0xf]
  %v61 = vld [vmem:[%s1 + $0xac] sm:$0xf]
  %v62 = vld [vmem:[%s1 + $0xb0] sm:$0xf]
  %v63 = vld [vmem:[%s1 + $0xb4] sm:$0xf]
  %v64 = vld [vmem:[%s1 + $0xb8] sm:$0xf]
  %v65 = vld [vmem:[%s1 + $0xbc] sm:$0xf]
  %v66 = vld [vmem:[%s1 + $0xc0] sm:$0xf]
  %v67 = vld [vmem:[%s1 + $0xc4] sm:$0xf]
  %v68 = vld [vmem:[%s1 + $0xc8] sm:$0xf]
  %v69 = vld [vmem:[%s1 + $0xcc] sm:$0xf]
  %v70 = vld [vmem:[%s1 + $0xd0] sm:$0xf]
  %v71 = vld [vmem:[%s1 + $0xd4] sm:$0xf]
  %v72 = vld [vmem:[%s1 + $0xd8] sm:$0xf]
  %v73 = vld [vmem:[%s1 + $0xdc] sm:$0xf]
  %v74 = vld [vmem:[%s1 + $0xe0] sm:$0xf]
  %v75 = vld [vmem:[%s1 + $0xe4] sm:$0xf]
  %v76 = vld [vmem:[%s1 + $0xe8] sm:$0xf]
  %v77 = vld [vmem:[%s1 + $0xec] sm:$0xf]
  %v78 = vld [vmem:[%s1 + $0xf0] sm:$0xf]
  %v79 = vld [vmem:[%s1 + $0xf4] sm:$0xf]
  %v80 = vld [vmem:[%s1 + $0xf8] sm:$0xf]
  %v81 = vld [vmem:[%s1 + $0xfc] sm:$0xf]
  %v82 = vld [vmem:[%s1 + $0x100] sm:$0xf]
  %v83 = vld [vmem:[%s1 + $0x104] sm:$0xf]
  %v84 = vld [vmem:[%s1 + $0x108] sm:$0xf]
  %v85 = vld [vmem:[%s1 + $0x10c] sm:$0xf]
  %v86 = vld [vmem:[%s1 + $0x110] sm:$0xf]
  %v87 = vld [vmem:[%s1 + $0x114] sm:$0xf]
  %v88 = vld [vmem:[%s1 + $0x118] sm:$0xf]
  %v89 = vld [vmem:[%s1 + $0x11c] sm:$0xf]
  %v90 = vld [vmem:[%s2] sm:$0x1]
  %v92 = vlaneseq
  %v93 = vshrl.u32 %v92, 7
  %v94 = vsub.s32 0, %v93
  %v95 = vrot.slane %v90, %v94
  %v100 = vunpack.c.l.b16 %v15
  %v101 = vunpack.c.h.b16 %v15
  %v102 = vunpack.c.l.b16 %v16
  %v103 = vunpack.c.h.b16 %v16
  %v104 = vunpack.c.l.b16 %v17
  %v105 = vpack.c.b16 %v100, %v100
  %v106 = vpack.c.b16 %v101, %v101
  %v107 = vpack.c.b16 %v102, %v102
  %v108 = vpack.c.b16 %v103, %v103
  %v109 = vpack.c.b16 %v104, %v104
  %v186 = vunpack.c.l.b16 %v18
  %v187 = vunpack.c.l.b16 %v19
  %v188 = vunpack.c.l.b16 %v20
  %v189 = vunpack.c.l.b16 %v21
  %v190 = vunpack.c.l.b16 %v22
  %v191 = vunpack.c.l.b16 %v23
  %v192 = vunpack.c.l.b16 %v24
  %v193 = vunpack.c.l.b16 %v25
  %v194 = vunpack.c.l.b16 %v26
  %v195 = vunpack.c.l.b16 %v27
  %v196 = vunpack.c.l.b16 %v28
  %v197 = vunpack.c.l.b16 %v29
  %v198 = vunpack.c.l.b16 %v30
  %v199 = vunpack.c.l.b16 %v31
  %v200 = vunpack.c.l.b16 %v32
  %v201 = vunpack.c.l.b16 %v33
  %v202 = vunpack.c.l.b16 %v34
  %v203 = vunpack.c.l.b16 %v35
  %v204 = vunpack.c.l.b16 %v36
  %v205 = vunpack.c.l.b16 %v37
  %v206 = vunpack.c.l.b16 %v38
  %v207 = vunpack.c.l.b16 %v39
  %v208 = vunpack.c.l.b16 %v40
  %v209 = vunpack.c.l.b16 %v41
  %v210 = vunpack.c.l.b16 %v42
  %v211 = vunpack.c.l.b16 %v43
  %v212 = vunpack.c.l.b16 %v44
  %v213 = vunpack.c.l.b16 %v45
  %v214 = vunpack.c.l.b16 %v46
  %v215 = vunpack.c.l.b16 %v47
  %v216 = vunpack.c.l.b16 %v48
  %v217 = vunpack.c.l.b16 %v49
  %v218 = vunpack.c.l.b16 %v50
  %v219 = vunpack.c.l.b16 %v51
  %v220 = vunpack.c.l.b16 %v52
  %v221 = vunpack.c.l.b16 %v53
  %v222 = vunpack.c.l.b16 %v54
  %v223 = vunpack.c.l.b16 %v55
  %v224 = vunpack.c.l.b16 %v56
  %v225 = vunpack.c.l.b16 %v57
  %v226 = vunpack.c.l.b16 %v58
  %v227 = vunpack.c.l.b16 %v59
  %v228 = vunpack.c.l.b16 %v60
  %v229 = vunpack.c.l.b16 %v61
  %v230 = vunpack.c.l.b16 %v62
  %v231 = vunpack.c.l.b16 %v63
  %v232 = vunpack.c.l.b16 %v64
  %v233 = vunpack.c.l.b16 %v65
  %v234 = vunpack.c.l.b16 %v66
  %v235 = vunpack.c.l.b16 %v67
  %v236 = vunpack.c.l.b16 %v68
  %v237 = vunpack.c.l.b16 %v69
  %v238 = vunpack.c.l.b16 %v70
  %v239 = vunpack.c.l.b16 %v71
  %v240 = vunpack.c.l.b16 %v72
  %v241 = vunpack.c.l.b16 %v73
  %v242 = vunpack.c.l.b16 %v74
  %v243 = vunpack.c.l.b16 %v75
  %v244 = vunpack.c.l.b16 %v76
  %v245 = vunpack.c.l.b16 %v77
  %v246 = vunpack.c.l.b16 %v78
  %v247 = vunpack.c.l.b16 %v79
  %v248 = vunpack.c.l.b16 %v80
  %v249 = vunpack.c.l.b16 %v81
  %v250 = vunpack.c.l.b16 %v82
  %v251 = vunpack.c.l.b16 %v83
  %v252 = vunpack.c.l.b16 %v84
  %v253 = vunpack.c.l.b16 %v85
  %v254 = vunpack.c.l.b16 %v86
  %v255 = vunpack.c.l.b16 %v87
  %v256 = vunpack.c.l.b16 %v88
  %v257 = vunpack.c.l.b16 %v89
  %v258 = vpack.c.b16 %v187, %v186
  %v259 = vpack.c.b16 %v189, %v188
  %v260 = vpack.c.b16 %v191, %v190
  %v261 = vpack.c.b16 %v193, %v192
  %v262 = vpack.c.b16 %v195, %v194
  %v263 = vpack.c.b16 %v197, %v196
  %v264 = vpack.c.b16 %v199, %v198
  %v265 = vpack.c.b16 %v201, %v200
  %v266 = vpack.c.b16 %v203, %v202
  %v267 = vpack.c.b16 %v205, %v204
  %v268 = vpack.c.b16 %v207, %v206
  %v269 = vpack.c.b16 %v209, %v208
  %v270 = vpack.c.b16 %v211, %v210
  %v271 = vpack.c.b16 %v213, %v212
  %v272 = vpack.c.b16 %v215, %v214
  %v273 = vpack.c.b16 %v217, %v216
  %v274 = vpack.c.b16 %v219, %v218
  %v275 = vpack.c.b16 %v221, %v220
  %v276 = vpack.c.b16 %v223, %v222
  %v277 = vpack.c.b16 %v225, %v224
  %v278 = vpack.c.b16 %v227, %v226
  %v279 = vpack.c.b16 %v229, %v228
  %v280 = vpack.c.b16 %v231, %v230
  %v281 = vpack.c.b16 %v233, %v232
  %v282 = vpack.c.b16 %v235, %v234
  %v283 = vpack.c.b16 %v237, %v236
  %v284 = vpack.c.b16 %v239, %v238
  %v285 = vpack.c.b16 %v241, %v240
  %v286 = vpack.c.b16 %v243, %v242
  %v287 = vpack.c.b16 %v245, %v244
  %v288 = vpack.c.b16 %v247, %v246
  %v289 = vpack.c.b16 %v249, %v248
  %v290 = vpack.c.b16 %v251, %v250
  %v291 = vpack.c.b16 %v253, %v252
  %v292 = vpack.c.b16 %v255, %v254
  %v293 = vpack.c.b16 %v257, %v256
  %vm330 = vcmask 523264
  %v332 = vsel %vm330, %v109, 0
  %334 = vmatprep.subr.bf16.mxu0 0
  %335 = vmatpush1.bf16.msra.mxu0 %v265
  %336 = vmatprep.subr.bf16.mxu0 0
  %337 = vmatpush1.bf16.msra.mxu0 %v264
  %338 = vmatprep.subr.bf16.mxu0 0
  %339 = vmatpush1.bf16.msra.mxu0 %v263
  %340 = vmatprep.subr.bf16.mxu0 0
  %341 = vmatpush1.bf16.msra.mxu0 %v262
  %342 = vmatprep.subr.bf16.mxu0 0
  %343 = vmatpush1.bf16.msra.mxu0 %v261
  %344 = vmatprep.subr.bf16.mxu0 0
  %345 = vmatpush1.bf16.msra.mxu0 %v260
  %346 = vmatprep.subr.bf16.mxu0 0
  %347 = vmatpush1.bf16.msra.mxu0 %v259
  %348 = vmatprep.subr.bf16.mxu0 0
  %349 = vmatpush1.bf16.msra.mxu0 %v258
  %350 = vmatprep.subr.bf16.mxu0 0
  %351 = vmatpush2.bf16.msra.mxu0 %v273
  %352 = vmatprep.subr.bf16.mxu0 0
  %353 = vmatpush2.bf16.msra.mxu0 %v272
  %354 = vmatprep.subr.bf16.mxu0 0
  %355 = vmatpush2.bf16.msra.mxu0 %v271
  %356 = vmatprep.subr.bf16.mxu0 0
  %357 = vmatpush2.bf16.msra.mxu0 %v270
  %358 = vmatprep.subr.bf16.mxu0 0
  %359 = vmatpush2.bf16.msra.mxu0 %v269
  %360 = vmatprep.subr.bf16.mxu0 0
  %361 = vmatpush2.bf16.msra.mxu0 %v268
  %362 = vmatprep.subr.bf16.mxu0 0
  %363 = vmatpush2.bf16.msra.mxu0 %v267
  %364 = vmatprep.subr.bf16.mxu0 0
  %365 = vmatpush2.bf16.msra.mxu0 %v266
  %366 = vmatprep.mubr.bf16.mxu0 %v106
  %367 = vmatmul.mubr.bf16.gmra.mxu0 %v105
  %v368 = vpop.f32.mrf.mxu0
  %v369 = vadd.f32 %v95, %v368
  %v370 = vpop.f32.mrf.mxu0
  %v371 = vpop.f32.mrf.mxu0
  %v372 = vpop.f32.mrf.mxu0
  %373 = vdwg.mxu0
  %374 = vmatprep.subr.bf16.mxu0 0
  %375 = vmatpush1.bf16.msra.mxu0 %v281
  %376 = vmatprep.subr.bf16.mxu0 0
  %377 = vmatpush1.bf16.msra.mxu0 %v280
  %378 = vmatprep.subr.bf16.mxu0 0
  %379 = vmatpush1.bf16.msra.mxu0 %v279
  %380 = vmatprep.subr.bf16.mxu0 0
  %381 = vmatpush1.bf16.msra.mxu0 %v278
  %382 = vmatprep.subr.bf16.mxu0 0
  %383 = vmatpush1.bf16.msra.mxu0 %v277
  %384 = vmatprep.subr.bf16.mxu0 0
  %385 = vmatpush1.bf16.msra.mxu0 %v276
  %386 = vmatprep.subr.bf16.mxu0 0
  %387 = vmatpush1.bf16.msra.mxu0 %v275
  %388 = vmatprep.subr.bf16.mxu0 0
  %389 = vmatpush1.bf16.msra.mxu0 %v274
  %390 = vmatprep.subr.bf16.mxu0 0
  %391 = vmatpush2.bf16.msra.mxu0 %v289
  %392 = vmatprep.subr.bf16.mxu0 0
  %393 = vmatpush2.bf16.msra.mxu0 %v288
  %394 = vmatprep.subr.bf16.mxu0 0
  %395 = vmatpush2.bf16.msra.mxu0 %v287
  %396 = vmatprep.subr.bf16.mxu0 0
  %397 = vmatpush2.bf16.msra.mxu0 %v286
  %398 = vmatprep.subr.bf16.mxu0 0
  %399 = vmatpush2.bf16.msra.mxu0 %v285
  %400 = vmatprep.subr.bf16.mxu0 0
  %401 = vmatpush2.bf16.msra.mxu0 %v284
  %402 = vmatprep.subr.bf16.mxu0 0
  %403 = vmatpush2.bf16.msra.mxu0 %v283
  %404 = vmatprep.subr.bf16.mxu0 0
  %405 = vmatpush2.bf16.msra.mxu0 %v282
  %406 = vmatprep.mubr.bf16.mxu0 %v108
  %407 = vmatmul.mubr.bf16.gmra.mxu0 %v107
  %v408 = vpop.f32.mrf.mxu0
  %v409 = vadd.f32 %v369, %v408
  %v410 = vpop.f32.mrf.mxu0
  %v411 = vpop.f32.mrf.mxu0
  %v412 = vpop.f32.mrf.mxu0
  %413 = vdwg.mxu0
  %414 = vmatprep.subr.bf16.mxu0 0
  %415 = vmatpush1.bf16.msra.mxu0 0
  %416 = vmatprep.subr.bf16.mxu0 0
  %417 = vmatpush1.bf16.msra.mxu0 0
  %418 = vmatprep.subr.bf16.mxu0 0
  %419 = vmatpush1.bf16.msra.mxu0 0
  %420 = vmatprep.subr.bf16.mxu0 0
  %421 = vmatpush1.bf16.msra.mxu0 0
  %422 = vmatprep.subr.bf16.mxu0 0
  %423 = vmatpush1.bf16.msra.mxu0 %v293
  %424 = vmatprep.subr.bf16.mxu0 0
  %425 = vmatpush1.bf16.msra.mxu0 %v292
  %426 = vmatprep.subr.bf16.mxu0 0
  %427 = vmatpush1.bf16.msra.mxu0 %v291
  %428 = vmatprep.subr.bf16.mxu0 0
  %429 = vmatpush1.bf16.msra.mxu0 %v290
  %430 = vmatprep.subr.bf16.mxu0 0
  %431 = vmatpush2.bf16.msra.mxu0 0
  %432 = vmatprep.subr.bf16.mxu0 0
  %433 = vmatpush2.bf16.msra.mxu0 0
  %434 = vmatprep.subr.bf16.mxu0 0
  %435 = vmatpush2.bf16.msra.mxu0 0
  %436 = vmatprep.subr.bf16.mxu0 0
  %437 = vmatpush2.bf16.msra.mxu0 0
  %438 = vmatprep.subr.bf16.mxu0 0
  %439 = vmatpush2.bf16.msra.mxu0 0
  %440 = vmatprep.subr.bf16.mxu0 0
  %441 = vmatpush2.bf16.msra.mxu0 0
  %442 = vmatprep.subr.bf16.mxu0 0
  %443 = vmatpush2.bf16.msra.mxu0 0
  %444 = vmatprep.subr.bf16.mxu0 0
  %445 = vmatpush2.bf16.msra.mxu0 0
  %446 = vmatprep.mubr.bf16.mxu0 0
  %447 = vmatmul.mubr.bf16.gmra.mxu0 %v332
  %v448 = vpop.f32.mrf.mxu0
  %v449 = vadd.f32 %v409, %v448
  %v450 = vpop.f32.mrf.mxu0
  %v451 = vpop.f32.mrf.mxu0
  %v452 = vpop.f32.mrf.mxu0
  %453 = vdwg.mxu0
  %v454 = vmax.f32 %v449, 0.0
  %v455 = vpack.c.bf16 %v454, %v454
  %456 = vst [vmem:[%s3] sm:$0xf] %v455
  // Predicated region
  $region14: #{run.6} parent=0 // pred_check
    _
  $region15: #{run.6} parent=0 // pred_check_branch
    %458 = sbr.rel (0) target = $region17
  $region16: #{run.6} parent=0 // pred_region
    _
  $region17: #{run.6} parent=0 // pred_fallthru
    _
  // Predicated region
  $region18: #{run.6} parent=0 // pred_check
    _
  $region19: #{run.6} parent=0 // pred_check_branch
    %460 = sbr.rel (0) target = $region21
  $region20: #{run.6} parent=0 // pred_region
    _
  $region21: #{run.6} parent=0 // pred_fallthru
    _

// kernel: run.7
$region0: #{run.7}
  #allocation0 [shape = 'u32[]', space=smem, size = 0x4, offset = 0x4, fixed_abs, tag = 'smem constant byte address 0x4 - core index']
  #allocation1 [shape = 'u32[144,128]{1,0:T(1,128)}', space=vmem, size = 0x12000, scoped, tag = 'internal scratch']
  %s0 = inlined_call_operand.vmem [shape: bf16[8,64], index: 0, kind: input, shape index: {}]
  %s1 = inlined_call_operand.vmem [shape: f32[2,8,8,32], index: 1, kind: input, shape index: {}]
  %s2 = inlined_call_operand.vmem [shape: f32[8,8,32], index: 2, kind: input, shape index: {}]
  %s3 = inlined_call_operand.vmem [shape: f32[8,8,1], index: 3, kind: input, shape index: {}]
  %s4 = inlined_call_operand.vmem [shape: f32[32,32], index: 4, kind: input, shape index: {}]
  %s5 = inlined_call_operand.vmem [shape: bf16[64,32], index: 5, kind: input, shape index: {}]
  %s6 = inlined_call_operand.vmem [shape: f32[1,32], index: 6, kind: input, shape index: {}]
  %s7 = inlined_call_operand.vmem [shape: bf16[32,32], index: 7, kind: input, shape index: {}]
  %s8 = inlined_call_operand.vmem [shape: f32[1,32], index: 8, kind: input, shape index: {}]
  %s9 = inlined_call_operand.vmem [shape: bf16[2,32,32], index: 9, kind: input, shape index: {}]
  %s10 = inlined_call_operand.vmem [shape: bf16[2,32,64], index: 10, kind: input, shape index: {}]
  %s11 = inlined_call_operand.vmem [shape: bf16[2,32,32], index: 11, kind: input, shape index: {}]
  %s12 = inlined_call_operand.vmem [shape: f32[2,1,32], index: 12, kind: input, shape index: {}]
  %s13 = inlined_call_operand.vmem [shape: bf16[2,32,32], index: 13, kind: input, shape index: {}]
  %s14 = inlined_call_operand.vmem [shape: f32[2,1,32], index: 14, kind: input, shape index: {}]
  %s15 = inlined_call_operand.vmem [shape: f32[2,1,32], index: 15, kind: input, shape index: {}]
  %s16 = inlined_call_operand.vmem [shape: f32[2,1,32], index: 16, kind: input, shape index: {}]
  %s17 = inlined_call_operand.vmem [shape: f32[2,1,32], index: 17, kind: input, shape index: {}]
  %s18 = inlined_call_operand.vmem [shape: f32[2,1,32], index: 18, kind: input, shape index: {}]
  %s19 = inlined_call_operand.vmem [shape: bf16[32,64], index: 19, kind: input, shape index: {}]
  %s20 = inlined_call_operand.vmem [shape: f32[1,64], index: 20, kind: input, shape index: {}]
  %s21 = inlined_call_operand.vmem [shape: bf16[64,64], index: 21, kind: input, shape index: {}]
  %s22 = inlined_call_operand.vmem [shape: f32[1,64], index: 22, kind: input, shape index: {}]
  %s23 = inlined_call_operand.vmem [shape: f32[8,128], index: 23, kind: output, shape index: {}]
  %s24 = sld [smem:[#allocation0]]
  $region102: #{run.7} parent=0
    _
  %s26 = ssub.s32 1, %s24
  %s27 = scalar_select 0, %s26, %s24
  // Predicated region
  $region2: #{run.7} parent=0 // pred_check
    _
  $region3: #{run.7} parent=0 // pred_check_branch
    %29 = sbr.rel (0) target = $region5
  $region4: #{run.7} parent=0 // pred_region
    _
  $region5: #{run.7} parent=0 // pred_fallthru
    _
  // Predicated region
  $region6: #{run.7} parent=0 // pred_check
    _
  $region7: #{run.7} parent=0 // pred_check_branch
    %31 = sbr.rel (0) target = $region9
  $region8: #{run.7} parent=0 // pred_region
    _
  $region9: #{run.7} parent=0 // pred_fallthru
    _
  // Predicated region
  $region10: #{run.7} parent=0 // pred_check
    _
  $region11: #{run.7} parent=0 // pred_check_branch
    %33 = sbr.rel (0) target = $region13
  $region12: #{run.7} parent=0 // pred_region
    _
  $region13: #{run.7} parent=0 // pred_fallthru
    _
  // Predicated region
  $region14: #{run.7} parent=0 // pred_check
    _
  $region15: #{run.7} parent=0 // pred_check_branch
    %35 = sbr.rel (0) target = $region17
  $region16: #{run.7} parent=0 // pred_region
    _
  $region17: #{run.7} parent=0 // pred_fallthru
    _
  // Predicated region
  $region18: #{run.7} parent=0 // pred_check
    _
  $region19: #{run.7} parent=0 // pred_check_branch
    %37 = sbr.rel (0) target = $region21
  $region20: #{run.7} parent=0 // pred_region
    _
  $region21: #{run.7} parent=0 // pred_fallthru
    _
  // Predicated region
  $region22: #{run.7} parent=0 // pred_check
    _
  $region23: #{run.7} parent=0 // pred_check_branch
    %39 = sbr.rel (0) target = $region25
  $region24: #{run.7} parent=0 // pred_region
    _
  $region25: #{run.7} parent=0 // pred_fallthru
    _
  // Predicated region
  $region26: #{run.7} parent=0 // pred_check
    _
  $region27: #{run.7} parent=0 // pred_check_branch
    %41 = sbr.rel (0) target = $region29
  $region28: #{run.7} parent=0 // pred_region
    _
  $region29: #{run.7} parent=0 // pred_fallthru
    _
  // Predicated region
  $region30: #{run.7} parent=0 // pred_check
    _
  $region31: #{run.7} parent=0 // pred_check_branch
    %43 = sbr.rel (0) target = $region33
  $region32: #{run.7} parent=0 // pred_region
    _
  $region33: #{run.7} parent=0 // pred_fallthru
    _
  // Predicated region
  $region34: #{run.7} parent=0 // pred_check
    _
  $region35: #{run.7} parent=0 // pred_check_branch
    %45 = sbr.rel (0) target = $region37
  $region36: #{run.7} parent=0 // pred_region
    _
  $region37: #{run.7} parent=0 // pred_fallthru
    _
  // Predicated region
  $region38: #{run.7} parent=0 // pred_check
    _
  $region39: #{run.7} parent=0 // pred_check_branch
    %47 = sbr.rel (0) target = $region41
  $region40: #{run.7} parent=0 // pred_region
    _
  $region41: #{run.7} parent=0 // pred_fallthru
    _
  // Predicated region
  $region42: #{run.7} parent=0 // pred_check
    _
  $region43: #{run.7} parent=0 // pred_check_branch
    %49 = sbr.rel (0) target = $region45
  $region44: #{run.7} parent=0 // pred_region
    _
  $region45: #{run.7} parent=0 // pred_fallthru
    _
  // Predicated region
  $region46: #{run.7} parent=0 // pred_check
    _
  $region47: #{run.7} parent=0 // pred_check_branch
    %51 = sbr.rel (0) target = $region49
  $region48: #{run.7} parent=0 // pred_region
    _
  $region49: #{run.7} parent=0 // pred_fallthru
    _
  // Predicated region
  $region50: #{run.7} parent=0 // pred_check
    _
  $region51: #{run.7} parent=0 // pred_check_branch
    %53 = sbr.rel (0) target = $region53
  $region52: #{run.7} parent=0 // pred_region
    _
  $region53: #{run.7} parent=0 // pred_fallthru
    _
  // Predicated region
  $region54: #{run.7} parent=0 // pred_check
    _
  $region55: #{run.7} parent=0 // pred_check_branch
    %55 = sbr.rel (0) target = $region57
  $region56: #{run.7} parent=0 // pred_region
    _
  $region57: #{run.7} parent=0 // pred_fallthru
    _
  // Predicated region
  $region58: #{run.7} parent=0 // pred_check
    _
  $region59: #{run.7} parent=0 // pred_check_branch
    %57 = sbr.rel (0) target = $region61
  $region60: #{run.7} parent=0 // pred_region
    _
  $region61: #{run.7} parent=0 // pred_fallthru
    _
  // Predicated region
  $region62: #{run.7} parent=0 // pred_check
    _
  $region63: #{run.7} parent=0 // pred_check_branch
    %59 = sbr.rel (0) target = $region65
  $region64: #{run.7} parent=0 // pred_region
    _
  $region65: #{run.7} parent=0 // pred_fallthru
    _
  // Predicated region
  $region66: #{run.7} parent=0 // pred_check
    _
  $region67: #{run.7} parent=0 // pred_check_branch
    %61 = sbr.rel (0) target = $region69
  $region68: #{run.7} parent=0 // pred_region
    _
  $region69: #{run.7} parent=0 // pred_fallthru
    _
  // Predicated region
  $region70: #{run.7} parent=0 // pred_check
    _
  $region71: #{run.7} parent=0 // pred_check_branch
    %63 = sbr.rel (0) target = $region73
  $region72: #{run.7} parent=0 // pred_region
    _
  $region73: #{run.7} parent=0 // pred_fallthru
    _
  // Predicated region
  $region74: #{run.7} parent=0 // pred_check
    _
  $region75: #{run.7} parent=0 // pred_check_branch
    %65 = sbr.rel (0) target = $region77
  $region76: #{run.7} parent=0 // pred_region
    _
  $region77: #{run.7} parent=0 // pred_fallthru
    _
  // Predicated region
  $region78: #{run.7} parent=0 // pred_check
    _
  $region79: #{run.7} parent=0 // pred_check_branch
    %67 = sbr.rel (0) target = $region81
  $region80: #{run.7} parent=0 // pred_region
    _
  $region81: #{run.7} parent=0 // pred_fallthru
    _
  // Predicated region
  $region82: #{run.7} parent=0 // pred_check
    _
  $region83: #{run.7} parent=0 // pred_check_branch
    %69 = sbr.rel (0) target = $region85
  $region84: #{run.7} parent=0 // pred_region
    _
  $region85: #{run.7} parent=0 // pred_fallthru
    _
  // Predicated region
  $region86: #{run.7} parent=0 // pred_check
    _
  $region87: #{run.7} parent=0 // pred_check_branch
    %71 = sbr.rel (0) target = $region89
  $region88: #{run.7} parent=0 // pred_region
    _
  $region89: #{run.7} parent=0 // pred_fallthru
    _
  // Predicated region
  $region90: #{run.7} parent=0 // pred_check
    _
  $region91: #{run.7} parent=0 // pred_check_branch
    %73 = sbr.rel (0) target = $region93
  $region92: #{run.7} parent=0 // pred_region
    _
  $region93: #{run.7} parent=0 // pred_fallthru
    _
  %v75 = vld [vmem:[%s3] sm:$0xff]
  %v76 = vld [vmem:[%s3 + $0x8] sm:$0xff]
  %v77 = vld [vmem:[%s3 + $0x10] sm:$0xff]
  %v78 = vld [vmem:[%s3 + $0x18] sm:$0xff]
  %v79 = vld [vmem:[%s3 + $0x20] sm:$0xff]
  %v80 = vld [vmem:[%s3 + $0x28] sm:$0xff]
  %v81 = vld [vmem:[%s3 + $0x30] sm:$0xff]
  %v82 = vld [vmem:[%s3 + $0x38] sm:$0xff]
  %v83 = vld [vmem:[%s2] sm:$0xff]
  %v84 = vld [vmem:[%s2 + $0x8] sm:$0xff]
  %v85 = vld [vmem:[%s2 + $0x10] sm:$0xff]
  %v86 = vld [vmem:[%s2 + $0x18] sm:$0xff]
  %v87 = vld [vmem:[%s2 + $0x20] sm:$0xff]
  %v88 = vld [vmem:[%s2 + $0x28] sm:$0xff]
  %v89 = vld [vmem:[%s2 + $0x30] sm:$0xff]
  %v90 = vld [vmem:[%s2 + $0x38] sm:$0xff]
  %v91 = vld [vmem:[%s4] sm:$0xff]
  %v92 = vld [vmem:[%s4 + $0x8] sm:$0xff]
  %v93 = vld [vmem:[%s4 + $0x10] sm:$0xff]
  %v94 = vld [vmem:[%s4 + $0x18] sm:$0xff]
  %v95 = vld [vmem:[%s0] sm:$0xf]
  %v96 = vld [vmem:[%s5] sm:$0xf]
  %v97 = vld [vmem:[%s5 + $0x4] sm:$0xf]
  %v98 = vld [vmem:[%s5 + $0x8] sm:$0xf]
  %v99 = vld [vmem:[%s5 + $0xc] sm:$0xf]
  %v100 = vld [vmem:[%s5 + $0x10] sm:$0xf]
  %v101 = vld [vmem:[%s5 + $0x14] sm:$0xf]
  %v102 = vld [vmem:[%s5 + $0x18] sm:$0xf]
  %v103 = vld [vmem:[%s5 + $0x1c] sm:$0xf]
  %v104 = vld [vmem:[%s6] sm:$0x1]
  %v106 = vlaneseq
  %v107 = vshrl.u32 %v106, 7
  %v108 = vsub.s32 0, %v107
  %v109 = vrot.slane %v104, %v108
  %v119 = vunpack.c.l.b16 %v96
  %v120 = vunpack.c.l.b16 %v97
  %v121 = vunpack.c.l.b16 %v98
  %v122 = vunpack.c.l.b16 %v99
  %v123 = vunpack.c.l.b16 %v100
  %v124 = vunpack.c.l.b16 %v101
  %v125 = vunpack.c.l.b16 %v102
  %v126 = vunpack.c.l.b16 %v103
  %v127 = vpack.c.b16 %v120, %v119
  %v128 = vpack.c.b16 %v122, %v121
  %v129 = vpack.c.b16 %v124, %v123
  %v130 = vpack.c.b16 %v126, %v125
  %vm135 = vcmask 523264
  %v137 = vsel %vm135, %v95, 0
  %139 = vmatprep.subr.bf16.mxu0 0
  %140 = vmatpush1.bf16.msra.mxu0 0
  %141 = vmatprep.subr.bf16.mxu0 0
  %142 = vmatpush1.bf16.msra.mxu0 0
  %143 = vmatprep.subr.bf16.mxu0 0
  %144 = vmatpush1.bf16.msra.mxu0 0
  %145 = vmatprep.subr.bf16.mxu0 0
  %146 = vmatpush1.bf16.msra.mxu0 0
  %147 = vmatprep.subr.bf16.mxu0 0
  %148 = vmatpush1.bf16.msra.mxu0 %v130
  %149 = vmatprep.subr.bf16.mxu0 0
  %150 = vmatpush1.bf16.msra.mxu0 %v129
  %151 = vmatprep.subr.bf16.mxu0 0
  %152 = vmatpush1.bf16.msra.mxu0 %v128
  %153 = vmatprep.subr.bf16.mxu0 0
  %154 = vmatpush1.bf16.msra.mxu0 %v127
  %155 = vmatprep.subr.bf16.mxu0 0
  %156 = vmatpush2.bf16.msra.mxu0 0
  %157 = vmatprep.subr.bf16.mxu0 0
  %158 = vmatpush2.bf16.msra.mxu0 0
  %159 = vmatprep.subr.bf16.mxu0 0
  %160 = vmatpush2.bf16.msra.mxu0 0
  %161 = vmatprep.subr.bf16.mxu0 0
  %162 = vmatpush2.bf16.msra.mxu0 0
  %163 = vmatprep.subr.bf16.mxu0 0
  %164 = vmatpush2.bf16.msra.mxu0 0
  %165 = vmatprep.subr.bf16.mxu0 0
  %166 = vmatpush2.bf16.msra.mxu0 0
  %167 = vmatprep.subr.bf16.mxu0 0
  %168 = vmatpush2.bf16.msra.mxu0 0
  %169 = vmatprep.subr.bf16.mxu0 0
  %170 = vmatpush2.bf16.msra.mxu0 0
  %171 = vmatprep.mubr.bf16.mxu0 0
  %172 = vmatmul.mubr.bf16.gmra.mxu0 %v137
  %v173 = vpop.f32.mrf.mxu0
  %v174 = vadd.f32 %v109, %v173
  %v175 = vpop.f32.mrf.mxu0
  %v176 = vpop.f32.mrf.mxu0
  %v177 = vpop.f32.mrf.mxu0
  %178 = vdwg.mxu0
  %v179 = vmax.f32 %v174, 0.0
  %v180 = vld [vmem:[%s7] sm:$0xf]
  %v181 = vld [vmem:[%s7 + $0x4] sm:$0xf]
  %v182 = vld [vmem:[%s7 + $0x8] sm:$0xf]
  %v183 = vld [vmem:[%s7 + $0xc] sm:$0xf]
  %v184 = vpack.c.bf16 %v179, %v179
  %v185 = vld [vmem:[%s8] sm:$0x1]
  %v187 = vlaneseq
  %v188 = vshrl.u32 %v187, 7
  %v189 = vsub.s32 0, %v188
  %v190 = vrot.slane %v185, %v189
  %v196 = vunpack.c.l.b16 %v180
  %v197 = vunpack.c.l.b16 %v181
  %v198 = vunpack.c.l.b16 %v182
  %v199 = vunpack.c.l.b16 %v183
  %v200 = vpack.c.b16 %v197, %v196
  %v201 = vpack.c.b16 %v199, %v198
  %vm204 = vcmask 261120
  %v206 = vsel %vm204, %v184, 0
  %208 = vmatprep.subr.bf16.mxu0 0
  %209 = vmatpush1.bf16.msra.mxu0 0
  %210 = vmatprep.subr.bf16.mxu0 0
  %211 = vmatpush1.bf16.msra.mxu0 0
  %212 = vmatprep.subr.bf16.mxu0 0
  %213 = vmatpush1.bf16.msra.mxu0 0
  %214 = vmatprep.subr.bf16.mxu0 0
  %215 = vmatpush1.bf16.msra.mxu0 0
  %216 = vmatprep.subr.bf16.mxu0 0
  %217 = vmatpush1.bf16.msra.mxu0 0
  %218 = vmatprep.subr.bf16.mxu0 0
  %219 = vmatpush1.bf16.msra.mxu0 0
  %220 = vmatprep.subr.bf16.mxu0 0
  %221 = vmatpush1.bf16.msra.mxu0 %v201
  %222 = vmatprep.subr.bf16.mxu0 0
  %223 = vmatpush1.bf16.msra.mxu0 %v200
  %224 = vmatprep.subr.bf16.mxu0 0
  %225 = vmatpush2.bf16.msra.mxu0 0
  %226 = vmatprep.subr.bf16.mxu0 0
  %227 = vmatpush2.bf16.msra.mxu0 0
  %228 = vmatprep.subr.bf16.mxu0 0
  %229 = vmatpush2.bf16.msra.mxu0 0
  %230 = vmatprep.subr.bf16.mxu0 0
  %231 = vmatpush2.bf16.msra.mxu0 0
  %232 = vmatprep.subr.bf16.mxu0 0
  %233 = vmatpush2.bf16.msra.mxu0 0
  %234 = vmatprep.subr.bf16.mxu0 0
  %235 = vmatpush2.bf16.msra.mxu0 0
  %236 = vmatprep.subr.bf16.mxu0 0
  %237 = vmatpush2.bf16.msra.mxu0 0
  %238 = vmatprep.subr.bf16.mxu0 0
  %239 = vmatpush2.bf16.msra.mxu0 0
  %240 = vmatprep.mubr.bf16.mxu0 0
  %241 = vmatmul.mubr.bf16.gmra.mxu0 %v206
  %v242 = vpop.f32.mrf.mxu0
  %v243 = vadd.f32 %v190, %v242
  %v244 = vpop.f32.mrf.mxu0
  %v245 = vpop.f32.mrf.mxu0
  %v246 = vpop.f32.mrf.mxu0
  %247 = vdwg.mxu0
  %v248 = vmax.f32 %v243, 0.0
  %v249 = vld [vmem:[%s1] sm:$0xff]
  %v250 = vld [vmem:[%s1 + $0x8] sm:$0xff]
  %v251 = vld [vmem:[%s1 + $0x10] sm:$0xff]
  %v252 = vld [vmem:[%s1 + $0x18] sm:$0xff]
  %v253 = vld [vmem:[%s1 + $0x20] sm:$0xff]
  %v254 = vld [vmem:[%s1 + $0x28] sm:$0xff]
  %v255 = vld [vmem:[%s1 + $0x30] sm:$0xff]
  %v256 = vld [vmem:[%s1 + $0x38] sm:$0xff]
  %v257 = vadd.f32 %v249, %v83
  %v258 = vadd.f32 %v250, %v84
  %v259 = vadd.f32 %v251, %v85
  %v260 = vadd.f32 %v252, %v86
  %v261 = vadd.f32 %v253, %v87
  %v262 = vadd.f32 %v254, %v88
  %v263 = vadd.f32 %v255, %v89
  %v264 = vadd.f32 %v256, %v90
  %v265 = vld [vmem:[%s9] sm:$0xf]
  %v266 = vld [vmem:[%s9 + $0x4] sm:$0xf]
  %v267 = vld [vmem:[%s9 + $0x8] sm:$0xf]
  %v268 = vld [vmem:[%s9 + $0xc] sm:$0xf]
  %v269 = vpack.c.bf16 %v248, %v248
  %v274 = vunpack.c.l.b16 %v265
  %v275 = vunpack.c.l.b16 %v266
  %v276 = vunpack.c.l.b16 %v267
  %v277 = vunpack.c.l.b16 %v268
  %v278 = vpack.c.b16 %v275, %v274
  %v279 = vpack.c.b16 %v277, %v276
  %v283 = vsel %vm204, %v269, 0
  %285 = vmatprep.subr.bf16.mxu0 0
  %286 = vmatpush1.bf16.msra.mxu0 0
  %287 = vmatprep.subr.bf16.mxu0 0
  %288 = vmatpush1.bf16.msra.mxu0 0
  %289 = vmatprep.subr.bf16.mxu0 0
  %290 = vmatpush1.bf16.msra.mxu0 0
  %291 = vmatprep.subr.bf16.mxu0 0
  %292 = vmatpush1.bf16.msra.mxu0 0
  %293 = vmatprep.subr.bf16.mxu0 0
  %294 = vmatpush1.bf16.msra.mxu0 0
  %295 = vmatprep.subr.bf16.mxu0 0
  %296 = vmatpush1.bf16.msra.mxu0 0
  %297 = vmatprep.subr.bf16.mxu0 0
  %298 = vmatpush1.bf16.msra.mxu0 %v279
  %299 = vmatprep.subr.bf16.mxu0 0
  %300 = vmatpush1.bf16.msra.mxu0 %v278
  %301 = vmatprep.subr.bf16.mxu0 0
  %302 = vmatpush2.bf16.msra.mxu0 0
  %303 = vmatprep.subr.bf16.mxu0 0
  %304 = vmatpush2.bf16.msra.mxu0 0
  %305 = vmatprep.subr.bf16.mxu0 0
  %306 = vmatpush2.bf16.msra.mxu0 0
  %307 = vmatprep.subr.bf16.mxu0 0
  %308 = vmatpush2.bf16.msra.mxu0 0
  %309 = vmatprep.subr.bf16.mxu0 0
  %310 = vmatpush2.bf16.msra.mxu0 0
  %311 = vmatprep.subr.bf16.mxu0 0
  %312 = vmatpush2.bf16.msra.mxu0 0
  %313 = vmatprep.subr.bf16.mxu0 0
  %314 = vmatpush2.bf16.msra.mxu0 0
  %315 = vmatprep.subr.bf16.mxu0 0
  %316 = vmatpush2.bf16.msra.mxu0 0
  %317 = vmatprep.mubr.bf16.mxu0 0
  %318 = vmatmul.mubr.bf16.gmra.mxu0 %v283
  %v319 = vpop.f32.mrf.mxu0
  %v320 = vadd.f32 0.0, %v319
  %v321 = vpop.f32.mrf.mxu0
  %v322 = vpop.f32.mrf.mxu0
  %v323 = vpop.f32.mrf.mxu0
  %324 = vdwg.mxu0
  %v325 = vld [vmem:[%s10] sm:$0xf]
  %v326 = vld [vmem:[%s10 + $0x4] sm:$0xf]
  %v327 = vld [vmem:[%s10 + $0x8] sm:$0xf]
  %v328 = vld [vmem:[%s10 + $0xc] sm:$0xf]
  %v329 = vpack.c.bf16 %v258, %v257
  %v330 = vpack.c.bf16 %v260, %v259
  %v331 = vpack.c.bf16 %v262, %v261
  %v332 = vpack.c.bf16 %v264, %v263
  %v337 = vunpack.c.l.b16 %v325
  %v338 = vunpack.c.l.b16 %v326
  %v339 = vunpack.c.l.b16 %v327
  %v340 = vunpack.c.l.b16 %v328
  %v341 = vpack.c.b16 %v338, %v337
  %v342 = vpack.c.b16 %v340, %v339
  %v346 = vsel %vm204, %v329, 0
  %v349 = vsel %vm204, %v330, 0
  %v352 = vsel %vm204, %v331, 0
  %v355 = vsel %vm204, %v332, 0
  %357 = vmatprep.subr.bf16.mxu0 0
  %358 = vmatpush1.bf16.msra.mxu0 0
  %359 = vmatprep.subr.bf16.mxu0 0
  %360 = vmatpush1.bf16.msra.mxu0 0
  %361 = vmatprep.subr.bf16.mxu0 0
  %362 = vmatpush1.bf16.msra.mxu0 0
  %363 = vmatprep.subr.bf16.mxu0 0
  %364 = vmatpush1.bf16.msra.mxu0 0
  %365 = vmatprep.subr.bf16.mxu0 0
  %366 = vmatpush1.bf16.msra.mxu0 0
  %367 = vmatprep.subr.bf16.mxu0 0
  %368 = vmatpush1.bf16.msra.mxu0 0
  %369 = vmatprep.subr.bf16.mxu0 0
  %370 = vmatpush1.bf16.msra.mxu0 %v342
  %371 = vmatprep.subr.bf16.mxu0 0
  %372 = vmatpush1.bf16.msra.mxu0 %v341
  %373 = vmatprep.subr.bf16.mxu0 0
  %374 = vmatpush2.bf16.msra.mxu0 0
  %375 = vmatprep.subr.bf16.mxu0 0
  %376 = vmatpush2.bf16.msra.mxu0 0
  %377 = vmatprep.subr.bf16.mxu0 0
  %378 = vmatpush2.bf16.msra.mxu0 0
  %379 = vmatprep.subr.bf16.mxu0 0
  %380 = vmatpush2.bf16.msra.mxu0 0
  %381 = vmatprep.subr.bf16.mxu0 0
  %382 = vmatpush2.bf16.msra.mxu0 0
  %383 = vmatprep.subr.bf16.mxu0 0
  %384 = vmatpush2.bf16.msra.mxu0 0
  %385 = vmatprep.subr.bf16.mxu0 0
  %386 = vmatpush2.bf16.msra.mxu0 0
  %387 = vmatprep.subr.bf16.mxu0 0
  %388 = vmatpush2.bf16.msra.mxu0 0
  %389 = vmatprep.mubr.bf16.mxu0 0
  %390 = vmatmul.mubr.bf16.gmra.mxu0 %v346
  %v391 = vpop.f32.mrf.mxu0
  %v392 = vadd.f32 0.0, %v391
  %v393 = vpop.f32.mrf.mxu0
  %v394 = vpop.f32.mrf.mxu0
  %v395 = vadd.f32 0.0, %v394
  %v396 = vpop.f32.mrf.mxu0
  %397 = vmatprep.mubr.bf16.mxu0 0
  %398 = vmatmul.mubr.bf16.gmra.mxu0 %v349
  %v399 = vpop.f32.mrf.mxu0
  %v400 = vadd.f32 0.0, %v399
  %v401 = vpop.f32.mrf.mxu0
  %v402 = vpop.f32.mrf.mxu0
  %v403 = vadd.f32 0.0, %v402
  %v404 = vpop.f32.mrf.mxu0
  %405 = vmatprep.mubr.bf16.mxu0 0
  %406 = vmatmul.mubr.bf16.gmra.mxu0 %v352
  %v407 = vpop.f32.mrf.mxu0
  %v408 = vadd.f32 0.0, %v407
  %v409 = vpop.f32.mrf.mxu0
  %v410 = vpop.f32.mrf.mxu0
  %v411 = vadd.f32 0.0, %v410
  %v412 = vpop.f32.mrf.mxu0
  %413 = vmatprep.mubr.bf16.mxu0 0
  %414 = vmatmul.mubr.bf16.gmra.mxu0 %v355
  %v415 = vpop.f32.mrf.mxu0
  %v416 = vadd.f32 0.0, %v415
  %v417 = vpop.f32.mrf.mxu0
  %v418 = vpop.f32.mrf.mxu0
  %v419 = vadd.f32 0.0, %v418
  %v420 = vpop.f32.mrf.mxu0
  %421 = vdwg.mxu0
  %v423 = vcombine.high %v320, %v320
  %v425 = vunpack.c.l.s4 1966171168
  %v426 = vunpack.c.0.s8 %v425
  %v427 = vlaneseq
  %v428 = vshrl.u32 %v427, 7
  %v429 = vsub.s32 %v426, %v428
  %v430 = vrot.slane %v320, %v429
  %v432 = vunpack.c.l.s4 1966171168
  %v433 = vunpack.c.0.s8 %v432
  %v434 = vlaneseq
  %v435 = vshrl.u32 %v434, 7
  %v436 = vsub.s32 %v433, %v435
  %v437 = vrot.slane %v423, %v436
  %v438 = vcombine.high %v430, %v430
  %v439 = vcombine.high %v437, %v437
  %v441 = vunpack.c.l.s4 1966171168
  %v442 = vunpack.c.0.s8 %v441
  %v443 = vlaneseq
  %v444 = vshrl.u32 %v443, 7
  %v445 = vsub.s32 %v442, %v444
  %v446 = vrot.slane %v430, %v445
  %v448 = vunpack.c.l.s4 1966171168
  %v449 = vunpack.c.0.s8 %v448
  %v450 = vlaneseq
  %v451 = vshrl.u32 %v450, 7
  %v452 = vsub.s32 %v449, %v451
  %v453 = vrot.slane %v437, %v452
  %v455 = vunpack.c.l.s4 1966171168
  %v456 = vunpack.c.0.s8 %v455
  %v457 = vlaneseq
  %v458 = vshrl.u32 %v457, 7
  %v459 = vsub.s32 %v456, %v458
  %v460 = vrot.slane %v438, %v459
  %v462 = vunpack.c.l.s4 1966171168
  %v463 = vunpack.c.0.s8 %v462
  %v464 = vlaneseq
  %v465 = vshrl.u32 %v464, 7
  %v466 = vsub.s32 %v463, %v465
  %v467 = vrot.slane %v439, %v466
  %v468 = vcombine.high %v446, %v446
  %v469 = vcombine.high %v453, %v453
  %v470 = vcombine.high %v460, %v460
  %v471 = vcombine.high %v467, %v467
  %v472 = vlaneseq
  %v473 = vshrl.u32 %v472, 7
  %v474 = vsub.s32 0, %v473
  %v475 = vrot.slane %v446, %v474
  %v476 = vlaneseq
  %v477 = vshrl.u32 %v476, 7
  %v478 = vsub.s32 0, %v477
  %v479 = vrot.slane %v460, %v478
  %v480 = vlaneseq
  %v481 = vshrl.u32 %v480, 7
  %v482 = vsub.s32 0, %v481
  %v483 = vrot.slane %v468, %v482
  %v484 = vlaneseq
  %v485 = vshrl.u32 %v484, 7
  %v486 = vsub.s32 0, %v485
  %v487 = vrot.slane %v470, %v486
  %v488 = vlaneseq
  %v489 = vshrl.u32 %v488, 7
  %v490 = vsub.s32 0, %v489
  %v491 = vrot.slane %v453, %v490
  %v492 = vlaneseq
  %v493 = vshrl.u32 %v492, 7
  %v494 = vsub.s32 0, %v493
  %v495 = vrot.slane %v467, %v494
  %v496 = vlaneseq
  %v497 = vshrl.u32 %v496, 7
  %v498 = vsub.s32 0, %v497
  %v499 = vrot.slane %v469, %v498
  %v500 = vlaneseq
  %v501 = vshrl.u32 %v500, 7
  %v502 = vsub.s32 0, %v501
  %v503 = vrot.slane %v471, %v502
  %v512 = vmul.f32 %v392, %v475
  %v513 = vmul.f32 %v395, %v479
  %v514 = vmul.f32 %v400, %v483
  %v515 = vmul.f32 %v403, %v487
  %v516 = vmul.f32 %v408, %v491
  %v517 = vmul.f32 %v411, %v495
  %v518 = vmul.f32 %v416, %v499
  %v519 = vmul.f32 %v419, %v503
  %v521 = vsel %vm204, %v512, 0
  %v524 = vsel %vm204, %v513, 0
  %v527 = vsel %vm204, %v514, 0
  %v530 = vsel %vm204, %v515, 0
  %v533 = vsel %vm204, %v516, 0
  %v536 = vsel %vm204, %v517, 0
  %v539 = vsel %vm204, %v518, 0
  %v542 = vsel %vm204, %v519, 0
  %544 = vmatprep.subr.mxu0 0.0
  %545 = vmatpush1.msra.mxu0 0.0
  %546 = vmatprep.subr.mxu0 0.0
  %547 = vmatpush1.msra.mxu0 0.0
  %548 = vmatprep.subr.mxu0 0.0
  %549 = vmatpush1.msra.mxu0 0.0
  %550 = vmatprep.subr.mxu0 0.0
  %551 = vmatpush1.msra.mxu0 0.0
  %552 = vmatprep.subr.mxu0 0.0
  %553 = vmatpush1.msra.mxu0 0.0
  %554 = vmatprep.subr.mxu0 0.0
  %555 = vmatpush1.msra.mxu0 0.0
  %556 = vmatprep.subr.mxu0 0.0
  %557 = vmatpush1.msra.mxu0 0.0
  %558 = vmatprep.subr.mxu0 0.0
  %559 = vmatpush1.msra.mxu0 0.0
  %560 = vmatprep.subr.mxu0 0.0
  %561 = vmatpush1.msra.mxu0 0.0
  %562 = vmatprep.subr.mxu0 0.0
  %563 = vmatpush1.msra.mxu0 0.0
  %564 = vmatprep.subr.mxu0 0.0
  %565 = vmatpush1.msra.mxu0 0.0
  %566 = vmatprep.subr.mxu0 0.0
  %567 = vmatpush1.msra.mxu0 0.0
  %568 = vmatprep.subr.mxu0 0.0
  %569 = vmatpush1.msra.mxu0 %v94
  %570 = vmatprep.subr.mxu0 0.0
  %571 = vmatpush1.msra.mxu0 %v93
  %572 = vmatprep.subr.mxu0 0.0
  %573 = vmatpush1.msra.mxu0 %v92
  %574 = vmatprep.subr.mxu0 0.0
  %575 = vmatpush1.msra.mxu0 %v91
  %576 = vmatprep.subr.mxu0 0.0
  %577 = vmatpush2.msra.mxu0 0.0
  %578 = vmatprep.subr.mxu0 0.0
  %579 = vmatpush2.msra.mxu0 0.0
  %580 = vmatprep.subr.mxu0 0.0
  %581 = vmatpush2.msra.mxu0 0.0
  %582 = vmatprep.subr.mxu0 0.0
  %583 = vmatpush2.msra.mxu0 0.0
  %584 = vmatprep.subr.mxu0 0.0
  %585 = vmatpush2.msra.mxu0 0.0
  %586 = vmatprep.subr.mxu0 0.0
  %587 = vmatpush2.msra.mxu0 0.0
  %588 = vmatprep.subr.mxu0 0.0
  %589 = vmatpush2.msra.mxu0 0.0
  %590 = vmatprep.subr.mxu0 0.0
  %591 = vmatpush2.msra.mxu0 0.0
  %592 = vmatprep.subr.mxu0 0.0
  %593 = vmatpush2.msra.mxu0 0.0
  %594 = vmatprep.subr.mxu0 0.0
  %595 = vmatpush2.msra.mxu0 0.0
  %596 = vmatprep.subr.mxu0 0.0
  %597 = vmatpush2.msra.mxu0 0.0
  %598 = vmatprep.subr.mxu0 0.0
  %599 = vmatpush2.msra.mxu0 0.0
  %600 = vmatprep.subr.mxu0 0.0
  %601 = vmatpush2.msra.mxu0 0.0
  %602 = vmatprep.subr.mxu0 0.0
  %603 = vmatpush2.msra.mxu0 0.0
  %604 = vmatprep.subr.mxu0 0.0
  %605 = vmatpush2.msra.mxu0 0.0
  %606 = vmatprep.subr.mxu0 0.0
  %607 = vmatpush2.msra.mxu0 0.0
  %608 = vmatprep.mubr.f32.mxu0 0.0
  %609 = vmatmul.mubr.f32.gmra.mxu0 %v521
  %v610 = vpop.f32.mrf.mxu0
  %v611 = vadd.f32 0.0, %v610
  %v612 = vpop.f32.mrf.mxu0
  %613 = vmatprep.mubr.f32.mxu0 0.0
  %614 = vmatmul.mubr.f32.gmra.mxu0 %v524
  %v615 = vpop.f32.mrf.mxu0
  %v616 = vadd.f32 0.0, %v615
  %v617 = vpop.f32.mrf.mxu0
  %618 = vmatprep.mubr.f32.mxu0 0.0
  %619 = vmatmul.mubr.f32.gmra.mxu0 %v527
  %v620 = vpop.f32.mrf.mxu0
  %v621 = vadd.f32 0.0, %v620
  %v622 = vpop.f32.mrf.mxu0
  %623 = vmatprep.mubr.f32.mxu0 0.0
  %624 = vmatmul.mubr.f32.gmra.mxu0 %v530
  %v625 = vpop.f32.mrf.mxu0
  %v626 = vadd.f32 0.0, %v625
  %v627 = vpop.f32.mrf.mxu0
  %628 = vmatprep.mubr.f32.mxu0 0.0
  %629 = vmatmul.mubr.f32.gmra.mxu0 %v533
  %v630 = vpop.f32.mrf.mxu0
  %v631 = vadd.f32 0.0, %v630
  %v632 = vpop.f32.mrf.mxu0
  %633 = vmatprep.mubr.f32.mxu0 0.0
  %634 = vmatmul.mubr.f32.gmra.mxu0 %v536
  %v635 = vpop.f32.mrf.mxu0
  %v636 = vadd.f32 0.0, %v635
  %v637 = vpop.f32.mrf.mxu0
  %638 = vmatprep.mubr.f32.mxu0 0.0
  %639 = vmatmul.mubr.f32.gmra.mxu0 %v539
  %v640 = vpop.f32.mrf.mxu0
  %v641 = vadd.f32 0.0, %v640
  %v642 = vpop.f32.mrf.mxu0
  %643 = vmatprep.mubr.f32.mxu0 0.0
  %644 = vmatmul.mubr.f32.gmra.mxu0 %v542
  %v645 = vpop.f32.mrf.mxu0
  %v646 = vadd.f32 0.0, %v645
  %v647 = vpop.f32.mrf.mxu0
  %648 = vdwg.mxu0
  %v649 = vmul.f32 %v611, 0.35355338
  %v650 = vmul.f32 %v616, 0.35355338
  %v651 = vmul.f32 %v621, 0.35355338
  %v652 = vmul.f32 %v626, 0.35355338
  %v653 = vmul.f32 %v631, 0.35355338
  %v654 = vmul.f32 %v636, 0.35355338
  %v655 = vmul.f32 %v641, 0.35355338
  %v656 = vmul.f32 %v646, 0.35355338
  %vm657 = vcmp.gt.f32.partialorder %v75, 0.0
  %vm658 = vcmp.gt.f32.partialorder %v76, 0.0
  %vm659 = vcmp.gt.f32.partialorder %v77, 0.0
  %vm660 = vcmp.gt.f32.partialorder %v78, 0.0
  %vm661 = vcmp.gt.f32.partialorder %v79, 0.0
  %vm662 = vcmp.gt.f32.partialorder %v80, 0.0
  %vm663 = vcmp.gt.f32.partialorder %v81, 0.0
  %vm664 = vcmp.gt.f32.partialorder %v82, 0.0
  %v665 = vsel %vm657, 1, 0
  %v666 = vsel %vm658, 1, 0
  %v667 = vsel %vm659, 1, 0
  %v668 = vsel %vm660, 1, 0
  %v669 = vsel %vm661, 1, 0
  %v670 = vsel %vm662, 1, 0
  %v671 = vsel %vm663, 1, 0
  %v672 = vsel %vm664, 1, 0
  %673 = vset.pattern.permute.xlu0 0
  %674 = vperm.xlu0 %673, %v665
  %v675 = vpop.permute.xlu0 %674
  %676 = vset.pattern.permute.xlu0 0
  %677 = vperm.xlu0 %676, %v666
  %v678 = vpop.permute.xlu0 %677
  %679 = vset.pattern.permute.xlu0 0
  %680 = vperm.xlu0 %679, %v667
  %v681 = vpop.permute.xlu0 %680
  %682 = vset.pattern.permute.xlu0 0
  %683 = vperm.xlu0 %682, %v668
  %v684 = vpop.permute.xlu0 %683
  %685 = vset.pattern.permute.xlu0 0
  %686 = vperm.xlu0 %685, %v669
  %v687 = vpop.permute.xlu0 %686
  %688 = vset.pattern.permute.xlu0 0
  %689 = vperm.xlu0 %688, %v670
  %v690 = vpop.permute.xlu0 %689
  %691 = vset.pattern.permute.xlu0 0
  %692 = vperm.xlu0 %691, %v671
  %v693 = vpop.permute.xlu0 %692
  %694 = vset.pattern.permute.xlu0 0
  %695 = vperm.xlu0 %694, %v672
  %v696 = vpop.permute.xlu0 %695
  %vm697 = vcmp.eq.s32.totalorder %v675, 1
  %vm698 = vcmp.eq.s32.totalorder %v678, 1
  %vm699 = vcmp.eq.s32.totalorder %v681, 1
  %vm700 = vcmp.eq.s32.totalorder %v684, 1
  %vm701 = vcmp.eq.s32.totalorder %v687, 1
  %vm702 = vcmp.eq.s32.totalorder %v690, 1
  %vm703 = vcmp.eq.s32.totalorder %v693, 1
  %vm704 = vcmp.eq.s32.totalorder %v696, 1
  %v705 = vsel %vm697, %v649, -1e+20
  %v706 = vsel %vm698, %v650, -1e+20
  %v707 = vsel %vm699, %v651, -1e+20
  %v708 = vsel %vm700, %v652, -1e+20
  %v709 = vsel %vm701, %v653, -1e+20
  %v710 = vsel %vm702, %v654, -1e+20
  %v711 = vsel %vm703, %v655, -1e+20
  %v712 = vsel %vm704, %v656, -1e+20
  %v713 = vsel %vm204, %v705, -inf
  %v714 = vrot.slane %v713, 4
  %v715 = vmax.f32 %v713, %v714
  %v716 = vrot.slane %v715, 2
  %v717 = vmax.f32 %v715, %v716
  %v718 = vrot.slane %v717, 1
  %v719 = vmax.f32 %v717, %v718
  %v720 = vsel %vm204, %v706, -inf
  %v721 = vrot.slane %v720, 4
  %v722 = vmax.f32 %v720, %v721
  %v723 = vrot.slane %v722, 2
  %v724 = vmax.f32 %v722, %v723
  %v725 = vrot.slane %v724, 1
  %v726 = vmax.f32 %v724, %v725
  %v727 = vsel %vm204, %v707, -inf
  %v728 = vrot.slane %v727, 4
  %v729 = vmax.f32 %v727, %v728
  %v730 = vrot.slane %v729, 2
  %v731 = vmax.f32 %v729, %v730
  %v732 = vrot.slane %v731, 1
  %v733 = vmax.f32 %v731, %v732
  %v734 = vsel %vm204, %v708, -inf
  %v735 = vrot.slane %v734, 4
  %v736 = vmax.f32 %v734, %v735
  %v737 = vrot.slane %v736, 2
  %v738 = vmax.f32 %v736, %v737
  %v739 = vrot.slane %v738, 1
  %v740 = vmax.f32 %v738, %v739
  %v741 = vsel %vm204, %v709, -inf
  %v742 = vrot.slane %v741, 4
  %v743 = vmax.f32 %v741, %v742
  %v744 = vrot.slane %v743, 2
  %v745 = vmax.f32 %v743, %v744
  %v746 = vrot.slane %v745, 1
  %v747 = vmax.f32 %v745, %v746
  %v748 = vsel %vm204, %v710, -inf
  %v749 = vrot.slane %v748, 4
  %v750 = vmax.f32 %v748, %v749
  %v751 = vrot.slane %v750, 2
  %v752 = vmax.f32 %v750, %v751
  %v753 = vrot.slane %v752, 1
  %v754 = vmax.f32 %v752, %v753
  %v755 = vsel %vm204, %v711, -inf
  %v756 = vrot.slane %v755, 4
  %v757 = vmax.f32 %v755, %v756
  %v758 = vrot.slane %v757, 2
  %v759 = vmax.f32 %v757, %v758
  %v760 = vrot.slane %v759, 1
  %v761 = vmax.f32 %v759, %v760
  %v762 = vsel %vm204, %v712, -inf
  %v763 = vrot.slane %v762, 4
  %v764 = vmax.f32 %v762, %v763
  %v765 = vrot.slane %v764, 2
  %v766 = vmax.f32 %v764, %v765
  %v767 = vrot.slane %v766, 1
  %v768 = vmax.f32 %v766, %v767
  %v769 = vsub.f32 %v705, %v719
  %v770 = vsub.f32 %v706, %v726
  %v771 = vsub.f32 %v707, %v733
  %v772 = vsub.f32 %v708, %v740
  %v773 = vsub.f32 %v709, %v747
  %v774 = vsub.f32 %v710, %v754
  %v775 = vsub.f32 %v711, %v761
  %v776 = vsub.f32 %v712, %v768
  %v777 = vmul.f32 %v769, 1.442695
  %v778 = vpow.pop %v777
  %v779 = vmul.f32 %v770, 1.442695
  %v780 = vpow.pop %v779
  %v781 = vmul.f32 %v771, 1.442695
  %v782 = vpow.pop %v781
  %v783 = vmul.f32 %v772, 1.442695
  %v784 = vpow.pop %v783
  %v785 = vmul.f32 %v773, 1.442695
  %v786 = vpow.pop %v785
  %v787 = vmul.f32 %v774, 1.442695
  %v788 = vpow.pop %v787
  %v789 = vmul.f32 %v775, 1.442695
  %v790 = vpow.pop %v789
  %v791 = vmul.f32 %v776, 1.442695
  %v792 = vpow.pop %v791
  %v793 = vsel %vm204, %v778, 0.0
  %v794 = vrot.slane %v793, 4
  %v795 = vadd.f32 %v793, %v794
  %v796 = vrot.slane %v795, 2
  %v797 = vadd.f32 %v795, %v796
  %v798 = vrot.slane %v797, 1
  %v799 = vadd.f32 %v797, %v798
  %v800 = vsel %vm204, %v780, 0.0
  %v801 = vrot.slane %v800, 4
  %v802 = vadd.f32 %v800, %v801
  %v803 = vrot.slane %v802, 2
  %v804 = vadd.f32 %v802, %v803
  %v805 = vrot.slane %v804, 1
  %v806 = vadd.f32 %v804, %v805
  %v807 = vsel %vm204, %v782, 0.0
  %v808 = vrot.slane %v807, 4
  %v809 = vadd.f32 %v807, %v808
  %v810 = vrot.slane %v809, 2
  %v811 = vadd.f32 %v809, %v810
  %v812 = vrot.slane %v811, 1
  %v813 = vadd.f32 %v811, %v812
  %v814 = vsel %vm204, %v784, 0.0
  %v815 = vrot.slane %v814, 4
  %v816 = vadd.f32 %v814, %v815
  %v817 = vrot.slane %v816, 2
  %v818 = vadd.f32 %v816, %v817
  %v819 = vrot.slane %v818, 1
  %v820 = vadd.f32 %v818, %v819
  %v821 = vsel %vm204, %v786, 0.0
  %v822 = vrot.slane %v821, 4
  %v823 = vadd.f32 %v821, %v822
  %v824 = vrot.slane %v823, 2
  %v825 = vadd.f32 %v823, %v824
  %v826 = vrot.slane %v825, 1
  %v827 = vadd.f32 %v825, %v826
  %v828 = vsel %vm204, %v788, 0.0
  %v829 = vrot.slane %v828, 4
  %v830 = vadd.f32 %v828, %v829
  %v831 = vrot.slane %v830, 2
  %v832 = vadd.f32 %v830, %v831
  %v833 = vrot.slane %v832, 1
  %v834 = vadd.f32 %v832, %v833
  %v835 = vsel %vm204, %v790, 0.0
  %v836 = vrot.slane %v835, 4
  %v837 = vadd.f32 %v835, %v836
  %v838 = vrot.slane %v837, 2
  %v839 = vadd.f32 %v837, %v838
  %v840 = vrot.slane %v839, 1
  %v841 = vadd.f32 %v839, %v840
  %v842 = vsel %vm204, %v792, 0.0
  %v843 = vrot.slane %v842, 4
  %v844 = vadd.f32 %v842, %v843
  %v845 = vrot.slane %v844, 2
  %v846 = vadd.f32 %v844, %v845
  %v847 = vrot.slane %v846, 1
  %v848 = vadd.f32 %v846, %v847
  %v849 = vrcp.pop %v799
  %v850 = vrcp.pop %v806
  %v851 = vrcp.pop %v813
  %v852 = vrcp.pop %v820
  %v853 = vrcp.pop %v827
  %v854 = vrcp.pop %v834
  %v855 = vrcp.pop %v841
  %v856 = vrcp.pop %v848
  %v857 = vmul.f32 %v778, %v849
  %v858 = vmul.f32 %v780, %v850
  %v859 = vmul.f32 %v782, %v851
  %v860 = vmul.f32 %v784, %v852
  %v861 = vmul.f32 %v786, %v853
  %v862 = vmul.f32 %v788, %v854
  %v863 = vmul.f32 %v790, %v855
  %v864 = vmul.f32 %v792, %v856
  %873 = vrot.lane.b32.xlu0 %v392, 96
  %v874 = vpop.permute.xlu0 %873
  %875 = vrot.lane.b32.xlu0 %v395, 96
  %v876 = vpop.permute.xlu0 %875
  %877 = vrot.lane.b32.xlu0 %v400, 96
  %v878 = vpop.permute.xlu0 %877
  %879 = vrot.lane.b32.xlu0 %v403, 96
  %v880 = vpop.permute.xlu0 %879
  %881 = vrot.lane.b32.xlu0 %v408, 96
  %v882 = vpop.permute.xlu0 %881
  %883 = vrot.lane.b32.xlu0 %v411, 96
  %v884 = vpop.permute.xlu0 %883
  %885 = vrot.lane.b32.xlu0 %v416, 96
  %v886 = vpop.permute.xlu0 %885
  %887 = vrot.lane.b32.xlu0 %v419, 96
  %v888 = vpop.permute.xlu0 %887
  %v897 = vmul.f32 %v857, %v874
  %v898 = vmul.f32 %v858, %v876
  %v899 = vmul.f32 %v859, %v878
  %v900 = vmul.f32 %v860, %v880
  %v901 = vmul.f32 %v861, %v882
  %v902 = vmul.f32 %v862, %v884
  %v903 = vmul.f32 %v863, %v886
  %v904 = vmul.f32 %v864, %v888
  %v905 = vsel %vm204, %v897, 0.0
  %v906 = vrot.slane %v905, 4
  %v907 = vadd.f32 %v905, %v906
  %v908 = vrot.slane %v907, 2
  %v909 = vadd.f32 %v907, %v908
  %v910 = vrot.slane %v909, 1
  %v911 = vadd.f32 %v909, %v910
  %v912 = vsel %vm204, %v898, 0.0
  %v913 = vrot.slane %v912, 4
  %v914 = vadd.f32 %v912, %v913
  %v915 = vrot.slane %v914, 2
  %v916 = vadd.f32 %v914, %v915
  %v917 = vrot.slane %v916, 1
  %v918 = vadd.f32 %v916, %v917
  %v919 = vsel %vm204, %v899, 0.0
  %v920 = vrot.slane %v919, 4
  %v921 = vadd.f32 %v919, %v920
  %v922 = vrot.slane %v921, 2
  %v923 = vadd.f32 %v921, %v922
  %v924 = vrot.slane %v923, 1
  %v925 = vadd.f32 %v923, %v924
  %v926 = vsel %vm204, %v900, 0.0
  %v927 = vrot.slane %v926, 4
  %v928 = vadd.f32 %v926, %v927
  %v929 = vrot.slane %v928, 2
  %v930 = vadd.f32 %v928, %v929
  %v931 = vrot.slane %v930, 1
  %v932 = vadd.f32 %v930, %v931
  %v933 = vsel %vm204, %v901, 0.0
  %v934 = vrot.slane %v933, 4
  %v935 = vadd.f32 %v933, %v934
  %v936 = vrot.slane %v935, 2
  %v937 = vadd.f32 %v935, %v936
  %v938 = vrot.slane %v937, 1
  %v939 = vadd.f32 %v937, %v938
  %v940 = vsel %vm204, %v902, 0.0
  %v941 = vrot.slane %v940, 4
  %v942 = vadd.f32 %v940, %v941
  %v943 = vrot.slane %v942, 2
  %v944 = vadd.f32 %v942, %v943
  %v945 = vrot.slane %v944, 1
  %v946 = vadd.f32 %v944, %v945
  %v947 = vsel %vm204, %v903, 0.0
  %v948 = vrot.slane %v947, 4
  %v949 = vadd.f32 %v947, %v948
  %v950 = vrot.slane %v949, 2
  %v951 = vadd.f32 %v949, %v950
  %v952 = vrot.slane %v951, 1
  %v953 = vadd.f32 %v951, %v952
  %v954 = vsel %vm204, %v904, 0.0
  %v955 = vrot.slane %v954, 4
  %v956 = vadd.f32 %v954, %v955
  %v957 = vrot.slane %v956, 2
  %v958 = vadd.f32 %v956, %v957
  %v959 = vrot.slane %v958, 1
  %v960 = vadd.f32 %v958, %v959
  %v961 = vld [vmem:[%s11] sm:$0xf]
  %v962 = vld [vmem:[%s11 + $0x4] sm:$0xf]
  %v963 = vld [vmem:[%s11 + $0x8] sm:$0xf]
  %v964 = vld [vmem:[%s11 + $0xc] sm:$0xf]
  %v965 = vpack.c.bf16 %v911, %v911
  %v966 = vpack.c.bf16 %v918, %v918
  %v967 = vpack.c.bf16 %v925, %v925
  %v968 = vpack.c.bf16 %v932, %v932
  %v969 = vpack.c.bf16 %v939, %v939
  %v970 = vpack.c.bf16 %v946, %v946
  %v971 = vpack.c.bf16 %v953, %v953
  %v972 = vpack.c.bf16 %v960, %v960
  %v973 = vld [vmem:[%s12] sm:$0x1]
  %v975 = vlaneseq
  %v976 = vshrl.u32 %v975, 7
  %v977 = vsub.s32 0, %v976
  %v978 = vrot.slane %v973, %v977
  %v988 = vunpack.c.l.b16 %v965
  %v989 = vunpack.c.l.b16 %v966
  %v990 = vunpack.c.l.b16 %v967
  %v991 = vunpack.c.l.b16 %v968
  %v992 = vunpack.c.l.b16 %v969
  %v993 = vunpack.c.l.b16 %v970
  %v994 = vunpack.c.l.b16 %v971
  %v995 = vunpack.c.l.b16 %v972
  %vm996 = vcmask 1041409
  %v997 = vsel %vm996, %v989, %v988
  %vm998 = vcmask 1042434
  %v999 = vsel %vm998, %v990, %v997
  %vm1000 = vcmask 1043459
  %v1001 = vsel %vm1000, %v991, %v999
  %vm1002 = vcmask 1044484
  %v1003 = vsel %vm1002, %v992, %v1001
  %vm1004 = vcmask 1045509
  %v1005 = vsel %vm1004, %v993, %v1003
  %vm1006 = vcmask 1046534
  %v1007 = vsel %vm1006, %v994, %v1005
  %vm1008 = vcmask 1047559
  %v1009 = vsel %vm1008, %v995, %v1007
  %v1010 = vpack.c.b16 %v1009, %v1009
  %v1015 = vunpack.c.l.b16 %v961
  %v1016 = vunpack.c.l.b16 %v962
  %v1017 = vunpack.c.l.b16 %v963
  %v1018 = vunpack.c.l.b16 %v964
  %v1019 = vpack.c.b16 %v1016, %v1015
  %v1020 = vpack.c.b16 %v1018, %v1017
  %v1024 = vsel %vm204, %v1010, 0
  %1026 = vmatprep.subr.bf16.mxu0 0
  %1027 = vmatpush1.bf16.msra.mxu0 0
  %1028 = vmatprep.subr.bf16.mxu0 0
  %1029 = vmatpush1.bf16.msra.mxu0 0
  %1030 = vmatprep.subr.bf16.mxu0 0
  %1031 = vmatpush1.bf16.msra.mxu0 0
  %1032 = vmatprep.subr.bf16.mxu0 0
  %1033 = vmatpush1.bf16.msra.mxu0 0
  %1034 = vmatprep.subr.bf16.mxu0 0
  %1035 = vmatpush1.bf16.msra.mxu0 0
  %1036 = vmatprep.subr.bf16.mxu0 0
  %1037 = vmatpush1.bf16.msra.mxu0 0
  %1038 = vmatprep.subr.bf16.mxu0 0
  %1039 = vmatpush1.bf16.msra.mxu0 %v1020
  %1040 = vmatprep.subr.bf16.mxu0 0
  %1041 = vmatpush1.bf16.msra.mxu0 %v1019
  %1042 = vmatprep.subr.bf16.mxu0 0
  %1043 = vmatpush2.bf16.msra.mxu0 0
  %1044 = vmatprep.subr.bf16.mxu0 0
  %1045 = vmatpush2.bf16.msra.mxu0 0
  %1046 = vmatprep.subr.bf16.mxu0 0
  %1047 = vmatpush2.bf16.msra.mxu0 0
  %1048 = vmatprep.subr.bf16.mxu0 0
  %1049 = vmatpush2.bf16.msra.mxu0 0
  %1050 = vmatprep.subr.bf16.mxu0 0
  %1051 = vmatpush2.bf16.msra.mxu0 0
  %1052 = vmatprep.subr.bf16.mxu0 0
  %1053 = vmatpush2.bf16.msra.mxu0 0
  %1054 = vmatprep.subr.bf16.mxu0 0
  %1055 = vmatpush2.bf16.msra.mxu0 0
  %1056 = vmatprep.subr.bf16.mxu0 0
  %1057 = vmatpush2.bf16.msra.mxu0 0
  %1058 = vmatprep.mubr.bf16.mxu0 0
  %1059 = vmatmul.mubr.bf16.gmra.mxu0 %v1024
  %v1060 = vpop.f32.mrf.mxu0
  %v1061 = vadd.f32 %v978, %v1060
  %v1062 = vpop.f32.mrf.mxu0
  %v1063 = vpop.f32.mrf.mxu0
  %v1064 = vpop.f32.mrf.mxu0
  %1065 = vdwg.mxu0
  %v1066 = vadd.f32 %v1061, %v248
  %v1067 = vld [vmem:[%s15] sm:$0x1]
  %v1068 = vld [vmem:[%s16] sm:$0x1]
  %v1069 = vsel %vm204, %v1066, 0.0
  %1070 = vadd.xlane.f32.xlu0 %v1069
  %v1071 = vpop.xlane.xlu0 %1070
  %v1072 = vrcp.pop 32.0
  %v1073 = vmul.f32 %v1071, %v1072
  %v1074 = vsub.f32 %v1066, %v1073
  %v1075 = vmul.f32 %v1074, %v1074
  %v1076 = vsel %vm204, %v1075, 0.0
  %1077 = vadd.xlane.f32.xlu0 %v1076
  %v1078 = vpop.xlane.xlu0 %1077
  %v1079 = vmul.f32 %v1078, %v1072
  %v1080 = vadd.f32 %v1079, 1e-05
  %v1081 = vrsqrt.pop %v1080
  %v1082 = vmul.f32 %v1074, %v1081
  %v1084 = vlaneseq
  %v1085 = vshrl.u32 %v1084, 7
  %v1086 = vsub.s32 0, %v1085
  %v1087 = vrot.slane %v1067, %v1086
  %v1089 = vmul.f32 %v1082, %v1087
  %v1091 = vlaneseq
  %v1092 = vshrl.u32 %v1091, 7
  %v1093 = vsub.s32 0, %v1092
  %v1094 = vrot.slane %v1068, %v1093
  %v1096 = vadd.f32 %v1089, %v1094
  %v1097 = vld [vmem:[%s13] sm:$0xf]
  %v1098 = vld [vmem:[%s13 + $0x4] sm:$0xf]
  %v1099 = vld [vmem:[%s13 + $0x8] sm:$0xf]
  %v1100 = vld [vmem:[%s13 + $0xc] sm:$0xf]
  %v1101 = vpack.c.bf16 %v1096, %v1096
  %v1102 = vld [vmem:[%s14] sm:$0x1]
  %v1104 = vlaneseq
  %v1105 = vshrl.u32 %v1104, 7
  %v1106 = vsub.s32 0, %v1105
  %v1107 = vrot.slane %v1102, %v1106
  %v1113 = vunpack.c.l.b16 %v1097
  %v1114 = vunpack.c.l.b16 %v1098
  %v1115 = vunpack.c.l.b16 %v1099
  %v1116 = vunpack.c.l.b16 %v1100
  %v1117 = vpack.c.b16 %v1114, %v1113
  %v1118 = vpack.c.b16 %v1116, %v1115
  %v1122 = vsel %vm204, %v1101, 0
  %1124 = vmatprep.subr.bf16.mxu0 0
  %1125 = vmatpush1.bf16.msra.mxu0 0
  %1126 = vmatprep.subr.bf16.mxu0 0
  %1127 = vmatpush1.bf16.msra.mxu0 0
  %1128 = vmatprep.subr.bf16.mxu0 0
  %1129 = vmatpush1.bf16.msra.mxu0 0
  %1130 = vmatprep.subr.bf16.mxu0 0
  %1131 = vmatpush1.bf16.msra.mxu0 0
  %1132 = vmatprep.subr.bf16.mxu0 0
  %1133 = vmatpush1.bf16.msra.mxu0 0
  %1134 = vmatprep.subr.bf16.mxu0 0
  %1135 = vmatpush1.bf16.msra.mxu0 0
  %1136 = vmatprep.subr.bf16.mxu0 0
  %1137 = vmatpush1.bf16.msra.mxu0 %v1118
  %1138 = vmatprep.subr.bf16.mxu0 0
  %1139 = vmatpush1.bf16.msra.mxu0 %v1117
  %1140 = vmatprep.subr.bf16.mxu0 0
  %1141 = vmatpush2.bf16.msra.mxu0 0
  %1142 = vmatprep.subr.bf16.mxu0 0
  %1143 = vmatpush2.bf16.msra.mxu0 0
  %1144 = vmatprep.subr.bf16.mxu0 0
  %1145 = vmatpush2.bf16.msra.mxu0 0
  %1146 = vmatprep.subr.bf16.mxu0 0
  %1147 = vmatpush2.bf16.msra.mxu0 0
  %1148 = vmatprep.subr.bf16.mxu0 0
  %1149 = vmatpush2.bf16.msra.mxu0 0
  %1150 = vmatprep.subr.bf16.mxu0 0
  %1151 = vmatpush2.bf16.msra.mxu0 0
  %1152 = vmatprep.subr.bf16.mxu0 0
  %1153 = vmatpush2.bf16.msra.mxu0 0
  %1154 = vmatprep.subr.bf16.mxu0 0
  %1155 = vmatpush2.bf16.msra.mxu0 0
  %1156 = vmatprep.mubr.bf16.mxu0 0
  %1157 = vmatmul.mubr.bf16.gmra.mxu0 %v1122
  %v1158 = vpop.f32.mrf.mxu0
  %v1159 = vadd.f32 %v1107, %v1158
  %v1160 = vpop.f32.mrf.mxu0
  %v1161 = vpop.f32.mrf.mxu0
  %v1162 = vpop.f32.mrf.mxu0
  %1163 = vdwg.mxu0
  %v1164 = vmax.f32 %v1159, 0.0
  %v1165 = vadd.f32 %v1164, %v1096
  %v1166 = vld [vmem:[%s17] sm:$0x1]
  %v1167 = vld [vmem:[%s18] sm:$0x1]
  %v1168 = vsel %vm204, %v1165, 0.0
  %1169 = vadd.xlane.f32.xlu0 %v1168
  %v1170 = vpop.xlane.xlu0 %1169
  %v1171 = vmul.f32 %v1170, %v1072
  %v1172 = vsub.f32 %v1165, %v1171
  %v1173 = vmul.f32 %v1172, %v1172
  %v1174 = vsel %vm204, %v1173, 0.0
  %1175 = vadd.xlane.f32.xlu0 %v1174
  %v1176 = vpop.xlane.xlu0 %1175
  %v1177 = vmul.f32 %v1176, %v1072
  %v1178 = vadd.f32 %v1177, 1e-05
  %v1179 = vrsqrt.pop %v1178
  %v1180 = vmul.f32 %v1172, %v1179
  %v1182 = vlaneseq
  %v1183 = vshrl.u32 %v1182, 7
  %v1184 = vsub.s32 0, %v1183
  %v1185 = vrot.slane %v1166, %v1184
  %v1187 = vmul.f32 %v1180, %v1185
  %v1189 = vlaneseq
  %v1190 = vshrl.u32 %v1189, 7
  %v1191 = vsub.s32 0, %v1190
  %v1192 = vrot.slane %v1167, %v1191
  %v1194 = vadd.f32 %v1187, %v1192
  %s1195 = scalar_lea.vmem %s1, 64
  %v1196 = vld [vmem:[%s1195] sm:$0xff]
  %v1197 = vld [vmem:[%s1195 + $0x8] sm:$0xff]
  %v1198 = vld [vmem:[%s1195 + $0x10] sm:$0xff]
  %v1199 = vld [vmem:[%s1195 + $0x18] sm:$0xff]
  %v1200 = vld [vmem:[%s1195 + $0x20] sm:$0xff]
  %v1201 = vld [vmem:[%s1195 + $0x28] sm:$0xff]
  %v1202 = vld [vmem:[%s1195 + $0x30] sm:$0xff]
  %v1203 = vld [vmem:[%s1195 + $0x38] sm:$0xff]
  %v1204 = vadd.f32 %v1196, %v83
  %v1205 = vadd.f32 %v1197, %v84
  %v1206 = vadd.f32 %v1198, %v85
  %v1207 = vadd.f32 %v1199, %v86
  %v1208 = vadd.f32 %v1200, %v87
  %v1209 = vadd.f32 %v1201, %v88
  %v1210 = vadd.f32 %v1202, %v89
  %v1211 = vadd.f32 %v1203, %v90
  %s1212 = scalar_lea.vmem %s9, 16
  %v1213 = vld [vmem:[%s1212] sm:$0xf]
  %v1214 = vld [vmem:[%s1212 + $0x4] sm:$0xf]
  %v1215 = vld [vmem:[%s1212 + $0x8] sm:$0xf]
  %v1216 = vld [vmem:[%s1212 + $0xc] sm:$0xf]
  %v1217 = vpack.c.bf16 %v1194, %v1194
  %v1222 = vunpack.c.l.b16 %v1213
  %v1223 = vunpack.c.l.b16 %v1214
  %v1224 = vunpack.c.l.b16 %v1215
  %v1225 = vunpack.c.l.b16 %v1216
  %v1226 = vpack.c.b16 %v1223, %v1222
  %v1227 = vpack.c.b16 %v1225, %v1224
  %v1231 = vsel %vm204, %v1217, 0
  %1233 = vmatprep.subr.bf16.mxu0 0
  %1234 = vmatpush1.bf16.msra.mxu0 0
  %1235 = vmatprep.subr.bf16.mxu0 0
  %1236 = vmatpush1.bf16.msra.mxu0 0
  %1237 = vmatprep.subr.bf16.mxu0 0
  %1238 = vmatpush1.bf16.msra.mxu0 0
  %1239 = vmatprep.subr.bf16.mxu0 0
  %1240 = vmatpush1.bf16.msra.mxu0 0
  %1241 = vmatprep.subr.bf16.mxu0 0
  %1242 = vmatpush1.bf16.msra.mxu0 0
  %1243 = vmatprep.subr.bf16.mxu0 0
  %1244 = vmatpush1.bf16.msra.mxu0 0
  %1245 = vmatprep.subr.bf16.mxu0 0
  %1246 = vmatpush1.bf16.msra.mxu0 %v1227
  %1247 = vmatprep.subr.bf16.mxu0 0
  %1248 = vmatpush1.bf16.msra.mxu0 %v1226
  %1249 = vmatprep.subr.bf16.mxu0 0
  %1250 = vmatpush2.bf16.msra.mxu0 0
  %1251 = vmatprep.subr.bf16.mxu0 0
  %1252 = vmatpush2.bf16.msra.mxu0 0
  %1253 = vmatprep.subr.bf16.mxu0 0
  %1254 = vmatpush2.bf16.msra.mxu0 0
  %1255 = vmatprep.subr.bf16.mxu0 0
  %1256 = vmatpush2.bf16.msra.mxu0 0
  %1257 = vmatprep.subr.bf16.mxu0 0
  %1258 = vmatpush2.bf16.msra.mxu0 0
  %1259 = vmatprep.subr.bf16.mxu0 0
  %1260 = vmatpush2.bf16.msra.mxu0 0
  %1261 = vmatprep.subr.bf16.mxu0 0
  %1262 = vmatpush2.bf16.msra.mxu0 0
  %1263 = vmatprep.subr.bf16.mxu0 0
  %1264 = vmatpush2.bf16.msra.mxu0 0
  %1265 = vmatprep.mubr.bf16.mxu0 0
  %1266 = vmatmul.mubr.bf16.gmra.mxu0 %v1231
  %v1267 = vpop.f32.mrf.mxu0
  %v1268 = vadd.f32 0.0, %v1267
  %v1269 = vpop.f32.mrf.mxu0
  %v1270 = vpop.f32.mrf.mxu0
  %v1271 = vpop.f32.mrf.mxu0
  %1272 = vdwg.mxu0
  %s1273 = scalar_lea.vmem %s10, 16
  %v1274 = vld [vmem:[%s1273] sm:$0xf]
  %v1275 = vld [vmem:[%s1273 + $0x4] sm:$0xf]
  %v1276 = vld [vmem:[%s1273 + $0x8] sm:$0xf]
  %v1277 = vld [vmem:[%s1273 + $0xc] sm:$0xf]
  %v1278 = vpack.c.bf16 %v1205, %v1204
  %v1279 = vpack.c.bf16 %v1207, %v1206
  %v1280 = vpack.c.bf16 %v1209, %v1208
  %v1281 = vpack.c.bf16 %v1211, %v1210
  %v1286 = vunpack.c.l.b16 %v1274
  %v1287 = vunpack.c.l.b16 %v1275
  %v1288 = vunpack.c.l.b16 %v1276
  %v1289 = vunpack.c.l.b16 %v1277
  %v1290 = vpack.c.b16 %v1287, %v1286
  %v1291 = vpack.c.b16 %v1289, %v1288
  %v1295 = vsel %vm204, %v1278, 0
  %v1298 = vsel %vm204, %v1279, 0
  %v1301 = vsel %vm204, %v1280, 0
  %v1304 = vsel %vm204, %v1281, 0
  %1306 = vmatprep.subr.bf16.mxu0 0
  %1307 = vmatpush1.bf16.msra.mxu0 0
  %1308 = vmatprep.subr.bf16.mxu0 0
  %1309 = vmatpush1.bf16.msra.mxu0 0
  %1310 = vmatprep.subr.bf16.mxu0 0
  %1311 = vmatpush1.bf16.msra.mxu0 0
  %1312 = vmatprep.subr.bf16.mxu0 0
  %1313 = vmatpush1.bf16.msra.mxu0 0
  %1314 = vmatprep.subr.bf16.mxu0 0
  %1315 = vmatpush1.bf16.msra.mxu0 0
  %1316 = vmatprep.subr.bf16.mxu0 0
  %1317 = vmatpush1.bf16.msra.mxu0 0
  %1318 = vmatprep.subr.bf16.mxu0 0
  %1319 = vmatpush1.bf16.msra.mxu0 %v1291
  %1320 = vmatprep.subr.bf16.mxu0 0
  %1321 = vmatpush1.bf16.msra.mxu0 %v1290
  %1322 = vmatprep.subr.bf16.mxu0 0
  %1323 = vmatpush2.bf16.msra.mxu0 0
  %1324 = vmatprep.subr.bf16.mxu0 0
  %1325 = vmatpush2.bf16.msra.mxu0 0
  %1326 = vmatprep.subr.bf16.mxu0 0
  %1327 = vmatpush2.bf16.msra.mxu0 0
  %1328 = vmatprep.subr.bf16.mxu0 0
  %1329 = vmatpush2.bf16.msra.mxu0 0
  %1330 = vmatprep.subr.bf16.mxu0 0
  %1331 = vmatpush2.bf16.msra.mxu0 0
  %1332 = vmatprep.subr.bf16.mxu0 0
  %1333 = vmatpush2.bf16.msra.mxu0 0
  %1334 = vmatprep.subr.bf16.mxu0 0
  %1335 = vmatpush2.bf16.msra.mxu0 0
  %1336 = vmatprep.subr.bf16.mxu0 0
  %1337 = vmatpush2.bf16.msra.mxu0 0
  %1338 = vmatprep.mubr.bf16.mxu0 0
  %1339 = vmatmul.mubr.bf16.gmra.mxu0 %v1295
  %v1340 = vpop.f32.mrf.mxu0
  %v1341 = vadd.f32 0.0, %v1340
  %v1342 = vpop.f32.mrf.mxu0
  %v1343 = vpop.f32.mrf.mxu0
  %v1344 = vadd.f32 0.0, %v1343
  %v1345 = vpop.f32.mrf.mxu0
  %1346 = vmatprep.mubr.bf16.mxu0 0
  %1347 = vmatmul.mubr.bf16.gmra.mxu0 %v1298
  %v1348 = vpop.f32.mrf.mxu0
  %v1349 = vadd.f32 0.0, %v1348
  %v1350 = vpop.f32.mrf.mxu0
  %v1351 = vpop.f32.mrf.mxu0
  %v1352 = vadd.f32 0.0, %v1351
  %v1353 = vpop.f32.mrf.mxu0
  %1354 = vmatprep.mubr.bf16.mxu0 0
  %1355 = vmatmul.mubr.bf16.gmra.mxu0 %v1301
  %v1356 = vpop.f32.mrf.mxu0
  %v1357 = vadd.f32 0.0, %v1356
  %v1358 = vpop.f32.mrf.mxu0
  %v1359 = vpop.f32.mrf.mxu0
  %v1360 = vadd.f32 0.0, %v1359
  %v1361 = vpop.f32.mrf.mxu0
  %1362 = vmatprep.mubr.bf16.mxu0 0
  %1363 = vmatmul.mubr.bf16.gmra.mxu0 %v1304
  %v1364 = vpop.f32.mrf.mxu0
  %v1365 = vadd.f32 0.0, %v1364
  %v1366 = vpop.f32.mrf.mxu0
  %v1367 = vpop.f32.mrf.mxu0
  %v1368 = vadd.f32 0.0, %v1367
  %v1369 = vpop.f32.mrf.mxu0
  %1370 = vdwg.mxu0
  %v1372 = vcombine.high %v1268, %v1268
  %v1374 = vunpack.c.l.s4 1966171168
  %v1375 = vunpack.c.0.s8 %v1374
  %v1376 = vlaneseq
  %v1377 = vshrl.u32 %v1376, 7
  %v1378 = vsub.s32 %v1375, %v1377
  %v1379 = vrot.slane %v1268, %v1378
  %v1381 = vunpack.c.l.s4 1966171168
  %v1382 = vunpack.c.0.s8 %v1381
  %v1383 = vlaneseq
  %v1384 = vshrl.u32 %v1383, 7
  %v1385 = vsub.s32 %v1382, %v1384
  %v1386 = vrot.slane %v1372, %v1385
  %v1387 = vcombine.high %v1379, %v1379
  %v1388 = vcombine.high %v1386, %v1386
  %v1390 = vunpack.c.l.s4 1966171168
  %v1391 = vunpack.c.0.s8 %v1390
  %v1392 = vlaneseq
  %v1393 = vshrl.u32 %v1392, 7
  %v1394 = vsub.s32 %v1391, %v1393
  %v1395 = vrot.slane %v1379, %v1394
  %v1397 = vunpack.c.l.s4 1966171168
  %v1398 = vunpack.c.0.s8 %v1397
  %v1399 = vlaneseq
  %v1400 = vshrl.u32 %v1399, 7
  %v1401 = vsub.s32 %v1398, %v1400
  %v1402 = vrot.slane %v1386, %v1401
  %v1404 = vunpack.c.l.s4 1966171168
  %v1405 = vunpack.c.0.s8 %v1404
  %v1406 = vlaneseq
  %v1407 = vshrl.u32 %v1406, 7
  %v1408 = vsub.s32 %v1405, %v1407
  %v1409 = vrot.slane %v1387, %v1408
  %v1411 = vunpack.c.l.s4 1966171168
  %v1412 = vunpack.c.0.s8 %v1411
  %v1413 = vlaneseq
  %v1414 = vshrl.u32 %v1413, 7
  %v1415 = vsub.s32 %v1412, %v1414
  %v1416 = vrot.slane %v1388, %v1415
  %v1417 = vcombine.high %v1395, %v1395
  %v1418 = vcombine.high %v1402, %v1402
  %v1419 = vcombine.high %v1409, %v1409
  %v1420 = vcombine.high %v1416, %v1416
  %v1421 = vlaneseq
  %v1422 = vshrl.u32 %v1421, 7
  %v1423 = vsub.s32 0, %v1422
  %v1424 = vrot.slane %v1395, %v1423
  %v1425 = vlaneseq
  %v1426 = vshrl.u32 %v1425, 7
  %v1427 = vsub.s32 0, %v1426
  %v1428 = vrot.slane %v1409, %v1427
  %v1429 = vlaneseq
  %v1430 = vshrl.u32 %v1429, 7
  %v1431 = vsub.s32 0, %v1430
  %v1432 = vrot.slane %v1417, %v1431
  %v1433 = vlaneseq
  %v1434 = vshrl.u32 %v1433, 7
  %v1435 = vsub.s32 0, %v1434
  %v1436 = vrot.slane %v1419, %v1435
  %v1437 = vlaneseq
  %v1438 = vshrl.u32 %v1437, 7
  %v1439 = vsub.s32 0, %v1438
  %v1440 = vrot.slane %v1402, %v1439
  %v1441 = vlaneseq
  %v1442 = vshrl.u32 %v1441, 7
  %v1443 = vsub.s32 0, %v1442
  %v1444 = vrot.slane %v1416, %v1443
  %v1445 = vlaneseq
  %v1446 = vshrl.u32 %v1445, 7
  %v1447 = vsub.s32 0, %v1446
  %v1448 = vrot.slane %v1418, %v1447
  %v1449 = vlaneseq
  %v1450 = vshrl.u32 %v1449, 7
  %v1451 = vsub.s32 0, %v1450
  %v1452 = vrot.slane %v1420, %v1451
  %v1461 = vmul.f32 %v1341, %v1424
  %v1462 = vmul.f32 %v1344, %v1428
  %v1463 = vmul.f32 %v1349, %v1432
  %v1464 = vmul.f32 %v1352, %v1436
  %v1465 = vmul.f32 %v1357, %v1440
  %v1466 = vmul.f32 %v1360, %v1444
  %v1467 = vmul.f32 %v1365, %v1448
  %v1468 = vmul.f32 %v1368, %v1452
  %v1470 = vsel %vm204, %v1461, 0
  %v1473 = vsel %vm204, %v1462, 0
  %v1476 = vsel %vm204, %v1463, 0
  %v1479 = vsel %vm204, %v1464, 0
  %v1482 = vsel %vm204, %v1465, 0
  %v1485 = vsel %vm204, %v1466, 0
  %v1488 = vsel %vm204, %v1467, 0
  %v1491 = vsel %vm204, %v1468, 0
  %1493 = vmatprep.subr.mxu0 0.0
  %1494 = vmatpush1.msra.mxu0 0.0
  %1495 = vmatprep.subr.mxu0 0.0
  %1496 = vmatpush1.msra.mxu0 0.0
  %1497 = vmatprep.subr.mxu0 0.0
  %1498 = vmatpush1.msra.mxu0 0.0
  %1499 = vmatprep.subr.mxu0 0.0
  %1500 = vmatpush1.msra.mxu0 0.0
  %1501 = vmatprep.subr.mxu0 0.0
  %1502 = vmatpush1.msra.mxu0 0.0
  %1503 = vmatprep.subr.mxu0 0.0
  %1504 = vmatpush1.msra.mxu0 0.0
  %1505 = vmatprep.subr.mxu0 0.0
  %1506 = vmatpush1.msra.mxu0 0.0
  %1507 = vmatprep.subr.mxu0 0.0
  %1508 = vmatpush1.msra.mxu0 0.0
  %1509 = vmatprep.subr.mxu0 0.0
  %1510 = vmatpush1.msra.mxu0 0.0
  %1511 = vmatprep.subr.mxu0 0.0
  %1512 = vmatpush1.msra.mxu0 0.0
  %1513 = vmatprep.subr.mxu0 0.0
  %1514 = vmatpush1.msra.mxu0 0.0
  %1515 = vmatprep.subr.mxu0 0.0
  %1516 = vmatpush1.msra.mxu0 0.0
  %1517 = vmatprep.subr.mxu0 0.0
  %1518 = vmatpush1.msra.mxu0 %v94
  %1519 = vmatprep.subr.mxu0 0.0
  %1520 = vmatpush1.msra.mxu0 %v93
  %1521 = vmatprep.subr.mxu0 0.0
  %1522 = vmatpush1.msra.mxu0 %v92
  %1523 = vmatprep.subr.mxu0 0.0
  %1524 = vmatpush1.msra.mxu0 %v91
  %1525 = vmatprep.subr.mxu0 0.0
  %1526 = vmatpush2.msra.mxu0 0.0
  %1527 = vmatprep.subr.mxu0 0.0
  %1528 = vmatpush2.msra.mxu0 0.0
  %1529 = vmatprep.subr.mxu0 0.0
  %1530 = vmatpush2.msra.mxu0 0.0
  %1531 = vmatprep.subr.mxu0 0.0
  %1532 = vmatpush2.msra.mxu0 0.0
  %1533 = vmatprep.subr.mxu0 0.0
  %1534 = vmatpush2.msra.mxu0 0.0
  %1535 = vmatprep.subr.mxu0 0.0
  %1536 = vmatpush2.msra.mxu0 0.0
  %1537 = vmatprep.subr.mxu0 0.0
  %1538 = vmatpush2.msra.mxu0 0.0
  %1539 = vmatprep.subr.mxu0 0.0
  %1540 = vmatpush2.msra.mxu0 0.0
  %1541 = vmatprep.subr.mxu0 0.0
  %1542 = vmatpush2.msra.mxu0 0.0
  %1543 = vmatprep.subr.mxu0 0.0
  %1544 = vmatpush2.msra.mxu0 0.0
  %1545 = vmatprep.subr.mxu0 0.0
  %1546 = vmatpush2.msra.mxu0 0.0
  %1547 = vmatprep.subr.mxu0 0.0
  %1548 = vmatpush2.msra.mxu0 0.0
  %1549 = vmatprep.subr.mxu0 0.0
  %1550 = vmatpush2.msra.mxu0 0.0
  %1551 = vmatprep.subr.mxu0 0.0
  %1552 = vmatpush2.msra.mxu0 0.0
  %1553 = vmatprep.subr.mxu0 0.0
  %1554 = vmatpush2.msra.mxu0 0.0
  %1555 = vmatprep.subr.mxu0 0.0
  %1556 = vmatpush2.msra.mxu0 0.0
  %1557 = vmatprep.mubr.f32.mxu0 0.0
  %1558 = vmatmul.mubr.f32.gmra.mxu0 %v1470
  %v1559 = vpop.f32.mrf.mxu0
  %v1560 = vadd.f32 0.0, %v1559
  %v1561 = vpop.f32.mrf.mxu0
  %1562 = vmatprep.mubr.f32.mxu0 0.0
  %1563 = vmatmul.mubr.f32.gmra.mxu0 %v1473
  %v1564 = vpop.f32.mrf.mxu0
  %v1565 = vadd.f32 0.0, %v1564
  %v1566 = vpop.f32.mrf.mxu0
  %1567 = vmatprep.mubr.f32.mxu0 0.0
  %1568 = vmatmul.mubr.f32.gmra.mxu0 %v1476
  %v1569 = vpop.f32.mrf.mxu0
  %v1570 = vadd.f32 0.0, %v1569
  %v1571 = vpop.f32.mrf.mxu0
  %1572 = vmatprep.mubr.f32.mxu0 0.0
  %1573 = vmatmul.mubr.f32.gmra.mxu0 %v1479
  %v1574 = vpop.f32.mrf.mxu0
  %v1575 = vadd.f32 0.0, %v1574
  %v1576 = vpop.f32.mrf.mxu0
  %1577 = vmatprep.mubr.f32.mxu0 0.0
  %1578 = vmatmul.mubr.f32.gmra.mxu0 %v1482
  %v1579 = vpop.f32.mrf.mxu0
  %v1580 = vadd.f32 0.0, %v1579
  %v1581 = vpop.f32.mrf.mxu0
  %1582 = vmatprep.mubr.f32.mxu0 0.0
  %1583 = vmatmul.mubr.f32.gmra.mxu0 %v1485
  %v1584 = vpop.f32.mrf.mxu0
  %v1585 = vadd.f32 0.0, %v1584
  %v1586 = vpop.f32.mrf.mxu0
  %1587 = vmatprep.mubr.f32.mxu0 0.0
  %1588 = vmatmul.mubr.f32.gmra.mxu0 %v1488
  %v1589 = vpop.f32.mrf.mxu0
  %v1590 = vadd.f32 0.0, %v1589
  %v1591 = vpop.f32.mrf.mxu0
  %1592 = vmatprep.mubr.f32.mxu0 0.0
  %1593 = vmatmul.mubr.f32.gmra.mxu0 %v1491
  %v1594 = vpop.f32.mrf.mxu0
  %v1595 = vadd.f32 0.0, %v1594
  %v1596 = vpop.f32.mrf.mxu0
  %1597 = vdwg.mxu0
  %v1598 = vmul.f32 %v1560, 0.35355338
  %v1599 = vmul.f32 %v1565, 0.35355338
  %v1600 = vmul.f32 %v1570, 0.35355338
  %v1601 = vmul.f32 %v1575, 0.35355338
  %v1602 = vmul.f32 %v1580, 0.35355338
  %v1603 = vmul.f32 %v1585, 0.35355338
  %v1604 = vmul.f32 %v1590, 0.35355338
  %v1605 = vmul.f32 %v1595, 0.35355338
  %v1606 = vsel %vm697, %v1598, -1e+20
  %v1607 = vsel %vm698, %v1599, -1e+20
  %v1608 = vsel %vm699, %v1600, -1e+20
  %v1609 = vsel %vm700, %v1601, -1e+20
  %v1610 = vsel %vm701, %v1602, -1e+20
  %v1611 = vsel %vm702, %v1603, -1e+20
  %v1612 = vsel %vm703, %v1604, -1e+20
  %v1613 = vsel %vm704, %v1605, -1e+20
  %v1614 = vsel %vm204, %v1606, -inf
  %v1615 = vrot.slane %v1614, 4
  %v1616 = vmax.f32 %v1614, %v1615
  %v1617 = vrot.slane %v1616, 2
  %v1618 = vmax.f32 %v1616, %v1617
  %v1619 = vrot.slane %v1618, 1
  %v1620 = vmax.f32 %v1618, %v1619
  %v1621 = vsel %vm204, %v1607, -inf
  %v1622 = vrot.slane %v1621, 4
  %v1623 = vmax.f32 %v1621, %v1622
  %v1624 = vrot.slane %v1623, 2
  %v1625 = vmax.f32 %v1623, %v1624
  %v1626 = vrot.slane %v1625, 1
  %v1627 = vmax.f32 %v1625, %v1626
  %v1628 = vsel %vm204, %v1608, -inf
  %v1629 = vrot.slane %v1628, 4
  %v1630 = vmax.f32 %v1628, %v1629
  %v1631 = vrot.slane %v1630, 2
  %v1632 = vmax.f32 %v1630, %v1631
  %v1633 = vrot.slane %v1632, 1
  %v1634 = vmax.f32 %v1632, %v1633
  %v1635 = vsel %vm204, %v1609, -inf
  %v1636 = vrot.slane %v1635, 4
  %v1637 = vmax.f32 %v1635, %v1636
  %v1638 = vrot.slane %v1637, 2
  %v1639 = vmax.f32 %v1637, %v1638
  %v1640 = vrot.slane %v1639, 1
  %v1641 = vmax.f32 %v1639, %v1640
  %v1642 = vsel %vm204, %v1610, -inf
  %v1643 = vrot.slane %v1642, 4
  %v1644 = vmax.f32 %v1642, %v1643
  %v1645 = vrot.slane %v1644, 2
  %v1646 = vmax.f32 %v1644, %v1645
  %v1647 = vrot.slane %v1646, 1
  %v1648 = vmax.f32 %v1646, %v1647
  %v1649 = vsel %vm204, %v1611, -inf
  %v1650 = vrot.slane %v1649, 4
  %v1651 = vmax.f32 %v1649, %v1650
  %v1652 = vrot.slane %v1651, 2
  %v1653 = vmax.f32 %v1651, %v1652
  %v1654 = vrot.slane %v1653, 1
  %v1655 = vmax.f32 %v1653, %v1654
  %v1656 = vsel %vm204, %v1612, -inf
  %v1657 = vrot.slane %v1656, 4
  %v1658 = vmax.f32 %v1656, %v1657
  %v1659 = vrot.slane %v1658, 2
  %v1660 = vmax.f32 %v1658, %v1659
  %v1661 = vrot.slane %v1660, 1
  %v1662 = vmax.f32 %v1660, %v1661
  %v1663 = vsel %vm204, %v1613, -inf
  %v1664 = vrot.slane %v1663, 4
  %v1665 = vmax.f32 %v1663, %v1664
  %v1666 = vrot.slane %v1665, 2
  %v1667 = vmax.f32 %v1665, %v1666
  %v1668 = vrot.slane %v1667, 1
  %v1669 = vmax.f32 %v1667, %v1668
  %v1670 = vsub.f32 %v1606, %v1620
  %v1671 = vsub.f32 %v1607, %v1627
  %v1672 = vsub.f32 %v1608, %v1634
  %v1673 = vsub.f32 %v1609, %v1641
  %v1674 = vsub.f32 %v1610, %v1648
  %v1675 = vsub.f32 %v1611, %v1655
  %v1676 = vsub.f32 %v1612, %v1662
  %v1677 = vsub.f32 %v1613, %v1669
  %v1678 = vmul.f32 %v1670, 1.442695
  %v1679 = vpow.pop %v1678
  %v1680 = vmul.f32 %v1671, 1.442695
  %v1681 = vpow.pop %v1680
  %v1682 = vmul.f32 %v1672, 1.442695
  %v1683 = vpow.pop %v1682
  %v1684 = vmul.f32 %v1673, 1.442695
  %v1685 = vpow.pop %v1684
  %v1686 = vmul.f32 %v1674, 1.442695
  %v1687 = vpow.pop %v1686
  %v1688 = vmul.f32 %v1675, 1.442695
  %v1689 = vpow.pop %v1688
  %v1690 = vmul.f32 %v1676, 1.442695
  %v1691 = vpow.pop %v1690
  %v1692 = vmul.f32 %v1677, 1.442695
  %v1693 = vpow.pop %v1692
  %v1694 = vsel %vm204, %v1679, 0.0
  %v1695 = vrot.slane %v1694, 4
  %v1696 = vadd.f32 %v1694, %v1695
  %v1697 = vrot.slane %v1696, 2
  %v1698 = vadd.f32 %v1696, %v1697
  %v1699 = vrot.slane %v1698, 1
  %v1700 = vadd.f32 %v1698, %v1699
  %v1701 = vsel %vm204, %v1681, 0.0
  %v1702 = vrot.slane %v1701, 4
  %v1703 = vadd.f32 %v1701, %v1702
  %v1704 = vrot.slane %v1703, 2
  %v1705 = vadd.f32 %v1703, %v1704
  %v1706 = vrot.slane %v1705, 1
  %v1707 = vadd.f32 %v1705, %v1706
  %v1708 = vsel %vm204, %v1683, 0.0
  %v1709 = vrot.slane %v1708, 4
  %v1710 = vadd.f32 %v1708, %v1709
  %v1711 = vrot.slane %v1710, 2
  %v1712 = vadd.f32 %v1710, %v1711
  %v1713 = vrot.slane %v1712, 1
  %v1714 = vadd.f32 %v1712, %v1713
  %v1715 = vsel %vm204, %v1685, 0.0
  %v1716 = vrot.slane %v1715, 4
  %v1717 = vadd.f32 %v1715, %v1716
  %v1718 = vrot.slane %v1717, 2
  %v1719 = vadd.f32 %v1717, %v1718
  %v1720 = vrot.slane %v1719, 1
  %v1721 = vadd.f32 %v1719, %v1720
  %v1722 = vsel %vm204, %v1687, 0.0
  %v1723 = vrot.slane %v1722, 4
  %v1724 = vadd.f32 %v1722, %v1723
  %v1725 = vrot.slane %v1724, 2
  %v1726 = vadd.f32 %v1724, %v1725
  %v1727 = vrot.slane %v1726, 1
  %v1728 = vadd.f32 %v1726, %v1727
  %v1729 = vsel %vm204, %v1689, 0.0
  %v1730 = vrot.slane %v1729, 4
  %v1731 = vadd.f32 %v1729, %v1730
  %v1732 = vrot.slane %v1731, 2
  %v1733 = vadd.f32 %v1731, %v1732
  %v1734 = vrot.slane %v1733, 1
  %v1735 = vadd.f32 %v1733, %v1734
  %v1736 = vsel %vm204, %v1691, 0.0
  %v1737 = vrot.slane %v1736, 4
  %v1738 = vadd.f32 %v1736, %v1737
  %v1739 = vrot.slane %v1738, 2
  %v1740 = vadd.f32 %v1738, %v1739
  %v1741 = vrot.slane %v1740, 1
  %v1742 = vadd.f32 %v1740, %v1741
  %v1743 = vsel %vm204, %v1693, 0.0
  %v1744 = vrot.slane %v1743, 4
  %v1745 = vadd.f32 %v1743, %v1744
  %v1746 = vrot.slane %v1745, 2
  %v1747 = vadd.f32 %v1745, %v1746
  %v1748 = vrot.slane %v1747, 1
  %v1749 = vadd.f32 %v1747, %v1748
  %v1750 = vrcp.pop %v1700
  %v1751 = vrcp.pop %v1707
  %v1752 = vrcp.pop %v1714
  %v1753 = vrcp.pop %v1721
  %v1754 = vrcp.pop %v1728
  %v1755 = vrcp.pop %v1735
  %v1756 = vrcp.pop %v1742
  %v1757 = vrcp.pop %v1749
  %v1758 = vmul.f32 %v1679, %v1750
  %v1759 = vmul.f32 %v1681, %v1751
  %v1760 = vmul.f32 %v1683, %v1752
  %v1761 = vmul.f32 %v1685, %v1753
  %v1762 = vmul.f32 %v1687, %v1754
  %v1763 = vmul.f32 %v1689, %v1755
  %v1764 = vmul.f32 %v1691, %v1756
  %v1765 = vmul.f32 %v1693, %v1757
  %1774 = vrot.lane.b32.xlu0 %v1341, 96
  %v1775 = vpop.permute.xlu0 %1774
  %1776 = vrot.lane.b32.xlu0 %v1344, 96
  %v1777 = vpop.permute.xlu0 %1776
  %1778 = vrot.lane.b32.xlu0 %v1349, 96
  %v1779 = vpop.permute.xlu0 %1778
  %1780 = vrot.lane.b32.xlu0 %v1352, 96
  %v1781 = vpop.permute.xlu0 %1780
  %1782 = vrot.lane.b32.xlu0 %v1357, 96
  %v1783 = vpop.permute.xlu0 %1782
  %1784 = vrot.lane.b32.xlu0 %v1360, 96
  %v1785 = vpop.permute.xlu0 %1784
  %1786 = vrot.lane.b32.xlu0 %v1365, 96
  %v1787 = vpop.permute.xlu0 %1786
  %1788 = vrot.lane.b32.xlu0 %v1368, 96
  %v1789 = vpop.permute.xlu0 %1788
  %v1798 = vmul.f32 %v1758, %v1775
  %v1799 = vmul.f32 %v1759, %v1777
  %v1800 = vmul.f32 %v1760, %v1779
  %v1801 = vmul.f32 %v1761, %v1781
  %v1802 = vmul.f32 %v1762, %v1783
  %v1803 = vmul.f32 %v1763, %v1785
  %v1804 = vmul.f32 %v1764, %v1787
  %v1805 = vmul.f32 %v1765, %v1789
  %v1806 = vsel %vm204, %v1798, 0.0
  %v1807 = vrot.slane %v1806, 4
  %v1808 = vadd.f32 %v1806, %v1807
  %v1809 = vrot.slane %v1808, 2
  %v1810 = vadd.f32 %v1808, %v1809
  %v1811 = vrot.slane %v1810, 1
  %v1812 = vadd.f32 %v1810, %v1811
  %v1813 = vsel %vm204, %v1799, 0.0
  %v1814 = vrot.slane %v1813, 4
  %v1815 = vadd.f32 %v1813, %v1814
  %v1816 = vrot.slane %v1815, 2
  %v1817 = vadd.f32 %v1815, %v1816
  %v1818 = vrot.slane %v1817, 1
  %v1819 = vadd.f32 %v1817, %v1818
  %v1820 = vsel %vm204, %v1800, 0.0
  %v1821 = vrot.slane %v1820, 4
  %v1822 = vadd.f32 %v1820, %v1821
  %v1823 = vrot.slane %v1822, 2
  %v1824 = vadd.f32 %v1822, %v1823
  %v1825 = vrot.slane %v1824, 1
  %v1826 = vadd.f32 %v1824, %v1825
  %v1827 = vsel %vm204, %v1801, 0.0
  %v1828 = vrot.slane %v1827, 4
  %v1829 = vadd.f32 %v1827, %v1828
  %v1830 = vrot.slane %v1829, 2
  %v1831 = vadd.f32 %v1829, %v1830
  %v1832 = vrot.slane %v1831, 1
  %v1833 = vadd.f32 %v1831, %v1832
  %v1834 = vsel %vm204, %v1802, 0.0
  %v1835 = vrot.slane %v1834, 4
  %v1836 = vadd.f32 %v1834, %v1835
  %v1837 = vrot.slane %v1836, 2
  %v1838 = vadd.f32 %v1836, %v1837
  %v1839 = vrot.slane %v1838, 1
  %v1840 = vadd.f32 %v1838, %v1839
  %v1841 = vsel %vm204, %v1803, 0.0
  %v1842 = vrot.slane %v1841, 4
  %v1843 = vadd.f32 %v1841, %v1842
  %v1844 = vrot.slane %v1843, 2
  %v1845 = vadd.f32 %v1843, %v1844
  %v1846 = vrot.slane %v1845, 1
  %v1847 = vadd.f32 %v1845, %v1846
  %v1848 = vsel %vm204, %v1804, 0.0
  %v1849 = vrot.slane %v1848, 4
  %v1850 = vadd.f32 %v1848, %v1849
  %v1851 = vrot.slane %v1850, 2
  %v1852 = vadd.f32 %v1850, %v1851
  %v1853 = vrot.slane %v1852, 1
  %v1854 = vadd.f32 %v1852, %v1853
  %v1855 = vsel %vm204, %v1805, 0.0
  %v1856 = vrot.slane %v1855, 4
  %v1857 = vadd.f32 %v1855, %v1856
  %v1858 = vrot.slane %v1857, 2
  %v1859 = vadd.f32 %v1857, %v1858
  %v1860 = vrot.slane %v1859, 1
  %v1861 = vadd.f32 %v1859, %v1860
  %s1862 = scalar_lea.vmem %s11, 16
  %v1863 = vld [vmem:[%s1862] sm:$0xf]
  %v1864 = vld [vmem:[%s1862 + $0x4] sm:$0xf]
  %v1865 = vld [vmem:[%s1862 + $0x8] sm:$0xf]
  %v1866 = vld [vmem:[%s1862 + $0xc] sm:$0xf]
  %v1867 = vpack.c.bf16 %v1812, %v1812
  %v1868 = vpack.c.bf16 %v1819, %v1819
  %v1869 = vpack.c.bf16 %v1826, %v1826
  %v1870 = vpack.c.bf16 %v1833, %v1833
  %v1871 = vpack.c.bf16 %v1840, %v1840
  %v1872 = vpack.c.bf16 %v1847, %v1847
  %v1873 = vpack.c.bf16 %v1854, %v1854
  %v1874 = vpack.c.bf16 %v1861, %v1861
  %s1875 = scalar_lea.vmem %s12, 1
  %v1876 = vld [vmem:[%s1875] sm:$0x1]
  %v1878 = vlaneseq
  %v1879 = vshrl.u32 %v1878, 7
  %v1880 = vsub.s32 0, %v1879
  %v1881 = vrot.slane %v1876, %v1880
  %v1891 = vunpack.c.l.b16 %v1867
  %v1892 = vunpack.c.l.b16 %v1868
  %v1893 = vunpack.c.l.b16 %v1869
  %v1894 = vunpack.c.l.b16 %v1870
  %v1895 = vunpack.c.l.b16 %v1871
  %v1896 = vunpack.c.l.b16 %v1872
  %v1897 = vunpack.c.l.b16 %v1873
  %v1898 = vunpack.c.l.b16 %v1874
  %v1899 = vsel %vm996, %v1892, %v1891
  %v1900 = vsel %vm998, %v1893, %v1899
  %v1901 = vsel %vm1000, %v1894, %v1900
  %v1902 = vsel %vm1002, %v1895, %v1901
  %v1903 = vsel %vm1004, %v1896, %v1902
  %v1904 = vsel %vm1006, %v1897, %v1903
  %v1905 = vsel %vm1008, %v1898, %v1904
  %v1906 = vpack.c.b16 %v1905, %v1905
  %v1911 = vunpack.c.l.b16 %v1863
  %v1912 = vunpack.c.l.b16 %v1864
  %v1913 = vunpack.c.l.b16 %v1865
  %v1914 = vunpack.c.l.b16 %v1866
  %v1915 = vpack.c.b16 %v1912, %v1911
  %v1916 = vpack.c.b16 %v1914, %v1913
  %v1920 = vsel %vm204, %v1906, 0
  %1922 = vmatprep.subr.bf16.mxu0 0
  %1923 = vmatpush1.bf16.msra.mxu0 0
  %1924 = vmatprep.subr.bf16.mxu0 0
  %1925 = vmatpush1.bf16.msra.mxu0 0
  %1926 = vmatprep.subr.bf16.mxu0 0
  %1927 = vmatpush1.bf16.msra.mxu0 0
  %1928 = vmatprep.subr.bf16.mxu0 0
  %1929 = vmatpush1.bf16.msra.mxu0 0
  %1930 = vmatprep.subr.bf16.mxu0 0
  %1931 = vmatpush1.bf16.msra.mxu0 0
  %1932 = vmatprep.subr.bf16.mxu0 0
  %1933 = vmatpush1.bf16.msra.mxu0 0
  %1934 = vmatprep.subr.bf16.mxu0 0
  %1935 = vmatpush1.bf16.msra.mxu0 %v1916
  %1936 = vmatprep.subr.bf16.mxu0 0
  %1937 = vmatpush1.bf16.msra.mxu0 %v1915
  %1938 = vmatprep.subr.bf16.mxu0 0
  %1939 = vmatpush2.bf16.msra.mxu0 0
  %1940 = vmatprep.subr.bf16.mxu0 0
  %1941 = vmatpush2.bf16.msra.mxu0 0
  %1942 = vmatprep.subr.bf16.mxu0 0
  %1943 = vmatpush2.bf16.msra.mxu0 0
  %1944 = vmatprep.subr.bf16.mxu0 0
  %1945 = vmatpush2.bf16.msra.mxu0 0
  %1946 = vmatprep.subr.bf16.mxu0 0
  %1947 = vmatpush2.bf16.msra.mxu0 0
  %1948 = vmatprep.subr.bf16.mxu0 0
  %1949 = vmatpush2.bf16.msra.mxu0 0
  %1950 = vmatprep.subr.bf16.mxu0 0
  %1951 = vmatpush2.bf16.msra.mxu0 0
  %1952 = vmatprep.subr.bf16.mxu0 0
  %1953 = vmatpush2.bf16.msra.mxu0 0
  %1954 = vmatprep.mubr.bf16.mxu0 0
  %1955 = vmatmul.mubr.bf16.gmra.mxu0 %v1920
  %v1956 = vpop.f32.mrf.mxu0
  %v1957 = vadd.f32 %v1881, %v1956
  %v1958 = vpop.f32.mrf.mxu0
  %v1959 = vpop.f32.mrf.mxu0
  %v1960 = vpop.f32.mrf.mxu0
  %1961 = vdwg.mxu0
  %v1962 = vadd.f32 %v1957, %v1194
  %s1963 = scalar_lea.vmem %s15, 1
  %v1964 = vld [vmem:[%s1963] sm:$0x1]
  %s1965 = scalar_lea.vmem %s16, 1
  %v1966 = vld [vmem:[%s1965] sm:$0x1]
  %v1967 = vsel %vm204, %v1962, 0.0
  %1968 = vadd.xlane.f32.xlu0 %v1967
  %v1969 = vpop.xlane.xlu0 %1968
  %v1970 = vmul.f32 %v1969, %v1072
  %v1971 = vsub.f32 %v1962, %v1970
  %v1972 = vmul.f32 %v1971, %v1971
  %v1973 = vsel %vm204, %v1972, 0.0
  %1974 = vadd.xlane.f32.xlu0 %v1973
  %v1975 = vpop.xlane.xlu0 %1974
  %v1976 = vmul.f32 %v1975, %v1072
  %v1977 = vadd.f32 %v1976, 1e-05
  %v1978 = vrsqrt.pop %v1977
  %v1979 = vmul.f32 %v1971, %v1978
  %v1981 = vlaneseq
  %v1982 = vshrl.u32 %v1981, 7
  %v1983 = vsub.s32 0, %v1982
  %v1984 = vrot.slane %v1964, %v1983
  %v1986 = vmul.f32 %v1979, %v1984
  %v1988 = vlaneseq
  %v1989 = vshrl.u32 %v1988, 7
  %v1990 = vsub.s32 0, %v1989
  %v1991 = vrot.slane %v1966, %v1990
  %v1993 = vadd.f32 %v1986, %v1991
  %s1994 = scalar_lea.vmem %s13, 16
  %v1995 = vld [vmem:[%s1994] sm:$0xf]
  %v1996 = vld [vmem:[%s1994 + $0x4] sm:$0xf]
  %v1997 = vld [vmem:[%s1994 + $0x8] sm:$0xf]
  %v1998 = vld [vmem:[%s1994 + $0xc] sm:$0xf]
  %v1999 = vpack.c.bf16 %v1993, %v1993
  %s2000 = scalar_lea.vmem %s14, 1
  %v2001 = vld [vmem:[%s2000] sm:$0x1]
  %v2003 = vlaneseq
  %v2004 = vshrl.u32 %v2003, 7
  %v2005 = vsub.s32 0, %v2004
  %v2006 = vrot.slane %v2001, %v2005
  %v2012 = vunpack.c.l.b16 %v1995
  %v2013 = vunpack.c.l.b16 %v1996
  %v2014 = vunpack.c.l.b16 %v1997
  %v2015 = vunpack.c.l.b16 %v1998
  %v2016 = vpack.c.b16 %v2013, %v2012
  %v2017 = vpack.c.b16 %v2015, %v2014
  %v2021 = vsel %vm204, %v1999, 0
  %2023 = vmatprep.subr.bf16.mxu0 0
  %2024 = vmatpush1.bf16.msra.mxu0 0
  %2025 = vmatprep.subr.bf16.mxu0 0
  %2026 = vmatpush1.bf16.msra.mxu0 0
  %2027 = vmatprep.subr.bf16.mxu0 0
  %2028 = vmatpush1.bf16.msra.mxu0 0
  %2029 = vmatprep.subr.bf16.mxu0 0
  %2030 = vmatpush1.bf16.msra.mxu0 0
  %2031 = vmatprep.subr.bf16.mxu0 0
  %2032 = vmatpush1.bf16.msra.mxu0 0
  %2033 = vmatprep.subr.bf16.mxu0 0
  %2034 = vmatpush1.bf16.msra.mxu0 0
  %2035 = vmatprep.subr.bf16.mxu0 0
  %2036 = vmatpush1.bf16.msra.mxu0 %v2017
  %2037 = vmatprep.subr.bf16.mxu0 0
  %2038 = vmatpush1.bf16.msra.mxu0 %v2016
  %2039 = vmatprep.subr.bf16.mxu0 0
  %2040 = vmatpush2.bf16.msra.mxu0 0
  %2041 = vmatprep.subr.bf16.mxu0 0
  %2042 = vmatpush2.bf16.msra.mxu0 0
  %2043 = vmatprep.subr.bf16.mxu0 0
  %2044 = vmatpush2.bf16.msra.mxu0 0
  %2045 = vmatprep.subr.bf16.mxu0 0
  %2046 = vmatpush2.bf16.msra.mxu0 0
  %2047 = vmatprep.subr.bf16.mxu0 0
  %2048 = vmatpush2.bf16.msra.mxu0 0
  %2049 = vmatprep.subr.bf16.mxu0 0
  %2050 = vmatpush2.bf16.msra.mxu0 0
  %2051 = vmatprep.subr.bf16.mxu0 0
  %2052 = vmatpush2.bf16.msra.mxu0 0
  %2053 = vmatprep.subr.bf16.mxu0 0
  %2054 = vmatpush2.bf16.msra.mxu0 0
  %2055 = vmatprep.mubr.bf16.mxu0 0
  %2056 = vmatmul.mubr.bf16.gmra.mxu0 %v2021
  %v2057 = vpop.f32.mrf.mxu0
  %v2058 = vadd.f32 %v2006, %v2057
  %v2059 = vpop.f32.mrf.mxu0
  %v2060 = vpop.f32.mrf.mxu0
  %v2061 = vpop.f32.mrf.mxu0
  %2062 = vdwg.mxu0
  %v2063 = vmax.f32 %v2058, 0.0
  %v2064 = vadd.f32 %v2063, %v1993
  %s2065 = scalar_lea.vmem %s17, 1
  %v2066 = vld [vmem:[%s2065] sm:$0x1]
  %s2067 = scalar_lea.vmem %s18, 1
  %v2068 = vld [vmem:[%s2067] sm:$0x1]
  %v2069 = vsel %vm204, %v2064, 0.0
  %2070 = vadd.xlane.f32.xlu0 %v2069
  %v2071 = vpop.xlane.xlu0 %2070
  %v2072 = vmul.f32 %v2071, %v1072
  %v2073 = vsub.f32 %v2064, %v2072
  %v2074 = vmul.f32 %v2073, %v2073
  %v2075 = vsel %vm204, %v2074, 0.0
  %2076 = vadd.xlane.f32.xlu0 %v2075
  %v2077 = vpop.xlane.xlu0 %2076
  %v2078 = vmul.f32 %v2077, %v1072
  %v2079 = vadd.f32 %v2078, 1e-05
  %v2080 = vrsqrt.pop %v2079
  %v2081 = vmul.f32 %v2073, %v2080
  %v2083 = vlaneseq
  %v2084 = vshrl.u32 %v2083, 7
  %v2085 = vsub.s32 0, %v2084
  %v2086 = vrot.slane %v2066, %v2085
  %v2088 = vmul.f32 %v2081, %v2086
  %v2090 = vlaneseq
  %v2091 = vshrl.u32 %v2090, 7
  %v2092 = vsub.s32 0, %v2091
  %v2093 = vrot.slane %v2068, %v2092
  %v2095 = vadd.f32 %v2088, %v2093
  %v2096 = vld [vmem:[%s19] sm:$0xf]
  %v2097 = vld [vmem:[%s19 + $0x4] sm:$0xf]
  %v2098 = vld [vmem:[%s19 + $0x8] sm:$0xf]
  %v2099 = vld [vmem:[%s19 + $0xc] sm:$0xf]
  %v2100 = vpack.c.bf16 %v2095, %v2095
  %v2101 = vld [vmem:[%s20] sm:$0x1]
  %v2103 = vlaneseq
  %v2104 = vshrl.u32 %v2103, 7
  %v2105 = vsub.s32 0, %v2104
  %v2106 = vrot.slane %v2101, %v2105
  %v2112 = vunpack.c.l.b16 %v2096
  %v2113 = vunpack.c.l.b16 %v2097
  %v2114 = vunpack.c.l.b16 %v2098
  %v2115 = vunpack.c.l.b16 %v2099
  %v2116 = vpack.c.b16 %v2113, %v2112
  %v2117 = vpack.c.b16 %v2115, %v2114
  %v2121 = vsel %vm204, %v2100, 0
  %2123 = vmatprep.subr.bf16.mxu0 0
  %2124 = vmatpush1.bf16.msra.mxu0 0
  %2125 = vmatprep.subr.bf16.mxu0 0
  %2126 = vmatpush1.bf16.msra.mxu0 0
  %2127 = vmatprep.subr.bf16.mxu0 0
  %2128 = vmatpush1.bf16.msra.mxu0 0
  %2129 = vmatprep.subr.bf16.mxu0 0
  %2130 = vmatpush1.bf16.msra.mxu0 0
  %2131 = vmatprep.subr.bf16.mxu0 0
  %2132 = vmatpush1.bf16.msra.mxu0 0
  %2133 = vmatprep.subr.bf16.mxu0 0
  %2134 = vmatpush1.bf16.msra.mxu0 0
  %2135 = vmatprep.subr.bf16.mxu0 0
  %2136 = vmatpush1.bf16.msra.mxu0 %v2117
  %2137 = vmatprep.subr.bf16.mxu0 0
  %2138 = vmatpush1.bf16.msra.mxu0 %v2116
  %2139 = vmatprep.subr.bf16.mxu0 0
  %2140 = vmatpush2.bf16.msra.mxu0 0
  %2141 = vmatprep.subr.bf16.mxu0 0
  %2142 = vmatpush2.bf16.msra.mxu0 0
  %2143 = vmatprep.subr.bf16.mxu0 0
  %2144 = vmatpush2.bf16.msra.mxu0 0
  %2145 = vmatprep.subr.bf16.mxu0 0
  %2146 = vmatpush2.bf16.msra.mxu0 0
  %2147 = vmatprep.subr.bf16.mxu0 0
  %2148 = vmatpush2.bf16.msra.mxu0 0
  %2149 = vmatprep.subr.bf16.mxu0 0
  %2150 = vmatpush2.bf16.msra.mxu0 0
  %2151 = vmatprep.subr.bf16.mxu0 0
  %2152 = vmatpush2.bf16.msra.mxu0 0
  %2153 = vmatprep.subr.bf16.mxu0 0
  %2154 = vmatpush2.bf16.msra.mxu0 0
  %2155 = vmatprep.mubr.bf16.mxu0 0
  %2156 = vmatmul.mubr.bf16.gmra.mxu0 %v2121
  %v2157 = vpop.f32.mrf.mxu0
  %v2158 = vadd.f32 %v2106, %v2157
  %v2159 = vpop.f32.mrf.mxu0
  %v2160 = vpop.f32.mrf.mxu0
  %v2161 = vpop.f32.mrf.mxu0
  %2162 = vdwg.mxu0
  %v2163 = vmax.f32 %v2158, 0.0
  %v2164 = vld [vmem:[%s21] sm:$0xf]
  %v2165 = vld [vmem:[%s21 + $0x4] sm:$0xf]
  %v2166 = vld [vmem:[%s21 + $0x8] sm:$0xf]
  %v2167 = vld [vmem:[%s21 + $0xc] sm:$0xf]
  %v2168 = vld [vmem:[%s21 + $0x10] sm:$0xf]
  %v2169 = vld [vmem:[%s21 + $0x14] sm:$0xf]
  %v2170 = vld [vmem:[%s21 + $0x18] sm:$0xf]
  %v2171 = vld [vmem:[%s21 + $0x1c] sm:$0xf]
  %v2172 = vpack.c.bf16 %v2163, %v2163
  %v2173 = vld [vmem:[%s22] sm:$0x1]
  %v2175 = vlaneseq
  %v2176 = vshrl.u32 %v2175, 7
  %v2177 = vsub.s32 0, %v2176
  %v2178 = vrot.slane %v2173, %v2177
  %v2188 = vunpack.c.l.b16 %v2164
  %v2189 = vunpack.c.l.b16 %v2165
  %v2190 = vunpack.c.l.b16 %v2166
  %v2191 = vunpack.c.l.b16 %v2167
  %v2192 = vunpack.c.l.b16 %v2168
  %v2193 = vunpack.c.l.b16 %v2169
  %v2194 = vunpack.c.l.b16 %v2170
  %v2195 = vunpack.c.l.b16 %v2171
  %v2196 = vpack.c.b16 %v2189, %v2188
  %v2197 = vpack.c.b16 %v2191, %v2190
  %v2198 = vpack.c.b16 %v2193, %v2192
  %v2199 = vpack.c.b16 %v2195, %v2194
  %v2205 = vsel %vm135, %v2172, 0
  %2207 = vmatprep.subr.bf16.mxu0 0
  %2208 = vmatpush1.bf16.msra.mxu0 0
  %2209 = vmatprep.subr.bf16.mxu0 0
  %2210 = vmatpush1.bf16.msra.mxu0 0
  %2211 = vmatprep.subr.bf16.mxu0 0
  %2212 = vmatpush1.bf16.msra.mxu0 0
  %2213 = vmatprep.subr.bf16.mxu0 0
  %2214 = vmatpush1.bf16.msra.mxu0 0
  %2215 = vmatprep.subr.bf16.mxu0 0
  %2216 = vmatpush1.bf16.msra.mxu0 %v2199
  %2217 = vmatprep.subr.bf16.mxu0 0
  %2218 = vmatpush1.bf16.msra.mxu0 %v2198
  %2219 = vmatprep.subr.bf16.mxu0 0
  %2220 = vmatpush1.bf16.msra.mxu0 %v2197
  %2221 = vmatprep.subr.bf16.mxu0 0
  %2222 = vmatpush1.bf16.msra.mxu0 %v2196
  %2223 = vmatprep.subr.bf16.mxu0 0
  %2224 = vmatpush2.bf16.msra.mxu0 0
  %2225 = vmatprep.subr.bf16.mxu0 0
  %2226 = vmatpush2.bf16.msra.mxu0 0
  %2227 = vmatprep.subr.bf16.mxu0 0
  %2228 = vmatpush2.bf16.msra.mxu0 0
  %2229 = vmatprep.subr.bf16.mxu0 0
  %2230 = vmatpush2.bf16.msra.mxu0 0
  %2231 = vmatprep.subr.bf16.mxu0 0
  %2232 = vmatpush2.bf16.msra.mxu0 0
  %2233 = vmatprep.subr.bf16.mxu0 0
  %2234 = vmatpush2.bf16.msra.mxu0 0
  %2235 = vmatprep.subr.bf16.mxu0 0
  %2236 = vmatpush2.bf16.msra.mxu0 0
  %2237 = vmatprep.subr.bf16.mxu0 0
  %2238 = vmatpush2.bf16.msra.mxu0 0
  %2239 = vmatprep.mubr.bf16.mxu0 0
  %2240 = vmatmul.mubr.bf16.gmra.mxu0 %v2205
  %v2241 = vpop.f32.mrf.mxu0
  %v2242 = vadd.f32 %v2178, %v2241
  %v2243 = vpop.f32.mrf.mxu0
  %v2244 = vpop.f32.mrf.mxu0
  %v2245 = vpop.f32.mrf.mxu0
  %2246 = vdwg.mxu0
  %2248 = vrot.lane.b32.xlu0 %v248, 64
  %v2249 = vpop.permute.xlu0 %2248
  %2252 = vrot.lane.b32.xlu0 %v1194, 96
  %v2253 = vpop.permute.xlu0 %2252
  %v2255 = vsel %vm135, %v2242, %v2249
  %vm2256 = vcmask 785408
  %v2257 = vsel %vm2256, %v2255, %v2253
  %2258 = vst [vmem:[%s23] sm:$0xff] %v2257
  // Predicated region
  $region94: #{run.7} parent=0 // pred_check
    _
  $region95: #{run.7} parent=0 // pred_check_branch
    %2260 = sbr.rel (0) target = $region97
  $region96: #{run.7} parent=0 // pred_region
    _
  $region97: #{run.7} parent=0 // pred_fallthru
    _
  // Predicated region
  $region98: #{run.7} parent=0 // pred_check
    _
  $region99: #{run.7} parent=0 // pred_check_branch
    %2262 = sbr.rel (0) target = $region101
  $region100: #{run.7} parent=0 // pred_region
    _
  $region101: #{run.7} parent=0 // pred_fallthru
    _

</llo_original>
